<compile_context>
chip_gen: v7x
topology: tpu7x:2x2x1
jax: 0.10.0
libtpu: 0.0.40
codegen_flags: <defaults>
</compile_context>

<pallas_src>
import math
from functools import partial

import jax
import jax.numpy as jnp
from jax.experimental import pallas as pl
from jax.experimental.pallas import tpu as pltpu


def make_divisible(v, divisor=8, min_value=None):
    if min_value is None:
        min_value = divisor
    new_v = max(min_value, int(v + divisor / 2) // divisor * divisor)
    if new_v < 0.9 * v:
        new_v += divisor
    return new_v


# ----------------------------------------------------------------------------
# fused InvertedResidual kernel  (one grid step == one batch element)
# ----------------------------------------------------------------------------
def _ir_kernel(*refs, H, W, stride, has_expand, has_se, has_res):
    """Ref order:
        x,                              (H, W, Cin) unpadded input block
        [w_exp, b_exp]                  (if has_expand)   BN scale folded in w
        w_dw, b_dw,                                       BN scale folded in w
        [w_se1, w_se2, w_sc, b_sc]      (if has_se)
        w_red, b_red,                                      BN scale folded in w
        out,                            (Ho, Wo, Cout) output
        hbuf,                           (H+2, W+2, Chid) padded hidden scratch
        [ywbuf]                         (Ho, W, Chid) staging (stride==2 only)
    """
    it = iter(refs)
    x_ref = next(it)
    if has_expand:
        w_exp_ref, b_exp_ref = next(it), next(it)
    w_dw_ref, b_dw_ref = next(it), next(it)
    if has_se:
        w_se1_ref, w_se2_ref, w_sc_ref, b_sc_ref = next(it), next(it), next(it), next(it)
    w_red_ref, b_red_ref = next(it), next(it)
    o_ref = next(it)
    hbuf_ref = next(it)
    ywbuf_ref = next(it) if stride == 2 else None

    Hp, Wp = H + 2, W + 2
    Ho = (H - 1) // stride + 1
    Wo = (W - 1) // stride + 1
    Chid = w_dw_ref.shape[-1]
    Cin = x_ref.shape[-1]
    hdt = hbuf_ref.dtype

    # ---- 0) zero only the halo border of the padded hidden scratch -----------
    hbuf_ref[0] = jnp.zeros((Wp, Chid), hdt)
    hbuf_ref[Hp - 1] = jnp.zeros((Wp, Chid), hdt)
    hbuf_ref[pl.ds(1, H), pl.ds(0, 1), :] = jnp.zeros((H, 1, Chid), hdt)
    hbuf_ref[pl.ds(1, H), pl.ds(Wp - 1, 1), :] = jnp.zeros((H, 1, Chid), hdt)

    # ---- 1) expand 1x1 conv (+ folded BN) + SiLU: one flattened MXU matmul ---
    x = x_ref[...]                                      # (H, W, Cin) f32
    if has_expand:
        xf = x.reshape(H * W, Cin).astype(jnp.bfloat16)
        h = jnp.dot(xf, w_exp_ref[...], preferred_element_type=jnp.float32)
        h = h + b_exp_ref[...]
        h = h * jax.nn.sigmoid(h)                       # SiLU
        hbuf_ref[pl.ds(1, H), pl.ds(1, W), :] = h.reshape(H, W, Chid).astype(hdt)
    else:
        # expand_ratio == 1 => hidden == Cin (asserted in the wrapper)
        hbuf_ref[pl.ds(1, H), pl.ds(1, W), :] = x.astype(hdt)

    # ---- 2) depthwise 3x3 (+ folded BN) ---------------------------------------
    w9 = w_dw_ref[...]                                  # (9, Chid), loaded once
    if stride == 1:
        acc = None
        for i in range(3):
            for j in range(3):
                tap = hbuf_ref[pl.ds(i, H), pl.ds(j, W), :].astype(jnp.float32)
                t = tap * w9[3 * i + j:3 * i + j + 1, :]
                acc = t if acc is None else acc + t
        y = acc.reshape(Ho * Wo, Chid) + b_dw_ref[...]
    else:
        # contiguous taps along W (stride-2 only on the leading H axis),
        # subsample along W once at the end via a single strided read.
        acc = None
        for i in range(3):
            for j in range(3):
                tap = hbuf_ref[pl.ds(i, Ho, stride=2), pl.ds(j, W), :].astype(jnp.float32)
                t = tap * w9[3 * i + j:3 * i + j + 1, :]
                acc = t if acc is None else acc + t
        ywbuf_ref[...] = acc                            # (Ho, W, Chid)
        y = ywbuf_ref[:, pl.ds(0, Wo, stride=2), :].reshape(Ho * Wo, Chid) + b_dw_ref[...]

    # ---- 3) SE (stride==1 only): channel gate + spatial sigmoid gate ----------
    if has_se:
        pooled = jnp.sum(y, axis=0, keepdims=True) * (1.0 / (Ho * Wo))   # (1, Chid)
        se = jnp.maximum(jnp.dot(pooled, w_se1_ref[...],
                                 preferred_element_type=jnp.float32), 0.0)
        se = jnp.dot(se, w_se2_ref[...], preferred_element_type=jnp.float32)
        se = jnp.clip(se * (1.0 / 6.0) + 0.5, 0.0, 1.0)                  # hardsigmoid
        # spatial gate as an MXU matmul against (Chid, 1) instead of a lane reduce
        s_lin = jnp.dot(y, w_sc_ref[...], preferred_element_type=jnp.float32)
        s_map = jax.nn.sigmoid(s_lin + b_sc_ref[...])                    # (M, 1)
        y = y * se + y * s_map                                           # x_c + x_s
    y = y * jax.nn.sigmoid(y)                           # SiLU after SE (ConvLayer order)

    # ---- 4) project 1x1 conv (+ folded BN) (+ residual): one flattened matmul -
    out = jnp.dot(y.astype(jnp.bfloat16), w_red_ref[...],
                  preferred_element_type=jnp.float32)
    out = out + b_red_ref[...]
    if has_res:
        out = out + x.reshape(H * W, Cin)
    Cout = o_ref.shape[-1]
    o_ref[...] = out.reshape(Ho, Wo, Cout).astype(o_ref.dtype)


def _full_spec(arr):
    nd = arr.ndim
    return pl.BlockSpec(arr.shape, lambda b: (0,) * nd)


def inverted_residual_nhwc(params, x, *, stride, expand_ratio,
                           scratch_dtype=jnp.float32):
    """x: (B, H, W, Cin) f32 NHWC.  Returns (B, Ho, Wo, Cout) f32."""
    assert stride in (1, 2)
    B, H, W, Cin = x.shape
    Chid = params["w_dw"].shape[-1]
    Cout = params["w_red"].shape[-1]
    has_expand = expand_ratio != 1
    if not has_expand:
        assert Chid == Cin, "expand_ratio==1 requires hidden_dim == in_channels"
    has_se = stride == 1
    has_res = (stride == 1) and (Cin == Cout)
    Ho = (H - 1) // stride + 1
    Wo = (W - 1) // stride + 1

    inputs = [x]
    in_specs = [pl.BlockSpec((None, H, W, Cin), lambda b: (b, 0, 0, 0))]
    names = []
    if has_expand:
        names += ["w_exp", "b_exp"]
    names += ["w_dw", "b_dw"]
    if has_se:
        names += ["w_se1", "w_se2", "w_sc", "b_sc"]
    names += ["w_red", "b_red"]
    for n in names:
        inputs.append(params[n])
        in_specs.append(_full_spec(params[n]))

    scratch_shapes = [pltpu.VMEM((H + 2, W + 2, Chid), scratch_dtype)]
    if stride == 2:
        scratch_shapes.append(pltpu.VMEM((Ho, W, Chid), jnp.float32))

    kernel = partial(_ir_kernel, H=H, W=W, stride=stride,
                     has_expand=has_expand, has_se=has_se, has_res=has_res)

    return pl.pallas_call(
        kernel,
        out_shape=jax.ShapeDtypeStruct((B, Ho, Wo, Cout), jnp.float32),
        grid=(B,),
        in_specs=in_specs,
        out_specs=pl.BlockSpec((None, Ho, Wo, Cout), lambda b: (b, 0, 0, 0)),
        scratch_shapes=scratch_shapes,
        compiler_params=pltpu.CompilerParams(dimension_semantics=("parallel",)),
    )(*inputs)


def inverted_residual(params, x_nchw, *, stride, expand_ratio):
    """PyTorch-layout wrapper: NCHW in, NCHW out."""
    x = jnp.transpose(x_nchw, (0, 2, 3, 1)).astype(jnp.float32)
    y = inverted_residual_nhwc(params, x, stride=stride, expand_ratio=expand_ratio)
    return jnp.transpose(y, (0, 3, 1, 2))


# ----------------------------------------------------------------------------
# deterministic parameters (BN folded into weights at construction time,
# MXU weights stored in bf16)
# ----------------------------------------------------------------------------
# TODO(synk): BatchNorm training-mode batch statistics / momentum updates are out
# of scope; inference running stats are folded into the conv weights + a bias.
def _fold_bn(key, c, eps=1e-5):
    k1, k2, k3, k4 = jax.random.split(key, 4)
    gamma = 1.0 + 0.1 * jax.random.normal(k1, (c,), jnp.float32)
    beta = 0.1 * jax.random.normal(k2, (c,), jnp.float32)
    mean = 0.1 * jax.random.normal(k3, (c,), jnp.float32)
    var = jnp.abs(1.0 + 0.1 * jax.random.normal(k4, (c,), jnp.float32))
    s = gamma * jax.lax.rsqrt(var + eps)
    b = beta - mean * s
    return s.reshape(1, c), b.reshape(1, c)


def make_params(key, *, in_c, out_c, stride, expand_ratio):
    hidden = make_divisible(int(round(in_c * expand_ratio)), 8)
    keys = jax.random.split(key, 10)
    p = {}
    if expand_ratio != 1:
        w = jax.random.normal(keys[0], (in_c, hidden), jnp.float32) * math.sqrt(2.0 / hidden)
        s, b = _fold_bn(keys[1], hidden)
        p["w_exp"] = (w * s).astype(jnp.bfloat16)          # BN scale folded into weight
        p["b_exp"] = b
    else:
        assert hidden == in_c, "expand_ratio==1 requires in_c divisible by 8"
    wdw = jax.random.normal(keys[2], (3, 3, hidden), jnp.float32) * math.sqrt(2.0 / 9.0)
    s, b = _fold_bn(keys[3], hidden)
    p["w_dw"] = wdw.reshape(9, hidden) * s                 # BN scale folded per channel
    p["b_dw"] = b
    if stride == 1:
        r = max(hidden // 4, 1)
        p["w_se1"] = jax.random.normal(keys[4], (hidden, r), jnp.float32) / math.sqrt(hidden)
        p["w_se2"] = jax.random.normal(keys[5], (r, hidden), jnp.float32) / math.sqrt(r)
        p["w_sc"] = jax.random.normal(keys[6], (hidden, 1), jnp.float32) / math.sqrt(hidden)
        p["b_sc"] = 0.1 * jax.random.normal(keys[7], (1, 1), jnp.float32)
    w = jax.random.normal(keys[8], (hidden, out_c), jnp.float32) * math.sqrt(2.0 / out_c)
    s, b = _fold_bn(keys[9], out_c)
    p["w_red"] = (w * s).astype(jnp.bfloat16)              # BN scale folded into weight
    p["b_red"] = b
    return p


# ----------------------------------------------------------------------------
# pure-jnp f32 reference (same folded-BN inference math, NCHW in/out)
# ----------------------------------------------------------------------------
def ref_inverted_residual(params, x_nchw, *, stride, expand_ratio):
    x = jnp.transpose(x_nchw, (0, 2, 3, 1)).astype(jnp.float32)
    B, H, W, Cin = x.shape
    has_expand = expand_ratio != 1
    has_se = stride == 1
    has_res = (stride == 1) and (Cin == params["w_red"].shape[-1])
    hi = jax.lax.Precision.HIGHEST

    h = x
    if has_expand:
        h = jnp.einsum("bhwc,cd->bhwd", x, params["w_exp"].astype(jnp.float32),
                       precision=hi)
        h = h + params["b_exp"]
        h = h * jax.nn.sigmoid(h)
    hp = jnp.pad(h, ((0, 0), (1, 1), (1, 1), (0, 0)))
    Ho = (H - 1) // stride + 1
    Wo = (W - 1) // stride + 1
    acc = 0.0
    for i in range(3):
        for j in range(3):
            tap = hp[:, i:i + stride * (Ho - 1) + 1:stride,
                     j:j + stride * (Wo - 1) + 1:stride, :]
            acc = acc + tap * params["w_dw"][3 * i + j]
    y = acc + params["b_dw"]
    if has_se:
        pooled = jnp.mean(y, axis=(1, 2))
        se = jnp.maximum(pooled @ params["w_se1"], 0.0) @ params["w_se2"]
        se = jnp.clip(se / 6.0 + 0.5, 0.0, 1.0)
        s_map = jax.nn.sigmoid(
            jnp.einsum("bhwc,co->bhwo", y, params["w_sc"], precision=hi)
            + params["b_sc"][0, 0])
        y = y * se[:, None, None, :] + y * s_map
    y = y * jax.nn.sigmoid(y)
    out = jnp.einsum("bhwc,cd->bhwd", y, params["w_red"].astype(jnp.float32),
                     precision=hi)
    out = out + params["b_red"]
    if has_res:
        out = out + x
    return jnp.transpose(out, (0, 3, 1, 2))


if __name__ == "__main__":
    key = jax.random.PRNGKey(0)
    kx, k1, k2, k3 = jax.random.split(key, 4)
    x = jax.random.normal(kx, (2, 16, 16, 16), jnp.float32)   # NCHW: (B, C, H, W)

    configs = [
        dict(in_c=16, out_c=16, stride=1, expand_ratio=2),    # expand + SE + residual
        dict(in_c=16, out_c=24, stride=2, expand_ratio=2),    # stride-2, no SE / no res
        dict(in_c=16, out_c=16, stride=1, expand_ratio=1),    # no expand, SE + residual
    ]
    for cfg, pk in zip(configs, (k1, k2, k3)):
        params = make_params(pk, **cfg)
        fwd = jax.jit(partial(inverted_residual,
                              stride=cfg["stride"], expand_ratio=cfg["expand_ratio"]))
        out = jax.block_until_ready(fwd(params, x))
        ref = ref_inverted_residual(params, x,
                                    stride=cfg["stride"], expand_ratio=cfg["expand_ratio"])
        assert out.shape == ref.shape, (out.shape, ref.shape)
        assert bool(jnp.all(jnp.isfinite(out)))
        err = float(jnp.max(jnp.abs(out - ref)))
        scale = float(jnp.max(jnp.abs(ref)))
        assert err <= 5e-2 * max(1.0, scale), (cfg, err, scale)
    print("KERNEL_OK")
</pallas_src>

<mosaic_0001>
module attributes {stable_mosaic.version = 11 : i64} {
  func.func @_ir_kernel(%arg0: i32, %arg1: memref<1x16x16x16xf32, #tpu.memory_space<vmem>>, %arg2: memref<16x32xbf16, #tpu.memory_space<vmem>>, %arg3: memref<1x32xf32, #tpu.memory_space<vmem>>, %arg4: memref<9x32xf32, #tpu.memory_space<vmem>>, %arg5: memref<1x32xf32, #tpu.memory_space<vmem>>, %arg6: memref<32x8xf32, #tpu.memory_space<vmem>>, %arg7: memref<8x32xf32, #tpu.memory_space<vmem>>, %arg8: memref<32x1xf32, #tpu.memory_space<vmem>>, %arg9: memref<1x1xf32, #tpu.memory_space<vmem>>, %arg10: memref<32x16xbf16, #tpu.memory_space<vmem>>, %arg11: memref<1x16xf32, #tpu.memory_space<vmem>>, %arg12: memref<1x16x16x16xf32, #tpu.memory_space<vmem>>, %arg13: memref<18x18x32xf32, #tpu.memory_space<vmem>>) attributes {dimension_semantics = [#tpu.dimension_semantics<parallel>], iteration_bounds = array<i64: 2>, scalar_prefetch = 0 : i64, scratch_operands = 1 : i64, tpu.core_type = #tpu.core_type<tc>, window_params = [{transform_indices = @transform_0, window_bounds = array<i64: 1, 16, 16, 16>}, {pipeline_mode = #tpu.pipeline_mode<synchronous>, transform_indices = @transform_1, window_bounds = array<i64: 16, 32>}, {pipeline_mode = #tpu.pipeline_mode<synchronous>, transform_indices = @transform_2, window_bounds = array<i64: 1, 32>}, {pipeline_mode = #tpu.pipeline_mode<synchronous>, transform_indices = @transform_3, window_bounds = array<i64: 9, 32>}, {pipeline_mode = #tpu.pipeline_mode<synchronous>, transform_indices = @transform_4, window_bounds = array<i64: 1, 32>}, {pipeline_mode = #tpu.pipeline_mode<synchronous>, transform_indices = @transform_5, window_bounds = array<i64: 32, 8>}, {pipeline_mode = #tpu.pipeline_mode<synchronous>, transform_indices = @transform_6, window_bounds = array<i64: 8, 32>}, {pipeline_mode = #tpu.pipeline_mode<synchronous>, transform_indices = @transform_7, window_bounds = array<i64: 32, 1>}, {pipeline_mode = #tpu.pipeline_mode<synchronous>, transform_indices = @transform_8, window_bounds = array<i64: 1, 1>}, {pipeline_mode = #tpu.pipeline_mode<synchronous>, transform_indices = @transform_9, window_bounds = array<i64: 32, 16>}, {pipeline_mode = #tpu.pipeline_mode<synchronous>, transform_indices = @transform_10, window_bounds = array<i64: 1, 16>}, {transform_indices = @transform_11, window_bounds = array<i64: 1, 16, 16, 16>}]} {
    %cst = arith.constant 0.000000e+00 : f32
    %0 = vector.broadcast %cst : f32 to vector<18x32xf32>
    %c0 = arith.constant 0 : index
    %c0_0 = arith.constant 0 : index
    %c0_1 = arith.constant 0 : index
    %1 = vector.load %arg13[%c0, %c0_0, %c0_1] : memref<18x18x32xf32, #tpu.memory_space<vmem>>, vector<1x18x32xf32>
    %2 = vector.shape_cast %1 : vector<1x18x32xf32> to vector<18x32xf32>
    %3 = vector.shape_cast %0 : vector<18x32xf32> to vector<1x18x32xf32>
    tpu.vector_store %arg13[%c0, %c0_0, %c0_1], %3 {strides = array<i32>} : memref<18x18x32xf32, #tpu.memory_space<vmem>>, vector<1x18x32xf32>,
    %cst_2 = arith.constant 0.000000e+00 : f32
    %4 = vector.broadcast %cst_2 : f32 to vector<18x32xf32>
    %c17 = arith.constant 17 : index
    %c0_3 = arith.constant 0 : index
    %c0_4 = arith.constant 0 : index
    %5 = vector.load %arg13[%c17, %c0_3, %c0_4] : memref<18x18x32xf32, #tpu.memory_space<vmem>>, vector<1x18x32xf32>
    %6 = vector.shape_cast %5 : vector<1x18x32xf32> to vector<18x32xf32>
    %7 = vector.shape_cast %4 : vector<18x32xf32> to vector<1x18x32xf32>
    tpu.vector_store %arg13[%c17, %c0_3, %c0_4], %7 {strides = array<i32>} : memref<18x18x32xf32, #tpu.memory_space<vmem>>, vector<1x18x32xf32>,
    %cst_5 = arith.constant 0.000000e+00 : f32
    %8 = vector.broadcast %cst_5 : f32 to vector<16x1x32xf32>
    %c1 = arith.constant 1 : index
    %c0_6 = arith.constant 0 : index
    %c0_7 = arith.constant 0 : index
    %9 = vector.load %arg13[%c1, %c0_6, %c0_7] : memref<18x18x32xf32, #tpu.memory_space<vmem>>, vector<16x1x32xf32>
    tpu.vector_store %arg13[%c1, %c0_6, %c0_7], %8 {strides = array<i32>} : memref<18x18x32xf32, #tpu.memory_space<vmem>>, vector<16x1x32xf32>,
    %cst_8 = arith.constant 0.000000e+00 : f32
    %10 = vector.broadcast %cst_8 : f32 to vector<16x1x32xf32>
    %c1_9 = arith.constant 1 : index
    %c17_10 = arith.constant 17 : index
    %c0_11 = arith.constant 0 : index
    %11 = vector.load %arg13[%c1_9, %c17_10, %c0_11] : memref<18x18x32xf32, #tpu.memory_space<vmem>>, vector<16x1x32xf32>
    tpu.vector_store %arg13[%c1_9, %c17_10, %c0_11], %10 {strides = array<i32>} : memref<18x18x32xf32, #tpu.memory_space<vmem>>, vector<16x1x32xf32>,
    %c0_12 = arith.constant 0 : index
    %c0_13 = arith.constant 0 : index
    %c0_14 = arith.constant 0 : index
    %c0_15 = arith.constant 0 : index
    %12 = vector.load %arg1[%c0_12, %c0_13, %c0_14, %c0_15] : memref<1x16x16x16xf32, #tpu.memory_space<vmem>>, vector<1x16x16x16xf32>
    %13 = vector.shape_cast %12 : vector<1x16x16x16xf32> to vector<16x16x16xf32>
    %14 = vector.shape_cast %13 : vector<16x16x16xf32> to vector<256x16xf32>
    %15 = arith.truncf %14 : vector<256x16xf32> to vector<256x16xbf16>
    %c0_16 = arith.constant 0 : index
    %c0_17 = arith.constant 0 : index
    %16 = vector.load %arg2[%c0_16, %c0_17] : memref<16x32xbf16, #tpu.memory_space<vmem>>, vector<16x32xbf16>
    %cst_18 = arith.constant dense<0.000000e+00> : vector<256x32xf32>
    %17 = tpu.matmul %15, %16, %cst_18 {dimension_numbers = #tpu.dot_dimension_numbers<[1], [0], [0], [1], [0, 0, 1, 1], [], []>} : vector<256x16xbf16>, vector<16x32xbf16>, vector<256x32xf32> -> vector<256x32xf32>
    %c0_19 = arith.constant 0 : index
    %c0_20 = arith.constant 0 : index
    %18 = vector.load %arg3[%c0_19, %c0_20] : memref<1x32xf32, #tpu.memory_space<vmem>>, vector<1x32xf32>
    %19 = vector.broadcast %18 : vector<1x32xf32> to vector<256x32xf32>
    %20 = arith.addf %17, %19 : vector<256x32xf32>
    %21 = arith.negf %20 : vector<256x32xf32>
    %22 = math.exp %21 : vector<256x32xf32>
    %cst_21 = arith.constant 1.000000e+00 : f32
    %23 = vector.broadcast %cst_21 : f32 to vector<256x32xf32>
    %24 = arith.addf %23, %22 : vector<256x32xf32>
    %25 = arith.divf %23, %24 : vector<256x32xf32>
    %26 = arith.mulf %20, %25 : vector<256x32xf32>
    %27 = vector.shape_cast %26 : vector<256x32xf32> to vector<16x16x32xf32>
    %c1_22 = arith.constant 1 : index
    %c1_23 = arith.constant 1 : index
    %c0_24 = arith.constant 0 : index
    %28 = vector.load %arg13[%c1_22, %c1_23, %c0_24] : memref<18x18x32xf32, #tpu.memory_space<vmem>>, vector<16x16x32xf32>
    tpu.vector_store %arg13[%c1_22, %c1_23, %c0_24], %27 {strides = array<i32>} : memref<18x18x32xf32, #tpu.memory_space<vmem>>, vector<16x16x32xf32>,
    %c0_25 = arith.constant 0 : index
    %c0_26 = arith.constant 0 : index
    %29 = vector.load %arg4[%c0_25, %c0_26] : memref<9x32xf32, #tpu.memory_space<vmem>>, vector<9x32xf32>
    %c0_27 = arith.constant 0 : index
    %c0_28 = arith.constant 0 : index
    %c0_29 = arith.constant 0 : index
    %30 = vector.load %arg13[%c0_27, %c0_28, %c0_29] : memref<18x18x32xf32, #tpu.memory_space<vmem>>, vector<16x16x32xf32>
    %31 = vector.extract_strided_slice %29 {offsets = [0, 0], sizes = [1, 32], strides = [1, 1]} : vector<9x32xf32> to vector<1x32xf32>
    %32 = vector.shape_cast %31 : vector<1x32xf32> to vector<1x1x32xf32>
    %33 = vector.broadcast %32 : vector<1x1x32xf32> to vector<16x16x32xf32>
    %34 = arith.mulf %30, %33 : vector<16x16x32xf32>
    %c0_30 = arith.constant 0 : index
    %c1_31 = arith.constant 1 : index
    %c0_32 = arith.constant 0 : index
    %35 = vector.load %arg13[%c0_30, %c1_31, %c0_32] : memref<18x18x32xf32, #tpu.memory_space<vmem>>, vector<16x16x32xf32>
    %36 = vector.extract_strided_slice %29 {offsets = [1, 0], sizes = [1, 32], strides = [1, 1]} : vector<9x32xf32> to vector<1x32xf32>
    %37 = vector.shape_cast %36 : vector<1x32xf32> to vector<1x1x32xf32>
    %38 = vector.broadcast %37 : vector<1x1x32xf32> to vector<16x16x32xf32>
    %39 = arith.mulf %35, %38 : vector<16x16x32xf32>
    %40 = arith.addf %34, %39 : vector<16x16x32xf32>
    %c0_33 = arith.constant 0 : index
    %c2 = arith.constant 2 : index
    %c0_34 = arith.constant 0 : index
    %41 = vector.load %arg13[%c0_33, %c2, %c0_34] : memref<18x18x32xf32, #tpu.memory_space<vmem>>, vector<16x16x32xf32>
    %42 = vector.extract_strided_slice %29 {offsets = [2, 0], sizes = [1, 32], strides = [1, 1]} : vector<9x32xf32> to vector<1x32xf32>
    %43 = vector.shape_cast %42 : vector<1x32xf32> to vector<1x1x32xf32>
    %44 = vector.broadcast %43 : vector<1x1x32xf32> to vector<16x16x32xf32>
    %45 = arith.mulf %41, %44 : vector<16x16x32xf32>
    %46 = arith.addf %40, %45 : vector<16x16x32xf32>
    %c1_35 = arith.constant 1 : index
    %c0_36 = arith.constant 0 : index
    %c0_37 = arith.constant 0 : index
    %47 = vector.load %arg13[%c1_35, %c0_36, %c0_37] : memref<18x18x32xf32, #tpu.memory_space<vmem>>, vector<16x16x32xf32>
    %48 = vector.extract_strided_slice %29 {offsets = [3, 0], sizes = [1, 32], strides = [1, 1]} : vector<9x32xf32> to vector<1x32xf32>
    %49 = vector.shape_cast %48 : vector<1x32xf32> to vector<1x1x32xf32>
    %50 = vector.broadcast %49 : vector<1x1x32xf32> to vector<16x16x32xf32>
    %51 = arith.mulf %47, %50 : vector<16x16x32xf32>
    %52 = arith.addf %46, %51 : vector<16x16x32xf32>
    %c1_38 = arith.constant 1 : index
    %c1_39 = arith.constant 1 : index
    %c0_40 = arith.constant 0 : index
    %53 = vector.load %arg13[%c1_38, %c1_39, %c0_40] : memref<18x18x32xf32, #tpu.memory_space<vmem>>, vector<16x16x32xf32>
    %54 = vector.extract_strided_slice %29 {offsets = [4, 0], sizes = [1, 32], strides = [1, 1]} : vector<9x32xf32> to vector<1x32xf32>
    %55 = vector.shape_cast %54 : vector<1x32xf32> to vector<1x1x32xf32>
    %56 = vector.broadcast %55 : vector<1x1x32xf32> to vector<16x16x32xf32>
    %57 = arith.mulf %53, %56 : vector<16x16x32xf32>
    %58 = arith.addf %52, %57 : vector<16x16x32xf32>
    %c1_41 = arith.constant 1 : index
    %c2_42 = arith.constant 2 : index
    %c0_43 = arith.constant 0 : index
    %59 = vector.load %arg13[%c1_41, %c2_42, %c0_43] : memref<18x18x32xf32, #tpu.memory_space<vmem>>, vector<16x16x32xf32>
    %60 = vector.extract_strided_slice %29 {offsets = [5, 0], sizes = [1, 32], strides = [1, 1]} : vector<9x32xf32> to vector<1x32xf32>
    %61 = vector.shape_cast %60 : vector<1x32xf32> to vector<1x1x32xf32>
    %62 = vector.broadcast %61 : vector<1x1x32xf32> to vector<16x16x32xf32>
    %63 = arith.mulf %59, %62 : vector<16x16x32xf32>
    %64 = arith.addf %58, %63 : vector<16x16x32xf32>
    %c2_44 = arith.constant 2 : index
    %c0_45 = arith.constant 0 : index
    %c0_46 = arith.constant 0 : index
    %65 = vector.load %arg13[%c2_44, %c0_45, %c0_46] : memref<18x18x32xf32, #tpu.memory_space<vmem>>, vector<16x16x32xf32>
    %66 = vector.extract_strided_slice %29 {offsets = [6, 0], sizes = [1, 32], strides = [1, 1]} : vector<9x32xf32> to vector<1x32xf32>
    %67 = vector.shape_cast %66 : vector<1x32xf32> to vector<1x1x32xf32>
    %68 = vector.broadcast %67 : vector<1x1x32xf32> to vector<16x16x32xf32>
    %69 = arith.mulf %65, %68 : vector<16x16x32xf32>
    %70 = arith.addf %64, %69 : vector<16x16x32xf32>
    %c2_47 = arith.constant 2 : index
    %c1_48 = arith.constant 1 : index
    %c0_49 = arith.constant 0 : index
    %71 = vector.load %arg13[%c2_47, %c1_48, %c0_49] : memref<18x18x32xf32, #tpu.memory_space<vmem>>, vector<16x16x32xf32>
    %72 = vector.extract_strided_slice %29 {offsets = [7, 0], sizes = [1, 32], strides = [1, 1]} : vector<9x32xf32> to vector<1x32xf32>
    %73 = vector.shape_cast %72 : vector<1x32xf32> to vector<1x1x32xf32>
    %74 = vector.broadcast %73 : vector<1x1x32xf32> to vector<16x16x32xf32>
    %75 = arith.mulf %71, %74 : vector<16x16x32xf32>
    %76 = arith.addf %70, %75 : vector<16x16x32xf32>
    %c2_50 = arith.constant 2 : index
    %c2_51 = arith.constant 2 : index
    %c0_52 = arith.constant 0 : index
    %77 = vector.load %arg13[%c2_50, %c2_51, %c0_52] : memref<18x18x32xf32, #tpu.memory_space<vmem>>, vector<16x16x32xf32>
    %78 = vector.extract_strided_slice %29 {offsets = [8, 0], sizes = [1, 32], strides = [1, 1]} : vector<9x32xf32> to vector<1x32xf32>
    %79 = vector.shape_cast %78 : vector<1x32xf32> to vector<1x1x32xf32>
    %80 = vector.broadcast %79 : vector<1x1x32xf32> to vector<16x16x32xf32>
    %81 = arith.mulf %77, %80 : vector<16x16x32xf32>
    %82 = arith.addf %76, %81 : vector<16x16x32xf32>
    %83 = vector.shape_cast %82 : vector<16x16x32xf32> to vector<256x32xf32>
    %c0_53 = arith.constant 0 : index
    %c0_54 = arith.constant 0 : index
    %84 = vector.load %arg5[%c0_53, %c0_54] : memref<1x32xf32, #tpu.memory_space<vmem>>, vector<1x32xf32>
    %85 = vector.broadcast %84 : vector<1x32xf32> to vector<256x32xf32>
    %86 = arith.addf %83, %85 : vector<256x32xf32>
    %cst_55 = arith.constant dense<0.000000e+00> : vector<32xf32>
    %87 = vector.multi_reduction <add>, %86, %cst_55 [0] : vector<256x32xf32> to vector<32xf32>
    %88 = vector.shape_cast %87 : vector<32xf32> to vector<1x32xf32>
    %cst_56 = arith.constant 3.906250e-03 : f32
    %89 = vector.broadcast %cst_56 : f32 to vector<1x32xf32>
    %90 = arith.mulf %88, %89 : vector<1x32xf32>
    %c0_57 = arith.constant 0 : index
    %c0_58 = arith.constant 0 : index
    %91 = vector.load %arg6[%c0_57, %c0_58] : memref<32x8xf32, #tpu.memory_space<vmem>>, vector<32x8xf32>
    %cst_59 = arith.constant dense<0.000000e+00> : vector<1x8xf32>
    %92 = tpu.matmul %90, %91, %cst_59 {dimension_numbers = #tpu.dot_dimension_numbers<[1], [0], [0], [1], [0, 0, 1, 1], [], []>} : vector<1x32xf32>, vector<32x8xf32>, vector<1x8xf32> -> vector<1x8xf32>
    %cst_60 = arith.constant 0.000000e+00 : f32
    %93 = vector.broadcast %cst_60 : f32 to vector<1x8xf32>
    %94 = arith.maximumf %92, %93 : vector<1x8xf32>
    %c0_61 = arith.constant 0 : index
    %c0_62 = arith.constant 0 : index
    %95 = vector.load %arg7[%c0_61, %c0_62] : memref<8x32xf32, #tpu.memory_space<vmem>>, vector<8x32xf32>
    %cst_63 = arith.constant dense<0.000000e+00> : vector<1x32xf32>
    %96 = tpu.matmul %94, %95, %cst_63 {dimension_numbers = #tpu.dot_dimension_numbers<[1], [0], [0], [1], [0, 0, 1, 1], [], []>} : vector<1x8xf32>, vector<8x32xf32>, vector<1x32xf32> -> vector<1x32xf32>
    %cst_64 = arith.constant 0.166666672 : f32
    %97 = vector.broadcast %cst_64 : f32 to vector<1x32xf32>
    %98 = arith.mulf %96, %97 : vector<1x32xf32>
    %cst_65 = arith.constant 5.000000e-01 : f32
    %99 = vector.broadcast %cst_65 : f32 to vector<1x32xf32>
    %100 = arith.addf %98, %99 : vector<1x32xf32>
    %cst_66 = arith.constant 0.000000e+00 : f32
    %cst_67 = arith.constant 1.000000e+00 : f32
    %101 = vector.broadcast %cst_66 : f32 to vector<1x32xf32>
    %102 = arith.maximumf %101, %100 : vector<1x32xf32>
    %103 = vector.broadcast %cst_67 : f32 to vector<1x32xf32>
    %104 = arith.minimumf %103, %102 : vector<1x32xf32>
    %c0_68 = arith.constant 0 : index
    %c0_69 = arith.constant 0 : index
    %105 = vector.load %arg8[%c0_68, %c0_69] : memref<32x1xf32, #tpu.memory_space<vmem>>, vector<32x1xf32>
    %cst_70 = arith.constant dense<0.000000e+00> : vector<256x1xf32>
    %106 = tpu.matmul %86, %105, %cst_70 {dimension_numbers = #tpu.dot_dimension_numbers<[1], [0], [0], [1], [0, 0, 1, 1], [], []>} : vector<256x32xf32>, vector<32x1xf32>, vector<256x1xf32> -> vector<256x1xf32>
    %c0_71 = arith.constant 0 : index
    %c0_72 = arith.constant 0 : index
    %107 = vector.load %arg9[%c0_71, %c0_72] : memref<1x1xf32, #tpu.memory_space<vmem>>, vector<1x1xf32>
    %108 = vector.broadcast %107 : vector<1x1xf32> to vector<256x1xf32>
    %109 = arith.addf %106, %108 : vector<256x1xf32>
    %110 = arith.negf %109 : vector<256x1xf32>
    %111 = math.exp %110 : vector<256x1xf32>
    %cst_73 = arith.constant 1.000000e+00 : f32
    %112 = vector.broadcast %cst_73 : f32 to vector<256x1xf32>
    %113 = arith.addf %112, %111 : vector<256x1xf32>
    %114 = arith.divf %112, %113 : vector<256x1xf32>
    %115 = vector.broadcast %104 : vector<1x32xf32> to vector<256x32xf32>
    %116 = arith.mulf %86, %115 : vector<256x32xf32>
    %117 = vector.broadcast %114 : vector<256x1xf32> to vector<256x32xf32>
    %118 = arith.mulf %86, %117 : vector<256x32xf32>
    %119 = arith.addf %116, %118 : vector<256x32xf32>
    %120 = arith.negf %119 : vector<256x32xf32>
    %121 = math.exp %120 : vector<256x32xf32>
    %cst_74 = arith.constant 1.000000e+00 : f32
    %122 = vector.broadcast %cst_74 : f32 to vector<256x32xf32>
    %123 = arith.addf %122, %121 : vector<256x32xf32>
    %124 = arith.divf %122, %123 : vector<256x32xf32>
    %125 = arith.mulf %119, %124 : vector<256x32xf32>
    %126 = arith.truncf %125 : vector<256x32xf32> to vector<256x32xbf16>
    %c0_75 = arith.constant 0 : index
    %c0_76 = arith.constant 0 : index
    %127 = vector.load %arg10[%c0_75, %c0_76] : memref<32x16xbf16, #tpu.memory_space<vmem>>, vector<32x16xbf16>
    %cst_77 = arith.constant dense<0.000000e+00> : vector<256x16xf32>
    %128 = tpu.matmul %126, %127, %cst_77 {dimension_numbers = #tpu.dot_dimension_numbers<[1], [0], [0], [1], [0, 0, 1, 1], [], []>} : vector<256x32xbf16>, vector<32x16xbf16>, vector<256x16xf32> -> vector<256x16xf32>
    %c0_78 = arith.constant 0 : index
    %c0_79 = arith.constant 0 : index
    %129 = vector.load %arg11[%c0_78, %c0_79] : memref<1x16xf32, #tpu.memory_space<vmem>>, vector<1x16xf32>
    %130 = vector.broadcast %129 : vector<1x16xf32> to vector<256x16xf32>
    %131 = arith.addf %128, %130 : vector<256x16xf32>
    %132 = vector.shape_cast %13 : vector<16x16x16xf32> to vector<256x16xf32>
    %133 = arith.addf %131, %132 : vector<256x16xf32>
    %134 = vector.shape_cast %133 : vector<256x16xf32> to vector<16x16x16xf32>
    %c0_80 = arith.constant 0 : index
    %c0_81 = arith.constant 0 : index
    %c0_82 = arith.constant 0 : index
    %c0_83 = arith.constant 0 : index
    %135 = vector.load %arg12[%c0_80, %c0_81, %c0_82, %c0_83] : memref<1x16x16x16xf32, #tpu.memory_space<vmem>>, vector<1x16x16x16xf32>
    %136 = vector.shape_cast %135 : vector<1x16x16x16xf32> to vector<16x16x16xf32>
    %137 = vector.shape_cast %134 : vector<16x16x16xf32> to vector<1x16x16x16xf32>
    tpu.vector_store %arg12[%c0_80, %c0_81, %c0_82, %c0_83], %137 {strides = array<i32>} : memref<1x16x16x16xf32, #tpu.memory_space<vmem>>, vector<1x16x16x16xf32>,
    return
  }
  func.func @transform_0(%arg0: i32) -> (i32, i32, i32, i32) {
    %c0_i32 = arith.constant 0 : i32
    %c0_i32_0 = arith.constant 0 : i32
    %c0_i32_1 = arith.constant 0 : i32
    %c0_i32_2 = arith.constant 0 : i32
    return %arg0, %c0_i32, %c0_i32_0, %c0_i32_1 : i32, i32, i32, i32
  }
  func.func @transform_1(%arg0: i32) -> (i32, i32) {
    %c0_i32 = arith.constant 0 : i32
    %c0_i32_0 = arith.constant 0 : i32
    %c0_i32_1 = arith.constant 0 : i32
    return %c0_i32, %c0_i32_0 : i32, i32
  }
  func.func @transform_2(%arg0: i32) -> (i32, i32) {
    %c0_i32 = arith.constant 0 : i32
    %c0_i32_0 = arith.constant 0 : i32
    %c0_i32_1 = arith.constant 0 : i32
    return %c0_i32, %c0_i32_0 : i32, i32
  }
  func.func @transform_3(%arg0: i32) -> (i32, i32) {
    %c0_i32 = arith.constant 0 : i32
    %c0_i32_0 = arith.constant 0 : i32
    %c0_i32_1 = arith.constant 0 : i32
    return %c0_i32, %c0_i32_0 : i32, i32
  }
  func.func @transform_4(%arg0: i32) -> (i32, i32) {
    %c0_i32 = arith.constant 0 : i32
    %c0_i32_0 = arith.constant 0 : i32
    %c0_i32_1 = arith.constant 0 : i32
    return %c0_i32, %c0_i32_0 : i32, i32
  }
  func.func @transform_5(%arg0: i32) -> (i32, i32) {
    %c0_i32 = arith.constant 0 : i32
    %c0_i32_0 = arith.constant 0 : i32
    %c0_i32_1 = arith.constant 0 : i32
    return %c0_i32, %c0_i32_0 : i32, i32
  }
  func.func @transform_6(%arg0: i32) -> (i32, i32) {
    %c0_i32 = arith.constant 0 : i32
    %c0_i32_0 = arith.constant 0 : i32
    %c0_i32_1 = arith.constant 0 : i32
    return %c0_i32, %c0_i32_0 : i32, i32
  }
  func.func @transform_7(%arg0: i32) -> (i32, i32) {
    %c0_i32 = arith.constant 0 : i32
    %c0_i32_0 = arith.constant 0 : i32
    %c0_i32_1 = arith.constant 0 : i32
    return %c0_i32, %c0_i32_0 : i32, i32
  }
  func.func @transform_8(%arg0: i32) -> (i32, i32) {
    %c0_i32 = arith.constant 0 : i32
    %c0_i32_0 = arith.constant 0 : i32
    %c0_i32_1 = arith.constant 0 : i32
    return %c0_i32, %c0_i32_0 : i32, i32
  }
  func.func @transform_9(%arg0: i32) -> (i32, i32) {
    %c0_i32 = arith.constant 0 : i32
    %c0_i32_0 = arith.constant 0 : i32
    %c0_i32_1 = arith.constant 0 : i32
    return %c0_i32, %c0_i32_0 : i32, i32
  }
  func.func @transform_10(%arg0: i32) -> (i32, i32) {
    %c0_i32 = arith.constant 0 : i32
    %c0_i32_0 = arith.constant 0 : i32
    %c0_i32_1 = arith.constant 0 : i32
    return %c0_i32, %c0_i32_0 : i32, i32
  }
  func.func @transform_11(%arg0: i32) -> (i32, i32, i32, i32) {
    %c0_i32 = arith.constant 0 : i32
    %c0_i32_0 = arith.constant 0 : i32
    %c0_i32_1 = arith.constant 0 : i32
    %c0_i32_2 = arith.constant 0 : i32
    return %arg0, %c0_i32, %c0_i32_0, %c0_i32_1 : i32, i32, i32, i32
  }
}

</mosaic_0001>

<llo_original>
// kernel: inverted_residual.1
$region0: #{inverted_residual.1}
  #allocation0 [shape = 'u32[]', space=smem, size = 0x4, offset = 0x4, fixed_abs, tag = 'smem constant byte address 0x4 - core index']
  #allocation1 [shape = 'u32[144,128]{1,0:T(1,128)}', space=vmem, size = 0x12000, scoped, tag = 'internal scratch']
  #allocation2 [shape = 'f32[18,18,32]{2,1,0:T(8,128)}', space=vmem, size = 0x36000, scoped, tag = 'scratch operand']
  #allocation3 [shape = 'f32[1,1]{1,0:T(1,128)S(1)}', space=vmem, size = 0x200, scoped, tag = 'scoped memory for inverted_residual.1']
  %s0 = inlined_call_operand.vmem [shape: f32[2,16,16,16], index: 0, kind: input, shape index: {}]
  %s1 = inlined_call_operand.vmem [shape: bf16[16,32], index: 1, kind: input, shape index: {}]
  %s2 = inlined_call_operand.vmem [shape: f32[1,32], index: 2, kind: input, shape index: {}]
  %s3 = inlined_call_operand.vmem [shape: f32[9,32], index: 3, kind: input, shape index: {}]
  %s4 = inlined_call_operand.vmem [shape: f32[1,32], index: 4, kind: input, shape index: {}]
  %s5 = inlined_call_operand.vmem [shape: f32[32,8], index: 5, kind: input, shape index: {}]
  %s6 = inlined_call_operand.vmem [shape: f32[8,32], index: 6, kind: input, shape index: {}]
  %s7 = inlined_call_operand.vmem [shape: f32[32,1], index: 7, kind: input, shape index: {}]
  %s8 = inlined_call_operand.<no memory space> [shape: f32[1,1], index: 8, kind: input, shape index: {}]
  %s9 = inlined_call_operand.vmem [shape: bf16[32,16], index: 9, kind: input, shape index: {}]
  %s10 = inlined_call_operand.vmem [shape: f32[1,16], index: 10, kind: input, shape index: {}]
  %s11 = inlined_call_operand.vmem [shape: f32[2,16,16,16], index: 11, kind: output, shape index: {}]
  %s12 = sld [smem:[#allocation0]]
  $region77: #{inverted_residual.1} parent=0
    _
  %s14 = ssub.s32 1, %s12
  %s15 = scalar_select 0, %s14, %s12
  %v16 = vstv %s8
  %17 = vst [vmem:[#allocation3] sm:$0x1] %v16
  loop: start=0, step=1, limit=4
  $region2: #{inverted_residual.1} parent=0 // loop_pre_header
    _
  $region3: #{inverted_residual.1} parent=0 // loop_header
    %s19 = sphi 0, %s23
    %p20 = scmp.ge.s32.totalorder %s19, 4
    %s29 = sphi 0, %s31
    %s32 = sphi 0, %s29
    %s33 = sphi 0, %s32
    %s49 = sphi 0, %s33
    %s53 = sphi 0, %s53
    %s55 = sphi 0, %s53
    %s56 = sphi 0, %s55
    %s70 = sphi 0, %s56
    %s74 = sphi 0, %s74
    %s76 = sphi 0, %s74
    %s77 = sphi 0, %s76
    %s91 = sphi 0, %s77
    %s95 = sphi 0, %s95
    %s97 = sphi 0, %s95
    %s98 = sphi 0, %s97
    %s112 = sphi 0, %s98
    %s116 = sphi 0, %s116
    %s118 = sphi 0, %s116
    %s119 = sphi 0, %s118
    %s133 = sphi 0, %s119
    %s137 = sphi 0, %s137
    %s139 = sphi 0, %s137
    %s140 = sphi 0, %s139
    %s154 = sphi 0, %s140
    %s158 = sphi 0, %s158
    %s160 = sphi 0, %s158
    %s161 = sphi 0, %s160
    %s175 = sphi 0, %s161
    %s179 = sphi 0, %s179
    %s181 = sphi 0, %s179
    %s182 = sphi 0, %s181
    %s196 = sphi 0, %s182
    %s200 = sphi 0, %s200
    %s202 = sphi 0, %s200
    %s203 = sphi 0, %s202
    %s217 = sphi 0, %s203
    %s221 = sphi 0, %s221
    %s223 = sphi 0, %s221
    %s224 = sphi 0, %s223
    %s238 = sphi 0, %s224
    %s242 = sphi 0, %s242
    %s244 = sphi 0, %s242
    %s245 = sphi 0, %s244
    %s259 = sphi 0, %s245
    %s265 = sphi 0, %s267
    %s268 = sphi 0, %s265
    %s269 = sphi 0, %s268
    %s285 = sphi 0, %s269
  $region4: #{inverted_residual.1} parent=0 // loop_header_branch
    %22 = sbr.rel (%p20) target = $region8
  $region5: #{inverted_residual.1} parent=0 // loop_body
    %s24 = ssub.s32 %s19, 1
    %s25 = ssub.s32 %s19, 2
    %s26 = sadd.s32 %s19, 1
    %s27 = ssub.s32 %s19, %s26
    %p28 = scmp.eq.s32.totalorder %s27, 0
    %s30 = sadd.s32 %s29, 1
    %s31 = scalar_select %p28, %s29, %s30
    %p34 = pneg %p28
    %p35 = scmp.eq.s32.totalorder %s19, 1
    %p36 = por %p34, %p35
    %p37 = scmp.ne.s32.totalorder %s29, %s32
    %p38 = scmp.eq.s32.totalorder %s19, 0
    %p39 = por %p37, %p38
    %p40 = scmp.ne.s32.totalorder %s29, %s32
    %p41 = scmp.eq.s32.totalorder %s24, 1
    %p42 = por %p40, %p41
    %p43 = scmp.ne.s32.totalorder %s32, %s33
    %p44 = scmp.eq.s32.totalorder %s24, 0
    %p45 = por %p43, %p44
    %p46 = scmp.ne.s32.totalorder %s32, %s33
    %p47 = scmp.eq.s32.totalorder %s25, 1
    %p48 = por %p46, %p47
    %p50 = scmp.ne.s32.totalorder %s33, %s49
    %p51 = scmp.eq.s32.totalorder %s25, 0
    %p52 = por %p50, %p51
    %s54 = sadd.s32 %s53, 1
    %p57 = scmp.eq.s32.totalorder %s19, 1
    %p58 = scmp.ne.s32.totalorder %s53, %s55
    %p59 = scmp.eq.s32.totalorder %s19, 0
    %p60 = por %p58, %p59
    %p61 = scmp.ne.s32.totalorder %s53, %s55
    %p62 = scmp.eq.s32.totalorder %s24, 1
    %p63 = por %p61, %p62
    %p64 = scmp.ne.s32.totalorder %s55, %s56
    %p65 = scmp.eq.s32.totalorder %s24, 0
    %p66 = por %p64, %p65
    %p67 = scmp.ne.s32.totalorder %s55, %s56
    %p68 = scmp.eq.s32.totalorder %s25, 1
    %p69 = por %p67, %p68
    %p71 = scmp.ne.s32.totalorder %s56, %s70
    %p72 = scmp.eq.s32.totalorder %s25, 0
    %p73 = por %p71, %p72
    %s75 = sadd.s32 %s74, 1
    %p78 = scmp.eq.s32.totalorder %s19, 1
    %p79 = scmp.ne.s32.totalorder %s74, %s76
    %p80 = scmp.eq.s32.totalorder %s19, 0
    %p81 = por %p79, %p80
    %p82 = scmp.ne.s32.totalorder %s74, %s76
    %p83 = scmp.eq.s32.totalorder %s24, 1
    %p84 = por %p82, %p83
    %p85 = scmp.ne.s32.totalorder %s76, %s77
    %p86 = scmp.eq.s32.totalorder %s24, 0
    %p87 = por %p85, %p86
    %p88 = scmp.ne.s32.totalorder %s76, %s77
    %p89 = scmp.eq.s32.totalorder %s25, 1
    %p90 = por %p88, %p89
    %p92 = scmp.ne.s32.totalorder %s77, %s91
    %p93 = scmp.eq.s32.totalorder %s25, 0
    %p94 = por %p92, %p93
    %s96 = sadd.s32 %s95, 1
    %p99 = scmp.eq.s32.totalorder %s19, 1
    %p100 = scmp.ne.s32.totalorder %s95, %s97
    %p101 = scmp.eq.s32.totalorder %s19, 0
    %p102 = por %p100, %p101
    %p103 = scmp.ne.s32.totalorder %s95, %s97
    %p104 = scmp.eq.s32.totalorder %s24, 1
    %p105 = por %p103, %p104
    %p106 = scmp.ne.s32.totalorder %s97, %s98
    %p107 = scmp.eq.s32.totalorder %s24, 0
    %p108 = por %p106, %p107
    %p109 = scmp.ne.s32.totalorder %s97, %s98
    %p110 = scmp.eq.s32.totalorder %s25, 1
    %p111 = por %p109, %p110
    %p113 = scmp.ne.s32.totalorder %s98, %s112
    %p114 = scmp.eq.s32.totalorder %s25, 0
    %p115 = por %p113, %p114
    %s117 = sadd.s32 %s116, 1
    %p120 = scmp.eq.s32.totalorder %s19, 1
    %p121 = scmp.ne.s32.totalorder %s116, %s118
    %p122 = scmp.eq.s32.totalorder %s19, 0
    %p123 = por %p121, %p122
    %p124 = scmp.ne.s32.totalorder %s116, %s118
    %p125 = scmp.eq.s32.totalorder %s24, 1
    %p126 = por %p124, %p125
    %p127 = scmp.ne.s32.totalorder %s118, %s119
    %p128 = scmp.eq.s32.totalorder %s24, 0
    %p129 = por %p127, %p128
    %p130 = scmp.ne.s32.totalorder %s118, %s119
    %p131 = scmp.eq.s32.totalorder %s25, 1
    %p132 = por %p130, %p131
    %p134 = scmp.ne.s32.totalorder %s119, %s133
    %p135 = scmp.eq.s32.totalorder %s25, 0
    %p136 = por %p134, %p135
    %s138 = sadd.s32 %s137, 1
    %p141 = scmp.eq.s32.totalorder %s19, 1
    %p142 = scmp.ne.s32.totalorder %s137, %s139
    %p143 = scmp.eq.s32.totalorder %s19, 0
    %p144 = por %p142, %p143
    %p145 = scmp.ne.s32.totalorder %s137, %s139
    %p146 = scmp.eq.s32.totalorder %s24, 1
    %p147 = por %p145, %p146
    %p148 = scmp.ne.s32.totalorder %s139, %s140
    %p149 = scmp.eq.s32.totalorder %s24, 0
    %p150 = por %p148, %p149
    %p151 = scmp.ne.s32.totalorder %s139, %s140
    %p152 = scmp.eq.s32.totalorder %s25, 1
    %p153 = por %p151, %p152
    %p155 = scmp.ne.s32.totalorder %s140, %s154
    %p156 = scmp.eq.s32.totalorder %s25, 0
    %p157 = por %p155, %p156
    %s159 = sadd.s32 %s158, 1
    %p162 = scmp.eq.s32.totalorder %s19, 1
    %p163 = scmp.ne.s32.totalorder %s158, %s160
    %p164 = scmp.eq.s32.totalorder %s19, 0
    %p165 = por %p163, %p164
    %p166 = scmp.ne.s32.totalorder %s158, %s160
    %p167 = scmp.eq.s32.totalorder %s24, 1
    %p168 = por %p166, %p167
    %p169 = scmp.ne.s32.totalorder %s160, %s161
    %p170 = scmp.eq.s32.totalorder %s24, 0
    %p171 = por %p169, %p170
    %p172 = scmp.ne.s32.totalorder %s160, %s161
    %p173 = scmp.eq.s32.totalorder %s25, 1
    %p174 = por %p172, %p173
    %p176 = scmp.ne.s32.totalorder %s161, %s175
    %p177 = scmp.eq.s32.totalorder %s25, 0
    %p178 = por %p176, %p177
    %s180 = sadd.s32 %s179, 1
    %p183 = scmp.eq.s32.totalorder %s19, 1
    %p184 = scmp.ne.s32.totalorder %s179, %s181
    %p185 = scmp.eq.s32.totalorder %s19, 0
    %p186 = por %p184, %p185
    %p187 = scmp.ne.s32.totalorder %s179, %s181
    %p188 = scmp.eq.s32.totalorder %s24, 1
    %p189 = por %p187, %p188
    %p190 = scmp.ne.s32.totalorder %s181, %s182
    %p191 = scmp.eq.s32.totalorder %s24, 0
    %p192 = por %p190, %p191
    %p193 = scmp.ne.s32.totalorder %s181, %s182
    %p194 = scmp.eq.s32.totalorder %s25, 1
    %p195 = por %p193, %p194
    %p197 = scmp.ne.s32.totalorder %s182, %s196
    %p198 = scmp.eq.s32.totalorder %s25, 0
    %p199 = por %p197, %p198
    %s201 = sadd.s32 %s200, 1
    %p204 = scmp.eq.s32.totalorder %s19, 1
    %p205 = scmp.ne.s32.totalorder %s200, %s202
    %p206 = scmp.eq.s32.totalorder %s19, 0
    %p207 = por %p205, %p206
    %p208 = scmp.ne.s32.totalorder %s200, %s202
    %p209 = scmp.eq.s32.totalorder %s24, 1
    %p210 = por %p208, %p209
    %p211 = scmp.ne.s32.totalorder %s202, %s203
    %p212 = scmp.eq.s32.totalorder %s24, 0
    %p213 = por %p211, %p212
    %p214 = scmp.ne.s32.totalorder %s202, %s203
    %p215 = scmp.eq.s32.totalorder %s25, 1
    %p216 = por %p214, %p215
    %p218 = scmp.ne.s32.totalorder %s203, %s217
    %p219 = scmp.eq.s32.totalorder %s25, 0
    %p220 = por %p218, %p219
    %s222 = sadd.s32 %s221, 1
    %p225 = scmp.eq.s32.totalorder %s19, 1
    %p226 = scmp.ne.s32.totalorder %s221, %s223
    %p227 = scmp.eq.s32.totalorder %s19, 0
    %p228 = por %p226, %p227
    %p229 = scmp.ne.s32.totalorder %s221, %s223
    %p230 = scmp.eq.s32.totalorder %s24, 1
    %p231 = por %p229, %p230
    %p232 = scmp.ne.s32.totalorder %s223, %s224
    %p233 = scmp.eq.s32.totalorder %s24, 0
    %p234 = por %p232, %p233
    %p235 = scmp.ne.s32.totalorder %s223, %s224
    %p236 = scmp.eq.s32.totalorder %s25, 1
    %p237 = por %p235, %p236
    %p239 = scmp.ne.s32.totalorder %s224, %s238
    %p240 = scmp.eq.s32.totalorder %s25, 0
    %p241 = por %p239, %p240
    %s243 = sadd.s32 %s242, 1
    %p246 = scmp.eq.s32.totalorder %s19, 1
    %p247 = scmp.ne.s32.totalorder %s242, %s244
    %p248 = scmp.eq.s32.totalorder %s19, 0
    %p249 = por %p247, %p248
    %p250 = scmp.ne.s32.totalorder %s242, %s244
    %p251 = scmp.eq.s32.totalorder %s24, 1
    %p252 = por %p250, %p251
    %p253 = scmp.ne.s32.totalorder %s244, %s245
    %p254 = scmp.eq.s32.totalorder %s24, 0
    %p255 = por %p253, %p254
    %p256 = scmp.ne.s32.totalorder %s244, %s245
    %p257 = scmp.eq.s32.totalorder %s25, 1
    %p258 = por %p256, %p257
    %p260 = scmp.ne.s32.totalorder %s245, %s259
    %p261 = scmp.eq.s32.totalorder %s25, 0
    %p262 = por %p260, %p261
    %s263 = ssub.s32 %s19, %s26
    %p264 = scmp.eq.s32.totalorder %s263, 0
    %s266 = sadd.s32 %s265, 1
    %s267 = scalar_select %p264, %s265, %s266
    %p270 = pneg %p264
    %p271 = scmp.eq.s32.totalorder %s19, 1
    %p272 = por %p270, %p271
    %p273 = scmp.ne.s32.totalorder %s265, %s268
    %p274 = scmp.eq.s32.totalorder %s19, 0
    %p275 = por %p273, %p274
    %p276 = scmp.ne.s32.totalorder %s265, %s268
    %p277 = scmp.eq.s32.totalorder %s24, 1
    %p278 = por %p276, %p277
    %p279 = scmp.ne.s32.totalorder %s268, %s269
    %p280 = scmp.eq.s32.totalorder %s24, 0
    %p281 = por %p279, %p280
    %p282 = scmp.ne.s32.totalorder %s268, %s269
    %p283 = scmp.eq.s32.totalorder %s25, 1
    %p284 = por %p282, %p283
    %p286 = scmp.ne.s32.totalorder %s269, %s285
    %p287 = scmp.eq.s32.totalorder %s25, 0
    %p288 = por %p286, %p287
    %p289 = scmp.le.s32.totalorder 1, %s19
    %p290 = scmp.lt.s32.totalorder %s19, 3
    %p291 = pnand %p289, %p290
    %p292 = pneg %p291
    // Predicated region
    $region9: #{inverted_residual.1} parent=5 // pred_check
      _
    $region10: #{inverted_residual.1} parent=5 // pred_check_branch
      %294 = sbr.rel (%p291) target = $region12
    $region11: #{inverted_residual.1} parent=5 // pred_region
      %s295 = ssub.s32 %s19, 1
      // Predicated region
      $region13: #{inverted_residual.1} parent=11 // pred_check
        %p296 = pneg %p66
      $region14: #{inverted_residual.1} parent=11 // pred_check_branch
        %298 = sbr.rel (%p296) target = $region16
      $region15: #{inverted_residual.1} parent=11 // pred_region
        _
      $region16: #{inverted_residual.1} parent=11 // pred_fallthru
        _
      // Predicated region
      $region17: #{inverted_residual.1} parent=11 // pred_check
        %p299 = pneg %p87
      $region18: #{inverted_residual.1} parent=11 // pred_check_branch
        %301 = sbr.rel (%p299) target = $region20
      $region19: #{inverted_residual.1} parent=11 // pred_region
        _
      $region20: #{inverted_residual.1} parent=11 // pred_fallthru
        _
      // Predicated region
      $region21: #{inverted_residual.1} parent=11 // pred_check
        %p302 = pneg %p108
      $region22: #{inverted_residual.1} parent=11 // pred_check_branch
        %304 = sbr.rel (%p302) target = $region24
      $region23: #{inverted_residual.1} parent=11 // pred_region
        _
      $region24: #{inverted_residual.1} parent=11 // pred_fallthru
        _
      // Predicated region
      $region25: #{inverted_residual.1} parent=11 // pred_check
        %p305 = pneg %p129
      $region26: #{inverted_residual.1} parent=11 // pred_check_branch
        %307 = sbr.rel (%p305) target = $region28
      $region27: #{inverted_residual.1} parent=11 // pred_region
        _
      $region28: #{inverted_residual.1} parent=11 // pred_fallthru
        _
      // Predicated region
      $region29: #{inverted_residual.1} parent=11 // pred_check
        %p308 = pneg %p150
      $region30: #{inverted_residual.1} parent=11 // pred_check_branch
        %310 = sbr.rel (%p308) target = $region32
      $region31: #{inverted_residual.1} parent=11 // pred_region
        _
      $region32: #{inverted_residual.1} parent=11 // pred_fallthru
        _
      // Predicated region
      $region33: #{inverted_residual.1} parent=11 // pred_check
        %p311 = pneg %p171
      $region34: #{inverted_residual.1} parent=11 // pred_check_branch
        %313 = sbr.rel (%p311) target = $region36
      $region35: #{inverted_residual.1} parent=11 // pred_region
        _
      $region36: #{inverted_residual.1} parent=11 // pred_fallthru
        _
      // Predicated region
      $region37: #{inverted_residual.1} parent=11 // pred_check
        %p314 = pneg %p192
      $region38: #{inverted_residual.1} parent=11 // pred_check_branch
        %316 = sbr.rel (%p314) target = $region40
      $region39: #{inverted_residual.1} parent=11 // pred_region
        _
      $region40: #{inverted_residual.1} parent=11 // pred_fallthru
        _
      // Predicated region
      $region41: #{inverted_residual.1} parent=11 // pred_check
        %p317 = pneg %p213
      $region42: #{inverted_residual.1} parent=11 // pred_check_branch
        %319 = sbr.rel (%p317) target = $region44
      $region43: #{inverted_residual.1} parent=11 // pred_region
        _
      $region44: #{inverted_residual.1} parent=11 // pred_fallthru
        _
      // Predicated region
      $region45: #{inverted_residual.1} parent=11 // pred_check
        %p320 = pneg %p234
      $region46: #{inverted_residual.1} parent=11 // pred_check_branch
        %322 = sbr.rel (%p320) target = $region48
      $region47: #{inverted_residual.1} parent=11 // pred_region
        _
      $region48: #{inverted_residual.1} parent=11 // pred_fallthru
        _
      // Predicated region
      $region49: #{inverted_residual.1} parent=11 // pred_check
        %p323 = pneg %p255
      $region50: #{inverted_residual.1} parent=11 // pred_check_branch
        %325 = sbr.rel (%p323) target = $region52
      $region51: #{inverted_residual.1} parent=11 // pred_region
        _
      $region52: #{inverted_residual.1} parent=11 // pred_fallthru
        _
    $region12: #{inverted_residual.1} parent=5 // pred_fallthru
      _
    %p326 = scmp.lt.s32.totalorder %s19, 2
    // Predicated region
    $region53: #{inverted_residual.1} parent=5 // pred_check
      %p327 = pneg %p326
    $region54: #{inverted_residual.1} parent=5 // pred_check_branch
      %329 = sbr.rel (%p327) target = $region56
    $region55: #{inverted_residual.1} parent=5 // pred_region
      // Predicated region
      $region57: #{inverted_residual.1} parent=55 // pred_check
        %p330 = pneg %p39
      $region58: #{inverted_residual.1} parent=55 // pred_check_branch
        %332 = sbr.rel (%p330) target = $region60
      $region59: #{inverted_residual.1} parent=55 // pred_region
        %p333 = scmp.lt.s32.totalorder %s19, 1
        %s334 = scalar_select %p333, %s19, 1
        %s335 = smul.addr %s334, 32
        %s336 = smul.addr %s335, 8
        %s337 = scalar_lea.vmem %s0, %s336
      $region60: #{inverted_residual.1} parent=55 // pred_fallthru
        _
    $region56: #{inverted_residual.1} parent=5 // pred_fallthru
      _
    %p338 = scmp.le.s32.totalorder 1, %s19
    %p339 = scmp.lt.s32.totalorder %s19, 3
    %p340 = pnand %p338, %p339
    %p341 = pneg %p340
    // Predicated region
    $region61: #{inverted_residual.1} parent=5 // pred_check
      _
    $region62: #{inverted_residual.1} parent=5 // pred_check_branch
      %343 = sbr.rel (%p340) target = $region64
    $region63: #{inverted_residual.1} parent=5 // pred_region
      %s344 = ssub.s32 %s19, 1
      %p345 = scmp.lt.s32.totalorder %s24, 1
      %s346 = scalar_select %p345, %s24, 1
      %s347 = smul.addr %s346, 32
      %s348 = smul.addr %s347, 8
      %s349 = scalar_lea.vmem %s0, %s348
      %p350 = pneg %p45
      %p351 = pneg %p42
      %p352 = pneg %p66
      %p353 = pneg %p63
      %p354 = pneg %p87
      %p355 = pneg %p84
      %p356 = pneg %p108
      %p357 = pneg %p105
      %p358 = pneg %p129
      %p359 = pneg %p126
      %p360 = pneg %p150
      %p361 = pneg %p147
      %p362 = pneg %p171
      %p363 = pneg %p168
      %p364 = pneg %p192
      %p365 = pneg %p189
      %p366 = pneg %p213
      %p367 = pneg %p210
      %p368 = pneg %p234
      %p369 = pneg %p231
      %p370 = pneg %p255
      %p371 = pneg %p252
      %p372 = pneg %p281
      %p373 = pneg %p278
      %p374 = scmp.lt.s32.totalorder %s24, 1
      %s375 = scalar_select %p374, %s24, 1
      %s376 = smul.addr %s375, 32
      %s377 = smul.addr %s376, 8
      %s378 = scalar_lea.vmem %s11, %s377
      %p379 = scmp.lt.s32.totalorder %s24, 1
      %s380 = scalar_select %p379, %s24, 1
      %s381 = smul.addr %s380, 32
      %s382 = smul.addr %s381, 8
      %s383 = scalar_lea.vmem %s0, %s382
      %p384 = scmp.lt.s32.totalorder %s24, 1
      %s385 = scalar_select %p384, %s24, 1
      %s386 = smul.addr %s385, 32
      %s387 = smul.addr %s386, 8
      %s388 = scalar_lea.vmem %s11, %s387
      %vm390 = vcmask 261120
      %391 = vst.msk [vmem:[#allocation2] sm:$0xff] %vm390, 0.0
      %392 = vst.msk [vmem:[#allocation2 + $0x8] sm:$0xff] %vm390, 0.0
      %vm393 = vcmask 254976
      %394 = vst.msk [vmem:[#allocation2 + $0x10] sm:$0x3] %vm393, 0.0
      %s395 = scalar_lea.vmem [#allocation2], 408
      %396 = vst.msk [vmem:[%s395] sm:$0xff] %vm390, 0.0
      %397 = vst.msk [vmem:[%s395 + $0x8] sm:$0xff] %vm390, 0.0
      %398 = vst.msk [vmem:[%s395 + $0x10] sm:$0x3] %vm393, 0.0
      %s399 = scalar_lea.vmem [#allocation2], 24
      %vm400 = vcmask 253952
      %401 = vst.msk [vmem:[%s399] sm:$0x1] %vm400, 0.0
      %402 = vst.msk [vmem:[%s399 + $0x18] sm:$0x1] %vm400, 0.0
      %403 = vst.msk [vmem:[%s399 + $0x30] sm:$0x1] %vm400, 0.0
      %404 = vst.msk [vmem:[%s399 + $0x48] sm:$0x1] %vm400, 0.0
      %405 = vst.msk [vmem:[%s399 + $0x60] sm:$0x1] %vm400, 0.0
      %406 = vst.msk [vmem:[%s399 + $0x78] sm:$0x1] %vm400, 0.0
      %407 = vst.msk [vmem:[%s399 + $0x90] sm:$0x1] %vm400, 0.0
      %408 = vst.msk [vmem:[%s399 + $0xa8] sm:$0x1] %vm400, 0.0
      %409 = vst.msk [vmem:[%s399 + $0xc0] sm:$0x1] %vm400, 0.0
      %410 = vst.msk [vmem:[%s399 + $0xd8] sm:$0x1] %vm400, 0.0
      %411 = vst.msk [vmem:[%s399 + $0xf0] sm:$0x1] %vm400, 0.0
      %412 = vst.msk [vmem:[%s399 + $0x108] sm:$0x1] %vm400, 0.0
      %413 = vst.msk [vmem:[%s399 + $0x120] sm:$0x1] %vm400, 0.0
      %414 = vst.msk [vmem:[%s399 + $0x138] sm:$0x1] %vm400, 0.0
      %415 = vst.msk [vmem:[%s399 + $0x150] sm:$0x1] %vm400, 0.0
      %416 = vst.msk [vmem:[%s399 + $0x168] sm:$0x1] %vm400, 0.0
      %417 = vst.msk [vmem:[%s399 + $0x11] sm:$0x1] %vm400, 0.0
      %418 = vst.msk [vmem:[%s399 + $0x29] sm:$0x1] %vm400, 0.0
      %419 = vst.msk [vmem:[%s399 + $0x41] sm:$0x1] %vm400, 0.0
      %420 = vst.msk [vmem:[%s399 + $0x59] sm:$0x1] %vm400, 0.0
      %421 = vst.msk [vmem:[%s399 + $0x71] sm:$0x1] %vm400, 0.0
      %422 = vst.msk [vmem:[%s399 + $0x89] sm:$0x1] %vm400, 0.0
      %423 = vst.msk [vmem:[%s399 + $0xa1] sm:$0x1] %vm400, 0.0
      %424 = vst.msk [vmem:[%s399 + $0xb9] sm:$0x1] %vm400, 0.0
      %425 = vst.msk [vmem:[%s399 + $0xd1] sm:$0x1] %vm400, 0.0
      %426 = vst.msk [vmem:[%s399 + $0xe9] sm:$0x1] %vm400, 0.0
      %427 = vst.msk [vmem:[%s399 + $0x101] sm:$0x1] %vm400, 0.0
      %428 = vst.msk [vmem:[%s399 + $0x119] sm:$0x1] %vm400, 0.0
      %429 = vst.msk [vmem:[%s399 + $0x131] sm:$0x1] %vm400, 0.0
      %430 = vst.msk [vmem:[%s399 + $0x149] sm:$0x1] %vm400, 0.0
      %431 = vst.msk [vmem:[%s399 + $0x161] sm:$0x1] %vm400, 0.0
      %432 = vst.msk [vmem:[%s399 + $0x179] sm:$0x1] %vm400, 0.0
      %v433 = vld [vmem:[%s383] sm:$0xff]
      %v434 = vld [vmem:[%s383 + $0x8] sm:$0xff]
      %v435 = vld [vmem:[%s383 + $0x10] sm:$0xff]
      %v436 = vld [vmem:[%s383 + $0x18] sm:$0xff]
      %v437 = vld [vmem:[%s383 + $0x20] sm:$0xff]
      %v438 = vld [vmem:[%s383 + $0x28] sm:$0xff]
      %v439 = vld [vmem:[%s383 + $0x30] sm:$0xff]
      %v440 = vld [vmem:[%s383 + $0x38] sm:$0xff]
      %v441 = vld [vmem:[%s383 + $0x40] sm:$0xff]
      %v442 = vld [vmem:[%s383 + $0x48] sm:$0xff]
      %v443 = vld [vmem:[%s383 + $0x50] sm:$0xff]
      %v444 = vld [vmem:[%s383 + $0x58] sm:$0xff]
      %v445 = vld [vmem:[%s383 + $0x60] sm:$0xff]
      %v446 = vld [vmem:[%s383 + $0x68] sm:$0xff]
      %v447 = vld [vmem:[%s383 + $0x70] sm:$0xff]
      %v448 = vld [vmem:[%s383 + $0x78] sm:$0xff]
      %v449 = vld [vmem:[%s383 + $0x80] sm:$0xff]
      %v450 = vld [vmem:[%s383 + $0x88] sm:$0xff]
      %v451 = vld [vmem:[%s383 + $0x90] sm:$0xff]
      %v452 = vld [vmem:[%s383 + $0x98] sm:$0xff]
      %v453 = vld [vmem:[%s383 + $0xa0] sm:$0xff]
      %v454 = vld [vmem:[%s383 + $0xa8] sm:$0xff]
      %v455 = vld [vmem:[%s383 + $0xb0] sm:$0xff]
      %v456 = vld [vmem:[%s383 + $0xb8] sm:$0xff]
      %v457 = vld [vmem:[%s383 + $0xc0] sm:$0xff]
      %v458 = vld [vmem:[%s383 + $0xc8] sm:$0xff]
      %v459 = vld [vmem:[%s383 + $0xd0] sm:$0xff]
      %v460 = vld [vmem:[%s383 + $0xd8] sm:$0xff]
      %v461 = vld [vmem:[%s383 + $0xe0] sm:$0xff]
      %v462 = vld [vmem:[%s383 + $0xe8] sm:$0xff]
      %v463 = vld [vmem:[%s383 + $0xf0] sm:$0xff]
      %v464 = vld [vmem:[%s383 + $0xf8] sm:$0xff]
      %v465 = vpack.c.bf16 %v434, %v433
      %v466 = vpack.c.bf16 %v436, %v435
      %v467 = vpack.c.bf16 %v438, %v437
      %v468 = vpack.c.bf16 %v440, %v439
      %v469 = vpack.c.bf16 %v442, %v441
      %v470 = vpack.c.bf16 %v444, %v443
      %v471 = vpack.c.bf16 %v446, %v445
      %v472 = vpack.c.bf16 %v448, %v447
      %v473 = vpack.c.bf16 %v450, %v449
      %v474 = vpack.c.bf16 %v452, %v451
      %v475 = vpack.c.bf16 %v454, %v453
      %v476 = vpack.c.bf16 %v456, %v455
      %v477 = vpack.c.bf16 %v458, %v457
      %v478 = vpack.c.bf16 %v460, %v459
      %v479 = vpack.c.bf16 %v462, %v461
      %v480 = vpack.c.bf16 %v464, %v463
      %v481 = vld [vmem:[%s1] sm:$0xf]
      %v482 = vld [vmem:[%s1 + $0x4] sm:$0xf]
      %v483 = vld [vmem:[%s2] sm:$0x1]
      %v485 = vlaneseq
      %v486 = vshrl.u32 %v485, 7
      %v487 = vsub.s32 0, %v486
      %v488 = vrot.slane %v483, %v487
      %v492 = vunpack.c.l.b16 %v481
      %v493 = vunpack.c.l.b16 %v482
      %v494 = vpack.c.b16 %v493, %v492
      %vm496 = vcmask 130048
      %v498 = vsel %vm496, %v465, 0
      %v501 = vsel %vm496, %v466, 0
      %v504 = vsel %vm496, %v467, 0
      %v507 = vsel %vm496, %v468, 0
      %v510 = vsel %vm496, %v469, 0
      %v513 = vsel %vm496, %v470, 0
      %v516 = vsel %vm496, %v471, 0
      %v519 = vsel %vm496, %v472, 0
      %v522 = vsel %vm496, %v473, 0
      %v525 = vsel %vm496, %v474, 0
      %v528 = vsel %vm496, %v475, 0
      %v531 = vsel %vm496, %v476, 0
      %v534 = vsel %vm496, %v477, 0
      %v537 = vsel %vm496, %v478, 0
      %v540 = vsel %vm496, %v479, 0
      %v543 = vsel %vm496, %v480, 0
      %545 = vmatprep.subr.bf16.mxu0 0
      %546 = vmatpush1.bf16.msra.mxu0 %v494
      %547 = vmatprep.subr.bf16.mxu0 0
      %548 = vmatpush1.bf16.msra.mxu0 0
      %549 = vmatprep.subr.bf16.mxu0 0
      %550 = vmatpush1.bf16.msra.mxu0 0
      %551 = vmatprep.subr.bf16.mxu0 0
      %552 = vmatpush1.bf16.msra.mxu0 0
      %553 = vmatprep.subr.bf16.mxu0 0
      %554 = vmatpush1.bf16.msra.mxu0 0
      %555 = vmatprep.subr.bf16.mxu0 0
      %556 = vmatpush1.bf16.msra.mxu0 0
      %557 = vmatprep.subr.bf16.mxu0 0
      %558 = vmatpush1.bf16.msra.mxu0 0
      %559 = vmatprep.subr.bf16.mxu0 0
      %560 = vmatpush1.bf16.msra.mxu0 0
      %561 = vmatprep.subr.bf16.mxu0 0
      %562 = vmatpush1.bf16.msra.mxu0 0
      %563 = vmatprep.subr.bf16.mxu0 0
      %564 = vmatpush1.bf16.msra.mxu0 0
      %565 = vmatprep.subr.bf16.mxu0 0
      %566 = vmatpush1.bf16.msra.mxu0 0
      %567 = vmatprep.subr.bf16.mxu0 0
      %568 = vmatpush1.bf16.msra.mxu0 0
      %569 = vmatprep.subr.bf16.mxu0 0
      %570 = vmatpush1.bf16.msra.mxu0 0
      %571 = vmatprep.subr.bf16.mxu0 0
      %572 = vmatpush1.bf16.msra.mxu0 0
      %573 = vmatprep.subr.bf16.mxu0 0
      %574 = vmatpush1.bf16.msra.mxu0 0
      %575 = vmatprep.subr.bf16.mxu0 0
      %576 = vmatpush1.bf16.msra.mxu0 0
      %577 = vmatprep.mubr.bf16.mxu0 0
      %578 = vmatmul.mubr.bf16.gmra.mrb[0].mxu0 %v498
      %v579 = vpop.f32.mrb[0].mxu0
      %v580 = vadd.f32 %v488, %v579
      %v581 = vpop.f32.mrb[0].mxu0
      %v582 = vpop.f32.mrb[0].mxu0
      %v583 = vadd.f32 %v488, %v582
      %v584 = vpop.f32.mrb[0].mxu0
      %585 = vmatprep.mubr.bf16.mxu0 0
      %586 = vmatmul.mubr.bf16.gmra.mrb[0].mxu0 %v501
      %v587 = vpop.f32.mrb[0].mxu0
      %v588 = vadd.f32 %v488, %v587
      %v589 = vpop.f32.mrb[0].mxu0
      %v590 = vpop.f32.mrb[0].mxu0
      %v591 = vadd.f32 %v488, %v590
      %v592 = vpop.f32.mrb[0].mxu0
      %593 = vmatprep.mubr.bf16.mxu0 0
      %594 = vmatmul.mubr.bf16.gmra.mrb[0].mxu0 %v504
      %v595 = vpop.f32.mrb[0].mxu0
      %v596 = vadd.f32 %v488, %v595
      %v597 = vpop.f32.mrb[0].mxu0
      %v598 = vpop.f32.mrb[0].mxu0
      %v599 = vadd.f32 %v488, %v598
      %v600 = vpop.f32.mrb[0].mxu0
      %601 = vmatprep.mubr.bf16.mxu0 0
      %602 = vmatmul.mubr.bf16.gmra.mrb[0].mxu0 %v507
      %v603 = vpop.f32.mrb[0].mxu0
      %v604 = vadd.f32 %v488, %v603
      %v605 = vpop.f32.mrb[0].mxu0
      %v606 = vpop.f32.mrb[0].mxu0
      %v607 = vadd.f32 %v488, %v606
      %v608 = vpop.f32.mrb[0].mxu0
      %609 = vmatprep.mubr.bf16.mxu0 0
      %610 = vmatmul.mubr.bf16.gmra.mrb[0].mxu0 %v510
      %v611 = vpop.f32.mrb[0].mxu0
      %v612 = vadd.f32 %v488, %v611
      %v613 = vpop.f32.mrb[0].mxu0
      %v614 = vpop.f32.mrb[0].mxu0
      %v615 = vadd.f32 %v488, %v614
      %v616 = vpop.f32.mrb[0].mxu0
      %617 = vmatprep.mubr.bf16.mxu0 0
      %618 = vmatmul.mubr.bf16.gmra.mrb[0].mxu0 %v513
      %v619 = vpop.f32.mrb[0].mxu0
      %v620 = vadd.f32 %v488, %v619
      %v621 = vpop.f32.mrb[0].mxu0
      %v622 = vpop.f32.mrb[0].mxu0
      %v623 = vadd.f32 %v488, %v622
      %v624 = vpop.f32.mrb[0].mxu0
      %625 = vmatprep.mubr.bf16.mxu0 0
      %626 = vmatmul.mubr.bf16.gmra.mrb[0].mxu0 %v516
      %v627 = vpop.f32.mrb[0].mxu0
      %v628 = vadd.f32 %v488, %v627
      %v629 = vpop.f32.mrb[0].mxu0
      %v630 = vpop.f32.mrb[0].mxu0
      %v631 = vadd.f32 %v488, %v630
      %v632 = vpop.f32.mrb[0].mxu0
      %633 = vmatprep.mubr.bf16.mxu0 0
      %634 = vmatmul.mubr.bf16.gmra.mrb[0].mxu0 %v519
      %v635 = vpop.f32.mrb[0].mxu0
      %v636 = vadd.f32 %v488, %v635
      %v637 = vpop.f32.mrb[0].mxu0
      %v638 = vpop.f32.mrb[0].mxu0
      %v639 = vadd.f32 %v488, %v638
      %v640 = vpop.f32.mrb[0].mxu0
      %641 = vmatprep.mubr.bf16.mxu0 0
      %642 = vmatmul.mubr.bf16.gmra.mrb[0].mxu0 %v522
      %v643 = vpop.f32.mrb[0].mxu0
      %v644 = vadd.f32 %v488, %v643
      %v645 = vpop.f32.mrb[0].mxu0
      %v646 = vpop.f32.mrb[0].mxu0
      %v647 = vadd.f32 %v488, %v646
      %v648 = vpop.f32.mrb[0].mxu0
      %649 = vmatprep.mubr.bf16.mxu0 0
      %650 = vmatmul.mubr.bf16.gmra.mrb[0].mxu0 %v525
      %v651 = vpop.f32.mrb[0].mxu0
      %v652 = vadd.f32 %v488, %v651
      %v653 = vpop.f32.mrb[0].mxu0
      %v654 = vpop.f32.mrb[0].mxu0
      %v655 = vadd.f32 %v488, %v654
      %v656 = vpop.f32.mrb[0].mxu0
      %657 = vmatprep.mubr.bf16.mxu0 0
      %658 = vmatmul.mubr.bf16.gmra.mrb[0].mxu0 %v528
      %v659 = vpop.f32.mrb[0].mxu0
      %v660 = vadd.f32 %v488, %v659
      %v661 = vpop.f32.mrb[0].mxu0
      %v662 = vpop.f32.mrb[0].mxu0
      %v663 = vadd.f32 %v488, %v662
      %v664 = vpop.f32.mrb[0].mxu0
      %665 = vmatprep.mubr.bf16.mxu0 0
      %666 = vmatmul.mubr.bf16.gmra.mrb[0].mxu0 %v531
      %v667 = vpop.f32.mrb[0].mxu0
      %v668 = vadd.f32 %v488, %v667
      %v669 = vpop.f32.mrb[0].mxu0
      %v670 = vpop.f32.mrb[0].mxu0
      %v671 = vadd.f32 %v488, %v670
      %v672 = vpop.f32.mrb[0].mxu0
      %673 = vmatprep.mubr.bf16.mxu0 0
      %674 = vmatmul.mubr.bf16.gmra.mrb[0].mxu0 %v534
      %v675 = vpop.f32.mrb[0].mxu0
      %v676 = vadd.f32 %v488, %v675
      %v677 = vpop.f32.mrb[0].mxu0
      %v678 = vpop.f32.mrb[0].mxu0
      %v679 = vadd.f32 %v488, %v678
      %v680 = vpop.f32.mrb[0].mxu0
      %681 = vmatprep.mubr.bf16.mxu0 0
      %682 = vmatmul.mubr.bf16.gmra.mrb[0].mxu0 %v537
      %v683 = vpop.f32.mrb[0].mxu0
      %v684 = vadd.f32 %v488, %v683
      %v685 = vpop.f32.mrb[0].mxu0
      %v686 = vpop.f32.mrb[0].mxu0
      %v687 = vadd.f32 %v488, %v686
      %v688 = vpop.f32.mrb[0].mxu0
      %689 = vmatprep.mubr.bf16.mxu0 0
      %690 = vmatmul.mubr.bf16.gmra.mrb[0].mxu0 %v540
      %v691 = vpop.f32.mrb[0].mxu0
      %v692 = vadd.f32 %v488, %v691
      %v693 = vpop.f32.mrb[0].mxu0
      %v694 = vpop.f32.mrb[0].mxu0
      %v695 = vadd.f32 %v488, %v694
      %v696 = vpop.f32.mrb[0].mxu0
      %697 = vmatprep.mubr.bf16.mxu0 0
      %698 = vmatmul.mubr.bf16.gmra.mrb[0].mxu0 %v543
      %v699 = vpop.f32.mrb[0].mxu0
      %v700 = vadd.f32 %v488, %v699
      %v701 = vpop.f32.mrb[0].mxu0
      %v702 = vpop.f32.mrb[0].mxu0
      %v703 = vadd.f32 %v488, %v702
      %v704 = vpop.f32.mrb[0].mxu0
      %705 = vdwg.mxu0
      %v706 = vxor.u32 %v580, 2147483648
      %v707 = vxor.u32 %v583, 2147483648
      %v708 = vxor.u32 %v588, 2147483648
      %v709 = vxor.u32 %v591, 2147483648
      %v710 = vxor.u32 %v596, 2147483648
      %v711 = vxor.u32 %v599, 2147483648
      %v712 = vxor.u32 %v604, 2147483648
      %v713 = vxor.u32 %v607, 2147483648
      %v714 = vxor.u32 %v612, 2147483648
      %v715 = vxor.u32 %v615, 2147483648
      %v716 = vxor.u32 %v620, 2147483648
      %v717 = vxor.u32 %v623, 2147483648
      %v718 = vxor.u32 %v628, 2147483648
      %v719 = vxor.u32 %v631, 2147483648
      %v720 = vxor.u32 %v636, 2147483648
      %v721 = vxor.u32 %v639, 2147483648
      %v722 = vxor.u32 %v644, 2147483648
      %v723 = vxor.u32 %v647, 2147483648
      %v724 = vxor.u32 %v652, 2147483648
      %v725 = vxor.u32 %v655, 2147483648
      %v726 = vxor.u32 %v660, 2147483648
      %v727 = vxor.u32 %v663, 2147483648
      %v728 = vxor.u32 %v668, 2147483648
      %v729 = vxor.u32 %v671, 2147483648
      %v730 = vxor.u32 %v676, 2147483648
      %v731 = vxor.u32 %v679, 2147483648
      %v732 = vxor.u32 %v684, 2147483648
      %v733 = vxor.u32 %v687, 2147483648
      %v734 = vxor.u32 %v692, 2147483648
      %v735 = vxor.u32 %v695, 2147483648
      %v736 = vxor.u32 %v700, 2147483648
      %v737 = vxor.u32 %v703, 2147483648
      %v738 = vmul.f32 %v706, 1.442695
      %v739 = vpow.pop %v738
      %v740 = vmul.f32 %v707, 1.442695
      %v741 = vpow.pop %v740
      %v742 = vmul.f32 %v708, 1.442695
      %v743 = vpow.pop %v742
      %v744 = vmul.f32 %v709, 1.442695
      %v745 = vpow.pop %v744
      %v746 = vmul.f32 %v710, 1.442695
      %v747 = vpow.pop %v746
      %v748 = vmul.f32 %v711, 1.442695
      %v749 = vpow.pop %v748
      %v750 = vmul.f32 %v712, 1.442695
      %v751 = vpow.pop %v750
      %v752 = vmul.f32 %v713, 1.442695
      %v753 = vpow.pop %v752
      %v754 = vmul.f32 %v714, 1.442695
      %v755 = vpow.pop %v754
      %v756 = vmul.f32 %v715, 1.442695
      %v757 = vpow.pop %v756
      %v758 = vmul.f32 %v716, 1.442695
      %v759 = vpow.pop %v758
      %v760 = vmul.f32 %v717, 1.442695
      %v761 = vpow.pop %v760
      %v762 = vmul.f32 %v718, 1.442695
      %v763 = vpow.pop %v762
      %v764 = vmul.f32 %v719, 1.442695
      %v765 = vpow.pop %v764
      %v766 = vmul.f32 %v720, 1.442695
      %v767 = vpow.pop %v766
      %v768 = vmul.f32 %v721, 1.442695
      %v769 = vpow.pop %v768
      %v770 = vmul.f32 %v722, 1.442695
      %v771 = vpow.pop %v770
      %v772 = vmul.f32 %v723, 1.442695
      %v773 = vpow.pop %v772
      %v774 = vmul.f32 %v724, 1.442695
      %v775 = vpow.pop %v774
      %v776 = vmul.f32 %v725, 1.442695
      %v777 = vpow.pop %v776
      %v778 = vmul.f32 %v726, 1.442695
      %v779 = vpow.pop %v778
      %v780 = vmul.f32 %v727, 1.442695
      %v781 = vpow.pop %v780
      %v782 = vmul.f32 %v728, 1.442695
      %v783 = vpow.pop %v782
      %v784 = vmul.f32 %v729, 1.442695
      %v785 = vpow.pop %v784
      %v786 = vmul.f32 %v730, 1.442695
      %v787 = vpow.pop %v786
      %v788 = vmul.f32 %v731, 1.442695
      %v789 = vpow.pop %v788
      %v790 = vmul.f32 %v732, 1.442695
      %v791 = vpow.pop %v790
      %v792 = vmul.f32 %v733, 1.442695
      %v793 = vpow.pop %v792
      %v794 = vmul.f32 %v734, 1.442695
      %v795 = vpow.pop %v794
      %v796 = vmul.f32 %v735, 1.442695
      %v797 = vpow.pop %v796
      %v798 = vmul.f32 %v736, 1.442695
      %v799 = vpow.pop %v798
      %v800 = vmul.f32 %v737, 1.442695
      %v801 = vpow.pop %v800
      %v802 = vadd.f32 %v739, 1.0
      %v803 = vadd.f32 %v741, 1.0
      %v804 = vadd.f32 %v743, 1.0
      %v805 = vadd.f32 %v745, 1.0
      %v806 = vadd.f32 %v747, 1.0
      %v807 = vadd.f32 %v749, 1.0
      %v808 = vadd.f32 %v751, 1.0
      %v809 = vadd.f32 %v753, 1.0
      %v810 = vadd.f32 %v755, 1.0
      %v811 = vadd.f32 %v757, 1.0
      %v812 = vadd.f32 %v759, 1.0
      %v813 = vadd.f32 %v761, 1.0
      %v814 = vadd.f32 %v763, 1.0
      %v815 = vadd.f32 %v765, 1.0
      %v816 = vadd.f32 %v767, 1.0
      %v817 = vadd.f32 %v769, 1.0
      %v818 = vadd.f32 %v771, 1.0
      %v819 = vadd.f32 %v773, 1.0
      %v820 = vadd.f32 %v775, 1.0
      %v821 = vadd.f32 %v777, 1.0
      %v822 = vadd.f32 %v779, 1.0
      %v823 = vadd.f32 %v781, 1.0
      %v824 = vadd.f32 %v783, 1.0
      %v825 = vadd.f32 %v785, 1.0
      %v826 = vadd.f32 %v787, 1.0
      %v827 = vadd.f32 %v789, 1.0
      %v828 = vadd.f32 %v791, 1.0
      %v829 = vadd.f32 %v793, 1.0
      %v830 = vadd.f32 %v795, 1.0
      %v831 = vadd.f32 %v797, 1.0
      %v832 = vadd.f32 %v799, 1.0
      %v833 = vadd.f32 %v801, 1.0
      %v834 = vrcp.pop %v802
      %v835 = vmul.f32 1.0, %v834
      %v836 = vrcp.pop %v803
      %v837 = vmul.f32 1.0, %v836
      %v838 = vrcp.pop %v804
      %v839 = vmul.f32 1.0, %v838
      %v840 = vrcp.pop %v805
      %v841 = vmul.f32 1.0, %v840
      %v842 = vrcp.pop %v806
      %v843 = vmul.f32 1.0, %v842
      %v844 = vrcp.pop %v807
      %v845 = vmul.f32 1.0, %v844
      %v846 = vrcp.pop %v808
      %v847 = vmul.f32 1.0, %v846
      %v848 = vrcp.pop %v809
      %v849 = vmul.f32 1.0, %v848
      %v850 = vrcp.pop %v810
      %v851 = vmul.f32 1.0, %v850
      %v852 = vrcp.pop %v811
      %v853 = vmul.f32 1.0, %v852
      %v854 = vrcp.pop %v812
      %v855 = vmul.f32 1.0, %v854
      %v856 = vrcp.pop %v813
      %v857 = vmul.f32 1.0, %v856
      %v858 = vrcp.pop %v814
      %v859 = vmul.f32 1.0, %v858
      %v860 = vrcp.pop %v815
      %v861 = vmul.f32 1.0, %v860
      %v862 = vrcp.pop %v816
      %v863 = vmul.f32 1.0, %v862
      %v864 = vrcp.pop %v817
      %v865 = vmul.f32 1.0, %v864
      %v866 = vrcp.pop %v818
      %v867 = vmul.f32 1.0, %v866
      %v868 = vrcp.pop %v819
      %v869 = vmul.f32 1.0, %v868
      %v870 = vrcp.pop %v820
      %v871 = vmul.f32 1.0, %v870
      %v872 = vrcp.pop %v821
      %v873 = vmul.f32 1.0, %v872
      %v874 = vrcp.pop %v822
      %v875 = vmul.f32 1.0, %v874
      %v876 = vrcp.pop %v823
      %v877 = vmul.f32 1.0, %v876
      %v878 = vrcp.pop %v824
      %v879 = vmul.f32 1.0, %v878
      %v880 = vrcp.pop %v825
      %v881 = vmul.f32 1.0, %v880
      %v882 = vrcp.pop %v826
      %v883 = vmul.f32 1.0, %v882
      %v884 = vrcp.pop %v827
      %v885 = vmul.f32 1.0, %v884
      %v886 = vrcp.pop %v828
      %v887 = vmul.f32 1.0, %v886
      %v888 = vrcp.pop %v829
      %v889 = vmul.f32 1.0, %v888
      %v890 = vrcp.pop %v830
      %v891 = vmul.f32 1.0, %v890
      %v892 = vrcp.pop %v831
      %v893 = vmul.f32 1.0, %v892
      %v894 = vrcp.pop %v832
      %v895 = vmul.f32 1.0, %v894
      %v896 = vrcp.pop %v833
      %v897 = vmul.f32 1.0, %v896
      %v898 = vmul.f32 %v580, %v835
      %v899 = vmul.f32 %v583, %v837
      %v900 = vmul.f32 %v588, %v839
      %v901 = vmul.f32 %v591, %v841
      %v902 = vmul.f32 %v596, %v843
      %v903 = vmul.f32 %v599, %v845
      %v904 = vmul.f32 %v604, %v847
      %v905 = vmul.f32 %v607, %v849
      %v906 = vmul.f32 %v612, %v851
      %v907 = vmul.f32 %v615, %v853
      %v908 = vmul.f32 %v620, %v855
      %v909 = vmul.f32 %v623, %v857
      %v910 = vmul.f32 %v628, %v859
      %v911 = vmul.f32 %v631, %v861
      %v912 = vmul.f32 %v636, %v863
      %v913 = vmul.f32 %v639, %v865
      %v914 = vmul.f32 %v644, %v867
      %v915 = vmul.f32 %v647, %v869
      %v916 = vmul.f32 %v652, %v871
      %v917 = vmul.f32 %v655, %v873
      %v918 = vmul.f32 %v660, %v875
      %v919 = vmul.f32 %v663, %v877
      %v920 = vmul.f32 %v668, %v879
      %v921 = vmul.f32 %v671, %v881
      %v922 = vmul.f32 %v676, %v883
      %v923 = vmul.f32 %v679, %v885
      %v924 = vmul.f32 %v684, %v887
      %v925 = vmul.f32 %v687, %v889
      %v926 = vmul.f32 %v692, %v891
      %v927 = vmul.f32 %v695, %v893
      %v928 = vmul.f32 %v700, %v895
      %v929 = vmul.f32 %v703, %v897
      %930 = vst.msk [vmem:[%s399 + $0x1] sm:$0xff] %vm390, %v898
      %931 = vst.msk [vmem:[%s399 + $0x9] sm:$0xff] %vm390, %v899
      %932 = vst.msk [vmem:[%s399 + $0x19] sm:$0xff] %vm390, %v900
      %933 = vst.msk [vmem:[%s399 + $0x21] sm:$0xff] %vm390, %v901
      %934 = vst.msk [vmem:[%s399 + $0x31] sm:$0xff] %vm390, %v902
      %935 = vst.msk [vmem:[%s399 + $0x39] sm:$0xff] %vm390, %v903
      %936 = vst.msk [vmem:[%s399 + $0x49] sm:$0xff] %vm390, %v904
      %937 = vst.msk [vmem:[%s399 + $0x51] sm:$0xff] %vm390, %v905
      %938 = vst.msk [vmem:[%s399 + $0x61] sm:$0xff] %vm390, %v906
      %939 = vst.msk [vmem:[%s399 + $0x69] sm:$0xff] %vm390, %v907
      %940 = vst.msk [vmem:[%s399 + $0x79] sm:$0xff] %vm390, %v908
      %941 = vst.msk [vmem:[%s399 + $0x81] sm:$0xff] %vm390, %v909
      %942 = vst.msk [vmem:[%s399 + $0x91] sm:$0xff] %vm390, %v910
      %943 = vst.msk [vmem:[%s399 + $0x99] sm:$0xff] %vm390, %v911
      %944 = vst.msk [vmem:[%s399 + $0xa9] sm:$0xff] %vm390, %v912
      %945 = vst.msk [vmem:[%s399 + $0xb1] sm:$0xff] %vm390, %v913
      %946 = vst.msk [vmem:[%s399 + $0xc1] sm:$0xff] %vm390, %v914
      %947 = vst.msk [vmem:[%s399 + $0xc9] sm:$0xff] %vm390, %v915
      %948 = vst.msk [vmem:[%s399 + $0xd9] sm:$0xff] %vm390, %v916
      %949 = vst.msk [vmem:[%s399 + $0xe1] sm:$0xff] %vm390, %v917
      %950 = vst.msk [vmem:[%s399 + $0xf1] sm:$0xff] %vm390, %v918
      %951 = vst.msk [vmem:[%s399 + $0xf9] sm:$0xff] %vm390, %v919
      %952 = vst.msk [vmem:[%s399 + $0x109] sm:$0xff] %vm390, %v920
      %953 = vst.msk [vmem:[%s399 + $0x111] sm:$0xff] %vm390, %v921
      %954 = vst.msk [vmem:[%s399 + $0x121] sm:$0xff] %vm390, %v922
      %955 = vst.msk [vmem:[%s399 + $0x129] sm:$0xff] %vm390, %v923
      %956 = vst.msk [vmem:[%s399 + $0x139] sm:$0xff] %vm390, %v924
      %957 = vst.msk [vmem:[%s399 + $0x141] sm:$0xff] %vm390, %v925
      %958 = vst.msk [vmem:[%s399 + $0x151] sm:$0xff] %vm390, %v926
      %959 = vst.msk [vmem:[%s399 + $0x159] sm:$0xff] %vm390, %v927
      %960 = vst.msk [vmem:[%s399 + $0x169] sm:$0xff] %vm390, %v928
      %961 = vst.msk [vmem:[%s399 + $0x171] sm:$0xff] %vm390, %v929
      %v962 = vld [vmem:[%s3] sm:$0xff]
      %v963 = vld [vmem:[%s3 + $0x8] sm:$0x1]
      %v964 = vld [vmem:[#allocation2] sm:$0xff]
      %v965 = vld [vmem:[#allocation2 + $0x8] sm:$0xff]
      %v966 = vld [vmem:[#allocation2 + $0x18] sm:$0xff]
      %v967 = vld [vmem:[#allocation2 + $0x20] sm:$0xff]
      %v968 = vld [vmem:[#allocation2 + $0x30] sm:$0xff]
      %v969 = vld [vmem:[#allocation2 + $0x38] sm:$0xff]
      %v970 = vld [vmem:[#allocation2 + $0x48] sm:$0xff]
      %v971 = vld [vmem:[#allocation2 + $0x50] sm:$0xff]
      %v972 = vld [vmem:[#allocation2 + $0x60] sm:$0xff]
      %v973 = vld [vmem:[#allocation2 + $0x68] sm:$0xff]
      %v974 = vld [vmem:[#allocation2 + $0x78] sm:$0xff]
      %v975 = vld [vmem:[#allocation2 + $0x80] sm:$0xff]
      %v976 = vld [vmem:[#allocation2 + $0x90] sm:$0xff]
      %v977 = vld [vmem:[#allocation2 + $0x98] sm:$0xff]
      %v978 = vld [vmem:[#allocation2 + $0xa8] sm:$0xff]
      %v979 = vld [vmem:[#allocation2 + $0xb0] sm:$0xff]
      %v980 = vld [vmem:[#allocation2 + $0xc0] sm:$0xff]
      %v981 = vld [vmem:[#allocation2 + $0xc8] sm:$0xff]
      %v982 = vld [vmem:[#allocation2 + $0xd8] sm:$0xff]
      %v983 = vld [vmem:[#allocation2 + $0xe0] sm:$0xff]
      %v984 = vld [vmem:[#allocation2 + $0xf0] sm:$0xff]
      %v985 = vld [vmem:[#allocation2 + $0xf8] sm:$0xff]
      %v986 = vld [vmem:[#allocation2 + $0x108] sm:$0xff]
      %v987 = vld [vmem:[#allocation2 + $0x110] sm:$0xff]
      %v988 = vld [vmem:[#allocation2 + $0x120] sm:$0xff]
      %v989 = vld [vmem:[#allocation2 + $0x128] sm:$0xff]
      %v990 = vld [vmem:[#allocation2 + $0x138] sm:$0xff]
      %v991 = vld [vmem:[#allocation2 + $0x140] sm:$0xff]
      %v992 = vld [vmem:[#allocation2 + $0x150] sm:$0xff]
      %v993 = vld [vmem:[#allocation2 + $0x158] sm:$0xff]
      %v994 = vld [vmem:[#allocation2 + $0x168] sm:$0xff]
      %v995 = vld [vmem:[#allocation2 + $0x170] sm:$0xff]
      %v996 = vlaneseq
      %v997 = vshrl.u32 %v996, 7
      %v998 = vsub.s32 0, %v997
      %v999 = vrot.slane %v962, %v998
      %v1000 = vmul.f32 %v964, %v999
      %v1001 = vmul.f32 %v965, %v999
      %v1002 = vmul.f32 %v966, %v999
      %v1003 = vmul.f32 %v967, %v999
      %v1004 = vmul.f32 %v968, %v999
      %v1005 = vmul.f32 %v969, %v999
      %v1006 = vmul.f32 %v970, %v999
      %v1007 = vmul.f32 %v971, %v999
      %v1008 = vmul.f32 %v972, %v999
      %v1009 = vmul.f32 %v973, %v999
      %v1010 = vmul.f32 %v974, %v999
      %v1011 = vmul.f32 %v975, %v999
      %v1012 = vmul.f32 %v976, %v999
      %v1013 = vmul.f32 %v977, %v999
      %v1014 = vmul.f32 %v978, %v999
      %v1015 = vmul.f32 %v979, %v999
      %v1016 = vmul.f32 %v980, %v999
      %v1017 = vmul.f32 %v981, %v999
      %v1018 = vmul.f32 %v982, %v999
      %v1019 = vmul.f32 %v983, %v999
      %v1020 = vmul.f32 %v984, %v999
      %v1021 = vmul.f32 %v985, %v999
      %v1022 = vmul.f32 %v986, %v999
      %v1023 = vmul.f32 %v987, %v999
      %v1024 = vmul.f32 %v988, %v999
      %v1025 = vmul.f32 %v989, %v999
      %v1026 = vmul.f32 %v990, %v999
      %v1027 = vmul.f32 %v991, %v999
      %v1028 = vmul.f32 %v992, %v999
      %v1029 = vmul.f32 %v993, %v999
      %v1030 = vmul.f32 %v994, %v999
      %v1031 = vmul.f32 %v995, %v999
      %v1032 = vld [vmem:[#allocation2 + $0x1] sm:$0xff]
      %v1033 = vld [vmem:[#allocation2 + $0x9] sm:$0xff]
      %v1034 = vld [vmem:[#allocation2 + $0x19] sm:$0xff]
      %v1035 = vld [vmem:[#allocation2 + $0x21] sm:$0xff]
      %v1036 = vld [vmem:[#allocation2 + $0x31] sm:$0xff]
      %v1037 = vld [vmem:[#allocation2 + $0x39] sm:$0xff]
      %v1038 = vld [vmem:[#allocation2 + $0x49] sm:$0xff]
      %v1039 = vld [vmem:[#allocation2 + $0x51] sm:$0xff]
      %v1040 = vld [vmem:[#allocation2 + $0x61] sm:$0xff]
      %v1041 = vld [vmem:[#allocation2 + $0x69] sm:$0xff]
      %v1042 = vld [vmem:[#allocation2 + $0x79] sm:$0xff]
      %v1043 = vld [vmem:[#allocation2 + $0x81] sm:$0xff]
      %v1044 = vld [vmem:[#allocation2 + $0x91] sm:$0xff]
      %v1045 = vld [vmem:[#allocation2 + $0x99] sm:$0xff]
      %v1046 = vld [vmem:[#allocation2 + $0xa9] sm:$0xff]
      %v1047 = vld [vmem:[#allocation2 + $0xb1] sm:$0xff]
      %v1048 = vld [vmem:[#allocation2 + $0xc1] sm:$0xff]
      %v1049 = vld [vmem:[#allocation2 + $0xc9] sm:$0xff]
      %v1050 = vld [vmem:[#allocation2 + $0xd9] sm:$0xff]
      %v1051 = vld [vmem:[#allocation2 + $0xe1] sm:$0xff]
      %v1052 = vld [vmem:[#allocation2 + $0xf1] sm:$0xff]
      %v1053 = vld [vmem:[#allocation2 + $0xf9] sm:$0xff]
      %v1054 = vld [vmem:[#allocation2 + $0x109] sm:$0xff]
      %v1055 = vld [vmem:[#allocation2 + $0x111] sm:$0xff]
      %v1056 = vld [vmem:[#allocation2 + $0x121] sm:$0xff]
      %v1057 = vld [vmem:[#allocation2 + $0x129] sm:$0xff]
      %v1058 = vld [vmem:[#allocation2 + $0x139] sm:$0xff]
      %v1059 = vld [vmem:[#allocation2 + $0x141] sm:$0xff]
      %v1060 = vld [vmem:[#allocation2 + $0x151] sm:$0xff]
      %v1061 = vld [vmem:[#allocation2 + $0x159] sm:$0xff]
      %v1062 = vld [vmem:[#allocation2 + $0x169] sm:$0xff]
      %v1063 = vld [vmem:[#allocation2 + $0x171] sm:$0xff]
      %v1064 = vlaneseq
      %v1065 = vshrl.u32 %v1064, 7
      %v1066 = vsub.s32 1, %v1065
      %v1067 = vrot.slane %v962, %v1066
      %v1068 = vmul.f32 %v1032, %v1067
      %v1069 = vmul.f32 %v1033, %v1067
      %v1070 = vmul.f32 %v1034, %v1067
      %v1071 = vmul.f32 %v1035, %v1067
      %v1072 = vmul.f32 %v1036, %v1067
      %v1073 = vmul.f32 %v1037, %v1067
      %v1074 = vmul.f32 %v1038, %v1067
      %v1075 = vmul.f32 %v1039, %v1067
      %v1076 = vmul.f32 %v1040, %v1067
      %v1077 = vmul.f32 %v1041, %v1067
      %v1078 = vmul.f32 %v1042, %v1067
      %v1079 = vmul.f32 %v1043, %v1067
      %v1080 = vmul.f32 %v1044, %v1067
      %v1081 = vmul.f32 %v1045, %v1067
      %v1082 = vmul.f32 %v1046, %v1067
      %v1083 = vmul.f32 %v1047, %v1067
      %v1084 = vmul.f32 %v1048, %v1067
      %v1085 = vmul.f32 %v1049, %v1067
      %v1086 = vmul.f32 %v1050, %v1067
      %v1087 = vmul.f32 %v1051, %v1067
      %v1088 = vmul.f32 %v1052, %v1067
      %v1089 = vmul.f32 %v1053, %v1067
      %v1090 = vmul.f32 %v1054, %v1067
      %v1091 = vmul.f32 %v1055, %v1067
      %v1092 = vmul.f32 %v1056, %v1067
      %v1093 = vmul.f32 %v1057, %v1067
      %v1094 = vmul.f32 %v1058, %v1067
      %v1095 = vmul.f32 %v1059, %v1067
      %v1096 = vmul.f32 %v1060, %v1067
      %v1097 = vmul.f32 %v1061, %v1067
      %v1098 = vmul.f32 %v1062, %v1067
      %v1099 = vmul.f32 %v1063, %v1067
      %v1100 = vadd.f32 %v1000, %v1068
      %v1101 = vadd.f32 %v1001, %v1069
      %v1102 = vadd.f32 %v1002, %v1070
      %v1103 = vadd.f32 %v1003, %v1071
      %v1104 = vadd.f32 %v1004, %v1072
      %v1105 = vadd.f32 %v1005, %v1073
      %v1106 = vadd.f32 %v1006, %v1074
      %v1107 = vadd.f32 %v1007, %v1075
      %v1108 = vadd.f32 %v1008, %v1076
      %v1109 = vadd.f32 %v1009, %v1077
      %v1110 = vadd.f32 %v1010, %v1078
      %v1111 = vadd.f32 %v1011, %v1079
      %v1112 = vadd.f32 %v1012, %v1080
      %v1113 = vadd.f32 %v1013, %v1081
      %v1114 = vadd.f32 %v1014, %v1082
      %v1115 = vadd.f32 %v1015, %v1083
      %v1116 = vadd.f32 %v1016, %v1084
      %v1117 = vadd.f32 %v1017, %v1085
      %v1118 = vadd.f32 %v1018, %v1086
      %v1119 = vadd.f32 %v1019, %v1087
      %v1120 = vadd.f32 %v1020, %v1088
      %v1121 = vadd.f32 %v1021, %v1089
      %v1122 = vadd.f32 %v1022, %v1090
      %v1123 = vadd.f32 %v1023, %v1091
      %v1124 = vadd.f32 %v1024, %v1092
      %v1125 = vadd.f32 %v1025, %v1093
      %v1126 = vadd.f32 %v1026, %v1094
      %v1127 = vadd.f32 %v1027, %v1095
      %v1128 = vadd.f32 %v1028, %v1096
      %v1129 = vadd.f32 %v1029, %v1097
      %v1130 = vadd.f32 %v1030, %v1098
      %v1131 = vadd.f32 %v1031, %v1099
      %v1132 = vld [vmem:[#allocation2 + $0x2] sm:$0xff]
      %v1133 = vld [vmem:[#allocation2 + $0xa] sm:$0xff]
      %v1134 = vld [vmem:[#allocation2 + $0x1a] sm:$0xff]
      %v1135 = vld [vmem:[#allocation2 + $0x22] sm:$0xff]
      %v1136 = vld [vmem:[#allocation2 + $0x32] sm:$0xff]
      %v1137 = vld [vmem:[#allocation2 + $0x3a] sm:$0xff]
      %v1138 = vld [vmem:[#allocation2 + $0x4a] sm:$0xff]
      %v1139 = vld [vmem:[#allocation2 + $0x52] sm:$0xff]
      %v1140 = vld [vmem:[#allocation2 + $0x62] sm:$0xff]
      %v1141 = vld [vmem:[#allocation2 + $0x6a] sm:$0xff]
      %v1142 = vld [vmem:[#allocation2 + $0x7a] sm:$0xff]
      %v1143 = vld [vmem:[#allocation2 + $0x82] sm:$0xff]
      %v1144 = vld [vmem:[#allocation2 + $0x92] sm:$0xff]
      %v1145 = vld [vmem:[#allocation2 + $0x9a] sm:$0xff]
      %v1146 = vld [vmem:[#allocation2 + $0xaa] sm:$0xff]
      %v1147 = vld [vmem:[#allocation2 + $0xb2] sm:$0xff]
      %v1148 = vld [vmem:[#allocation2 + $0xc2] sm:$0xff]
      %v1149 = vld [vmem:[#allocation2 + $0xca] sm:$0xff]
      %v1150 = vld [vmem:[#allocation2 + $0xda] sm:$0xff]
      %v1151 = vld [vmem:[#allocation2 + $0xe2] sm:$0xff]
      %v1152 = vld [vmem:[#allocation2 + $0xf2] sm:$0xff]
      %v1153 = vld [vmem:[#allocation2 + $0xfa] sm:$0xff]
      %v1154 = vld [vmem:[#allocation2 + $0x10a] sm:$0xff]
      %v1155 = vld [vmem:[#allocation2 + $0x112] sm:$0xff]
      %v1156 = vld [vmem:[#allocation2 + $0x122] sm:$0xff]
      %v1157 = vld [vmem:[#allocation2 + $0x12a] sm:$0xff]
      %v1158 = vld [vmem:[#allocation2 + $0x13a] sm:$0xff]
      %v1159 = vld [vmem:[#allocation2 + $0x142] sm:$0xff]
      %v1160 = vld [vmem:[#allocation2 + $0x152] sm:$0xff]
      %v1161 = vld [vmem:[#allocation2 + $0x15a] sm:$0xff]
      %v1162 = vld [vmem:[#allocation2 + $0x16a] sm:$0xff]
      %v1163 = vld [vmem:[#allocation2 + $0x172] sm:$0xff]
      %v1164 = vlaneseq
      %v1165 = vshrl.u32 %v1164, 7
      %v1166 = vsub.s32 2, %v1165
      %v1167 = vrot.slane %v962, %v1166
      %v1168 = vmul.f32 %v1132, %v1167
      %v1169 = vmul.f32 %v1133, %v1167
      %v1170 = vmul.f32 %v1134, %v1167
      %v1171 = vmul.f32 %v1135, %v1167
      %v1172 = vmul.f32 %v1136, %v1167
      %v1173 = vmul.f32 %v1137, %v1167
      %v1174 = vmul.f32 %v1138, %v1167
      %v1175 = vmul.f32 %v1139, %v1167
      %v1176 = vmul.f32 %v1140, %v1167
      %v1177 = vmul.f32 %v1141, %v1167
      %v1178 = vmul.f32 %v1142, %v1167
      %v1179 = vmul.f32 %v1143, %v1167
      %v1180 = vmul.f32 %v1144, %v1167
      %v1181 = vmul.f32 %v1145, %v1167
      %v1182 = vmul.f32 %v1146, %v1167
      %v1183 = vmul.f32 %v1147, %v1167
      %v1184 = vmul.f32 %v1148, %v1167
      %v1185 = vmul.f32 %v1149, %v1167
      %v1186 = vmul.f32 %v1150, %v1167
      %v1187 = vmul.f32 %v1151, %v1167
      %v1188 = vmul.f32 %v1152, %v1167
      %v1189 = vmul.f32 %v1153, %v1167
      %v1190 = vmul.f32 %v1154, %v1167
      %v1191 = vmul.f32 %v1155, %v1167
      %v1192 = vmul.f32 %v1156, %v1167
      %v1193 = vmul.f32 %v1157, %v1167
      %v1194 = vmul.f32 %v1158, %v1167
      %v1195 = vmul.f32 %v1159, %v1167
      %v1196 = vmul.f32 %v1160, %v1167
      %v1197 = vmul.f32 %v1161, %v1167
      %v1198 = vmul.f32 %v1162, %v1167
      %v1199 = vmul.f32 %v1163, %v1167
      %v1200 = vadd.f32 %v1100, %v1168
      %v1201 = vadd.f32 %v1101, %v1169
      %v1202 = vadd.f32 %v1102, %v1170
      %v1203 = vadd.f32 %v1103, %v1171
      %v1204 = vadd.f32 %v1104, %v1172
      %v1205 = vadd.f32 %v1105, %v1173
      %v1206 = vadd.f32 %v1106, %v1174
      %v1207 = vadd.f32 %v1107, %v1175
      %v1208 = vadd.f32 %v1108, %v1176
      %v1209 = vadd.f32 %v1109, %v1177
      %v1210 = vadd.f32 %v1110, %v1178
      %v1211 = vadd.f32 %v1111, %v1179
      %v1212 = vadd.f32 %v1112, %v1180
      %v1213 = vadd.f32 %v1113, %v1181
      %v1214 = vadd.f32 %v1114, %v1182
      %v1215 = vadd.f32 %v1115, %v1183
      %v1216 = vadd.f32 %v1116, %v1184
      %v1217 = vadd.f32 %v1117, %v1185
      %v1218 = vadd.f32 %v1118, %v1186
      %v1219 = vadd.f32 %v1119, %v1187
      %v1220 = vadd.f32 %v1120, %v1188
      %v1221 = vadd.f32 %v1121, %v1189
      %v1222 = vadd.f32 %v1122, %v1190
      %v1223 = vadd.f32 %v1123, %v1191
      %v1224 = vadd.f32 %v1124, %v1192
      %v1225 = vadd.f32 %v1125, %v1193
      %v1226 = vadd.f32 %v1126, %v1194
      %v1227 = vadd.f32 %v1127, %v1195
      %v1228 = vadd.f32 %v1128, %v1196
      %v1229 = vadd.f32 %v1129, %v1197
      %v1230 = vadd.f32 %v1130, %v1198
      %v1231 = vadd.f32 %v1131, %v1199
      %v1232 = vld [vmem:[%s399] sm:$0xff]
      %v1233 = vld [vmem:[%s399 + $0x8] sm:$0xff]
      %v1234 = vld [vmem:[%s399 + $0x18] sm:$0xff]
      %v1235 = vld [vmem:[%s399 + $0x20] sm:$0xff]
      %v1236 = vld [vmem:[%s399 + $0x30] sm:$0xff]
      %v1237 = vld [vmem:[%s399 + $0x38] sm:$0xff]
      %v1238 = vld [vmem:[%s399 + $0x48] sm:$0xff]
      %v1239 = vld [vmem:[%s399 + $0x50] sm:$0xff]
      %v1240 = vld [vmem:[%s399 + $0x60] sm:$0xff]
      %v1241 = vld [vmem:[%s399 + $0x68] sm:$0xff]
      %v1242 = vld [vmem:[%s399 + $0x78] sm:$0xff]
      %v1243 = vld [vmem:[%s399 + $0x80] sm:$0xff]
      %v1244 = vld [vmem:[%s399 + $0x90] sm:$0xff]
      %v1245 = vld [vmem:[%s399 + $0x98] sm:$0xff]
      %v1246 = vld [vmem:[%s399 + $0xa8] sm:$0xff]
      %v1247 = vld [vmem:[%s399 + $0xb0] sm:$0xff]
      %v1248 = vld [vmem:[%s399 + $0xc0] sm:$0xff]
      %v1249 = vld [vmem:[%s399 + $0xc8] sm:$0xff]
      %v1250 = vld [vmem:[%s399 + $0xd8] sm:$0xff]
      %v1251 = vld [vmem:[%s399 + $0xe0] sm:$0xff]
      %v1252 = vld [vmem:[%s399 + $0xf0] sm:$0xff]
      %v1253 = vld [vmem:[%s399 + $0xf8] sm:$0xff]
      %v1254 = vld [vmem:[%s399 + $0x108] sm:$0xff]
      %v1255 = vld [vmem:[%s399 + $0x110] sm:$0xff]
      %v1256 = vld [vmem:[%s399 + $0x120] sm:$0xff]
      %v1257 = vld [vmem:[%s399 + $0x128] sm:$0xff]
      %v1258 = vld [vmem:[%s399 + $0x138] sm:$0xff]
      %v1259 = vld [vmem:[%s399 + $0x140] sm:$0xff]
      %v1260 = vld [vmem:[%s399 + $0x150] sm:$0xff]
      %v1261 = vld [vmem:[%s399 + $0x158] sm:$0xff]
      %v1262 = vld [vmem:[%s399 + $0x168] sm:$0xff]
      %v1263 = vld [vmem:[%s399 + $0x170] sm:$0xff]
      %v1264 = vlaneseq
      %v1265 = vshrl.u32 %v1264, 7
      %v1266 = vsub.s32 3, %v1265
      %v1267 = vrot.slane %v962, %v1266
      %v1268 = vmul.f32 %v1232, %v1267
      %v1269 = vmul.f32 %v1233, %v1267
      %v1270 = vmul.f32 %v1234, %v1267
      %v1271 = vmul.f32 %v1235, %v1267
      %v1272 = vmul.f32 %v1236, %v1267
      %v1273 = vmul.f32 %v1237, %v1267
      %v1274 = vmul.f32 %v1238, %v1267
      %v1275 = vmul.f32 %v1239, %v1267
      %v1276 = vmul.f32 %v1240, %v1267
      %v1277 = vmul.f32 %v1241, %v1267
      %v1278 = vmul.f32 %v1242, %v1267
      %v1279 = vmul.f32 %v1243, %v1267
      %v1280 = vmul.f32 %v1244, %v1267
      %v1281 = vmul.f32 %v1245, %v1267
      %v1282 = vmul.f32 %v1246, %v1267
      %v1283 = vmul.f32 %v1247, %v1267
      %v1284 = vmul.f32 %v1248, %v1267
      %v1285 = vmul.f32 %v1249, %v1267
      %v1286 = vmul.f32 %v1250, %v1267
      %v1287 = vmul.f32 %v1251, %v1267
      %v1288 = vmul.f32 %v1252, %v1267
      %v1289 = vmul.f32 %v1253, %v1267
      %v1290 = vmul.f32 %v1254, %v1267
      %v1291 = vmul.f32 %v1255, %v1267
      %v1292 = vmul.f32 %v1256, %v1267
      %v1293 = vmul.f32 %v1257, %v1267
      %v1294 = vmul.f32 %v1258, %v1267
      %v1295 = vmul.f32 %v1259, %v1267
      %v1296 = vmul.f32 %v1260, %v1267
      %v1297 = vmul.f32 %v1261, %v1267
      %v1298 = vmul.f32 %v1262, %v1267
      %v1299 = vmul.f32 %v1263, %v1267
      %v1300 = vadd.f32 %v1200, %v1268
      %v1301 = vadd.f32 %v1201, %v1269
      %v1302 = vadd.f32 %v1202, %v1270
      %v1303 = vadd.f32 %v1203, %v1271
      %v1304 = vadd.f32 %v1204, %v1272
      %v1305 = vadd.f32 %v1205, %v1273
      %v1306 = vadd.f32 %v1206, %v1274
      %v1307 = vadd.f32 %v1207, %v1275
      %v1308 = vadd.f32 %v1208, %v1276
      %v1309 = vadd.f32 %v1209, %v1277
      %v1310 = vadd.f32 %v1210, %v1278
      %v1311 = vadd.f32 %v1211, %v1279
      %v1312 = vadd.f32 %v1212, %v1280
      %v1313 = vadd.f32 %v1213, %v1281
      %v1314 = vadd.f32 %v1214, %v1282
      %v1315 = vadd.f32 %v1215, %v1283
      %v1316 = vadd.f32 %v1216, %v1284
      %v1317 = vadd.f32 %v1217, %v1285
      %v1318 = vadd.f32 %v1218, %v1286
      %v1319 = vadd.f32 %v1219, %v1287
      %v1320 = vadd.f32 %v1220, %v1288
      %v1321 = vadd.f32 %v1221, %v1289
      %v1322 = vadd.f32 %v1222, %v1290
      %v1323 = vadd.f32 %v1223, %v1291
      %v1324 = vadd.f32 %v1224, %v1292
      %v1325 = vadd.f32 %v1225, %v1293
      %v1326 = vadd.f32 %v1226, %v1294
      %v1327 = vadd.f32 %v1227, %v1295
      %v1328 = vadd.f32 %v1228, %v1296
      %v1329 = vadd.f32 %v1229, %v1297
      %v1330 = vadd.f32 %v1230, %v1298
      %v1331 = vadd.f32 %v1231, %v1299
      %v1332 = vld [vmem:[%s399 + $0x1] sm:$0xff]
      %v1333 = vld [vmem:[%s399 + $0x9] sm:$0xff]
      %v1334 = vld [vmem:[%s399 + $0x19] sm:$0xff]
      %v1335 = vld [vmem:[%s399 + $0x21] sm:$0xff]
      %v1336 = vld [vmem:[%s399 + $0x31] sm:$0xff]
      %v1337 = vld [vmem:[%s399 + $0x39] sm:$0xff]
      %v1338 = vld [vmem:[%s399 + $0x49] sm:$0xff]
      %v1339 = vld [vmem:[%s399 + $0x51] sm:$0xff]
      %v1340 = vld [vmem:[%s399 + $0x61] sm:$0xff]
      %v1341 = vld [vmem:[%s399 + $0x69] sm:$0xff]
      %v1342 = vld [vmem:[%s399 + $0x79] sm:$0xff]
      %v1343 = vld [vmem:[%s399 + $0x81] sm:$0xff]
      %v1344 = vld [vmem:[%s399 + $0x91] sm:$0xff]
      %v1345 = vld [vmem:[%s399 + $0x99] sm:$0xff]
      %v1346 = vld [vmem:[%s399 + $0xa9] sm:$0xff]
      %v1347 = vld [vmem:[%s399 + $0xb1] sm:$0xff]
      %v1348 = vld [vmem:[%s399 + $0xc1] sm:$0xff]
      %v1349 = vld [vmem:[%s399 + $0xc9] sm:$0xff]
      %v1350 = vld [vmem:[%s399 + $0xd9] sm:$0xff]
      %v1351 = vld [vmem:[%s399 + $0xe1] sm:$0xff]
      %v1352 = vld [vmem:[%s399 + $0xf1] sm:$0xff]
      %v1353 = vld [vmem:[%s399 + $0xf9] sm:$0xff]
      %v1354 = vld [vmem:[%s399 + $0x109] sm:$0xff]
      %v1355 = vld [vmem:[%s399 + $0x111] sm:$0xff]
      %v1356 = vld [vmem:[%s399 + $0x121] sm:$0xff]
      %v1357 = vld [vmem:[%s399 + $0x129] sm:$0xff]
      %v1358 = vld [vmem:[%s399 + $0x139] sm:$0xff]
      %v1359 = vld [vmem:[%s399 + $0x141] sm:$0xff]
      %v1360 = vld [vmem:[%s399 + $0x151] sm:$0xff]
      %v1361 = vld [vmem:[%s399 + $0x159] sm:$0xff]
      %v1362 = vld [vmem:[%s399 + $0x169] sm:$0xff]
      %v1363 = vld [vmem:[%s399 + $0x171] sm:$0xff]
      %v1364 = vlaneseq
      %v1365 = vshrl.u32 %v1364, 7
      %v1366 = vsub.s32 4, %v1365
      %v1367 = vrot.slane %v962, %v1366
      %v1368 = vmul.f32 %v1332, %v1367
      %v1369 = vmul.f32 %v1333, %v1367
      %v1370 = vmul.f32 %v1334, %v1367
      %v1371 = vmul.f32 %v1335, %v1367
      %v1372 = vmul.f32 %v1336, %v1367
      %v1373 = vmul.f32 %v1337, %v1367
      %v1374 = vmul.f32 %v1338, %v1367
      %v1375 = vmul.f32 %v1339, %v1367
      %v1376 = vmul.f32 %v1340, %v1367
      %v1377 = vmul.f32 %v1341, %v1367
      %v1378 = vmul.f32 %v1342, %v1367
      %v1379 = vmul.f32 %v1343, %v1367
      %v1380 = vmul.f32 %v1344, %v1367
      %v1381 = vmul.f32 %v1345, %v1367
      %v1382 = vmul.f32 %v1346, %v1367
      %v1383 = vmul.f32 %v1347, %v1367
      %v1384 = vmul.f32 %v1348, %v1367
      %v1385 = vmul.f32 %v1349, %v1367
      %v1386 = vmul.f32 %v1350, %v1367
      %v1387 = vmul.f32 %v1351, %v1367
      %v1388 = vmul.f32 %v1352, %v1367
      %v1389 = vmul.f32 %v1353, %v1367
      %v1390 = vmul.f32 %v1354, %v1367
      %v1391 = vmul.f32 %v1355, %v1367
      %v1392 = vmul.f32 %v1356, %v1367
      %v1393 = vmul.f32 %v1357, %v1367
      %v1394 = vmul.f32 %v1358, %v1367
      %v1395 = vmul.f32 %v1359, %v1367
      %v1396 = vmul.f32 %v1360, %v1367
      %v1397 = vmul.f32 %v1361, %v1367
      %v1398 = vmul.f32 %v1362, %v1367
      %v1399 = vmul.f32 %v1363, %v1367
      %v1400 = vadd.f32 %v1300, %v1368
      %v1401 = vadd.f32 %v1301, %v1369
      %v1402 = vadd.f32 %v1302, %v1370
      %v1403 = vadd.f32 %v1303, %v1371
      %v1404 = vadd.f32 %v1304, %v1372
      %v1405 = vadd.f32 %v1305, %v1373
      %v1406 = vadd.f32 %v1306, %v1374
      %v1407 = vadd.f32 %v1307, %v1375
      %v1408 = vadd.f32 %v1308, %v1376
      %v1409 = vadd.f32 %v1309, %v1377
      %v1410 = vadd.f32 %v1310, %v1378
      %v1411 = vadd.f32 %v1311, %v1379
      %v1412 = vadd.f32 %v1312, %v1380
      %v1413 = vadd.f32 %v1313, %v1381
      %v1414 = vadd.f32 %v1314, %v1382
      %v1415 = vadd.f32 %v1315, %v1383
      %v1416 = vadd.f32 %v1316, %v1384
      %v1417 = vadd.f32 %v1317, %v1385
      %v1418 = vadd.f32 %v1318, %v1386
      %v1419 = vadd.f32 %v1319, %v1387
      %v1420 = vadd.f32 %v1320, %v1388
      %v1421 = vadd.f32 %v1321, %v1389
      %v1422 = vadd.f32 %v1322, %v1390
      %v1423 = vadd.f32 %v1323, %v1391
      %v1424 = vadd.f32 %v1324, %v1392
      %v1425 = vadd.f32 %v1325, %v1393
      %v1426 = vadd.f32 %v1326, %v1394
      %v1427 = vadd.f32 %v1327, %v1395
      %v1428 = vadd.f32 %v1328, %v1396
      %v1429 = vadd.f32 %v1329, %v1397
      %v1430 = vadd.f32 %v1330, %v1398
      %v1431 = vadd.f32 %v1331, %v1399
      %v1432 = vld [vmem:[%s399 + $0x2] sm:$0xff]
      %v1433 = vld [vmem:[%s399 + $0xa] sm:$0xff]
      %v1434 = vld [vmem:[%s399 + $0x1a] sm:$0xff]
      %v1435 = vld [vmem:[%s399 + $0x22] sm:$0xff]
      %v1436 = vld [vmem:[%s399 + $0x32] sm:$0xff]
      %v1437 = vld [vmem:[%s399 + $0x3a] sm:$0xff]
      %v1438 = vld [vmem:[%s399 + $0x4a] sm:$0xff]
      %v1439 = vld [vmem:[%s399 + $0x52] sm:$0xff]
      %v1440 = vld [vmem:[%s399 + $0x62] sm:$0xff]
      %v1441 = vld [vmem:[%s399 + $0x6a] sm:$0xff]
      %v1442 = vld [vmem:[%s399 + $0x7a] sm:$0xff]
      %v1443 = vld [vmem:[%s399 + $0x82] sm:$0xff]
      %v1444 = vld [vmem:[%s399 + $0x92] sm:$0xff]
      %v1445 = vld [vmem:[%s399 + $0x9a] sm:$0xff]
      %v1446 = vld [vmem:[%s399 + $0xaa] sm:$0xff]
      %v1447 = vld [vmem:[%s399 + $0xb2] sm:$0xff]
      %v1448 = vld [vmem:[%s399 + $0xc2] sm:$0xff]
      %v1449 = vld [vmem:[%s399 + $0xca] sm:$0xff]
      %v1450 = vld [vmem:[%s399 + $0xda] sm:$0xff]
      %v1451 = vld [vmem:[%s399 + $0xe2] sm:$0xff]
      %v1452 = vld [vmem:[%s399 + $0xf2] sm:$0xff]
      %v1453 = vld [vmem:[%s399 + $0xfa] sm:$0xff]
      %v1454 = vld [vmem:[%s399 + $0x10a] sm:$0xff]
      %v1455 = vld [vmem:[%s399 + $0x112] sm:$0xff]
      %v1456 = vld [vmem:[%s399 + $0x122] sm:$0xff]
      %v1457 = vld [vmem:[%s399 + $0x12a] sm:$0xff]
      %v1458 = vld [vmem:[%s399 + $0x13a] sm:$0xff]
      %v1459 = vld [vmem:[%s399 + $0x142] sm:$0xff]
      %v1460 = vld [vmem:[%s399 + $0x152] sm:$0xff]
      %v1461 = vld [vmem:[%s399 + $0x15a] sm:$0xff]
      %v1462 = vld [vmem:[%s399 + $0x16a] sm:$0xff]
      %v1463 = vld [vmem:[%s399 + $0x172] sm:$0xff]
      %v1464 = vlaneseq
      %v1465 = vshrl.u32 %v1464, 7
      %v1466 = vsub.s32 5, %v1465
      %v1467 = vrot.slane %v962, %v1466
      %v1468 = vmul.f32 %v1432, %v1467
      %v1469 = vmul.f32 %v1433, %v1467
      %v1470 = vmul.f32 %v1434, %v1467
      %v1471 = vmul.f32 %v1435, %v1467
      %v1472 = vmul.f32 %v1436, %v1467
      %v1473 = vmul.f32 %v1437, %v1467
      %v1474 = vmul.f32 %v1438, %v1467
      %v1475 = vmul.f32 %v1439, %v1467
      %v1476 = vmul.f32 %v1440, %v1467
      %v1477 = vmul.f32 %v1441, %v1467
      %v1478 = vmul.f32 %v1442, %v1467
      %v1479 = vmul.f32 %v1443, %v1467
      %v1480 = vmul.f32 %v1444, %v1467
      %v1481 = vmul.f32 %v1445, %v1467
      %v1482 = vmul.f32 %v1446, %v1467
      %v1483 = vmul.f32 %v1447, %v1467
      %v1484 = vmul.f32 %v1448, %v1467
      %v1485 = vmul.f32 %v1449, %v1467
      %v1486 = vmul.f32 %v1450, %v1467
      %v1487 = vmul.f32 %v1451, %v1467
      %v1488 = vmul.f32 %v1452, %v1467
      %v1489 = vmul.f32 %v1453, %v1467
      %v1490 = vmul.f32 %v1454, %v1467
      %v1491 = vmul.f32 %v1455, %v1467
      %v1492 = vmul.f32 %v1456, %v1467
      %v1493 = vmul.f32 %v1457, %v1467
      %v1494 = vmul.f32 %v1458, %v1467
      %v1495 = vmul.f32 %v1459, %v1467
      %v1496 = vmul.f32 %v1460, %v1467
      %v1497 = vmul.f32 %v1461, %v1467
      %v1498 = vmul.f32 %v1462, %v1467
      %v1499 = vmul.f32 %v1463, %v1467
      %v1500 = vadd.f32 %v1400, %v1468
      %v1501 = vadd.f32 %v1401, %v1469
      %v1502 = vadd.f32 %v1402, %v1470
      %v1503 = vadd.f32 %v1403, %v1471
      %v1504 = vadd.f32 %v1404, %v1472
      %v1505 = vadd.f32 %v1405, %v1473
      %v1506 = vadd.f32 %v1406, %v1474
      %v1507 = vadd.f32 %v1407, %v1475
      %v1508 = vadd.f32 %v1408, %v1476
      %v1509 = vadd.f32 %v1409, %v1477
      %v1510 = vadd.f32 %v1410, %v1478
      %v1511 = vadd.f32 %v1411, %v1479
      %v1512 = vadd.f32 %v1412, %v1480
      %v1513 = vadd.f32 %v1413, %v1481
      %v1514 = vadd.f32 %v1414, %v1482
      %v1515 = vadd.f32 %v1415, %v1483
      %v1516 = vadd.f32 %v1416, %v1484
      %v1517 = vadd.f32 %v1417, %v1485
      %v1518 = vadd.f32 %v1418, %v1486
      %v1519 = vadd.f32 %v1419, %v1487
      %v1520 = vadd.f32 %v1420, %v1488
      %v1521 = vadd.f32 %v1421, %v1489
      %v1522 = vadd.f32 %v1422, %v1490
      %v1523 = vadd.f32 %v1423, %v1491
      %v1524 = vadd.f32 %v1424, %v1492
      %v1525 = vadd.f32 %v1425, %v1493
      %v1526 = vadd.f32 %v1426, %v1494
      %v1527 = vadd.f32 %v1427, %v1495
      %v1528 = vadd.f32 %v1428, %v1496
      %v1529 = vadd.f32 %v1429, %v1497
      %v1530 = vadd.f32 %v1430, %v1498
      %v1531 = vadd.f32 %v1431, %v1499
      %s1532 = scalar_lea.vmem [#allocation2], 48
      %v1533 = vld [vmem:[%s1532] sm:$0xff]
      %v1534 = vld [vmem:[%s1532 + $0x8] sm:$0xff]
      %v1535 = vld [vmem:[%s1532 + $0x18] sm:$0xff]
      %v1536 = vld [vmem:[%s1532 + $0x20] sm:$0xff]
      %v1537 = vld [vmem:[%s1532 + $0x30] sm:$0xff]
      %v1538 = vld [vmem:[%s1532 + $0x38] sm:$0xff]
      %v1539 = vld [vmem:[%s1532 + $0x48] sm:$0xff]
      %v1540 = vld [vmem:[%s1532 + $0x50] sm:$0xff]
      %v1541 = vld [vmem:[%s1532 + $0x60] sm:$0xff]
      %v1542 = vld [vmem:[%s1532 + $0x68] sm:$0xff]
      %v1543 = vld [vmem:[%s1532 + $0x78] sm:$0xff]
      %v1544 = vld [vmem:[%s1532 + $0x80] sm:$0xff]
      %v1545 = vld [vmem:[%s1532 + $0x90] sm:$0xff]
      %v1546 = vld [vmem:[%s1532 + $0x98] sm:$0xff]
      %v1547 = vld [vmem:[%s1532 + $0xa8] sm:$0xff]
      %v1548 = vld [vmem:[%s1532 + $0xb0] sm:$0xff]
      %v1549 = vld [vmem:[%s1532 + $0xc0] sm:$0xff]
      %v1550 = vld [vmem:[%s1532 + $0xc8] sm:$0xff]
      %v1551 = vld [vmem:[%s1532 + $0xd8] sm:$0xff]
      %v1552 = vld [vmem:[%s1532 + $0xe0] sm:$0xff]
      %v1553 = vld [vmem:[%s1532 + $0xf0] sm:$0xff]
      %v1554 = vld [vmem:[%s1532 + $0xf8] sm:$0xff]
      %v1555 = vld [vmem:[%s1532 + $0x108] sm:$0xff]
      %v1556 = vld [vmem:[%s1532 + $0x110] sm:$0xff]
      %v1557 = vld [vmem:[%s1532 + $0x120] sm:$0xff]
      %v1558 = vld [vmem:[%s1532 + $0x128] sm:$0xff]
      %v1559 = vld [vmem:[%s1532 + $0x138] sm:$0xff]
      %v1560 = vld [vmem:[%s1532 + $0x140] sm:$0xff]
      %v1561 = vld [vmem:[%s1532 + $0x150] sm:$0xff]
      %v1562 = vld [vmem:[%s1532 + $0x158] sm:$0xff]
      %v1563 = vld [vmem:[%s1532 + $0x168] sm:$0xff]
      %v1564 = vld [vmem:[%s1532 + $0x170] sm:$0xff]
      %v1565 = vlaneseq
      %v1566 = vshrl.u32 %v1565, 7
      %v1567 = vsub.s32 6, %v1566
      %v1568 = vrot.slane %v962, %v1567
      %v1569 = vmul.f32 %v1533, %v1568
      %v1570 = vmul.f32 %v1534, %v1568
      %v1571 = vmul.f32 %v1535, %v1568
      %v1572 = vmul.f32 %v1536, %v1568
      %v1573 = vmul.f32 %v1537, %v1568
      %v1574 = vmul.f32 %v1538, %v1568
      %v1575 = vmul.f32 %v1539, %v1568
      %v1576 = vmul.f32 %v1540, %v1568
      %v1577 = vmul.f32 %v1541, %v1568
      %v1578 = vmul.f32 %v1542, %v1568
      %v1579 = vmul.f32 %v1543, %v1568
      %v1580 = vmul.f32 %v1544, %v1568
      %v1581 = vmul.f32 %v1545, %v1568
      %v1582 = vmul.f32 %v1546, %v1568
      %v1583 = vmul.f32 %v1547, %v1568
      %v1584 = vmul.f32 %v1548, %v1568
      %v1585 = vmul.f32 %v1549, %v1568
      %v1586 = vmul.f32 %v1550, %v1568
      %v1587 = vmul.f32 %v1551, %v1568
      %v1588 = vmul.f32 %v1552, %v1568
      %v1589 = vmul.f32 %v1553, %v1568
      %v1590 = vmul.f32 %v1554, %v1568
      %v1591 = vmul.f32 %v1555, %v1568
      %v1592 = vmul.f32 %v1556, %v1568
      %v1593 = vmul.f32 %v1557, %v1568
      %v1594 = vmul.f32 %v1558, %v1568
      %v1595 = vmul.f32 %v1559, %v1568
      %v1596 = vmul.f32 %v1560, %v1568
      %v1597 = vmul.f32 %v1561, %v1568
      %v1598 = vmul.f32 %v1562, %v1568
      %v1599 = vmul.f32 %v1563, %v1568
      %v1600 = vmul.f32 %v1564, %v1568
      %v1601 = vadd.f32 %v1500, %v1569
      %v1602 = vadd.f32 %v1501, %v1570
      %v1603 = vadd.f32 %v1502, %v1571
      %v1604 = vadd.f32 %v1503, %v1572
      %v1605 = vadd.f32 %v1504, %v1573
      %v1606 = vadd.f32 %v1505, %v1574
      %v1607 = vadd.f32 %v1506, %v1575
      %v1608 = vadd.f32 %v1507, %v1576
      %v1609 = vadd.f32 %v1508, %v1577
      %v1610 = vadd.f32 %v1509, %v1578
      %v1611 = vadd.f32 %v1510, %v1579
      %v1612 = vadd.f32 %v1511, %v1580
      %v1613 = vadd.f32 %v1512, %v1581
      %v1614 = vadd.f32 %v1513, %v1582
      %v1615 = vadd.f32 %v1514, %v1583
      %v1616 = vadd.f32 %v1515, %v1584
      %v1617 = vadd.f32 %v1516, %v1585
      %v1618 = vadd.f32 %v1517, %v1586
      %v1619 = vadd.f32 %v1518, %v1587
      %v1620 = vadd.f32 %v1519, %v1588
      %v1621 = vadd.f32 %v1520, %v1589
      %v1622 = vadd.f32 %v1521, %v1590
      %v1623 = vadd.f32 %v1522, %v1591
      %v1624 = vadd.f32 %v1523, %v1592
      %v1625 = vadd.f32 %v1524, %v1593
      %v1626 = vadd.f32 %v1525, %v1594
      %v1627 = vadd.f32 %v1526, %v1595
      %v1628 = vadd.f32 %v1527, %v1596
      %v1629 = vadd.f32 %v1528, %v1597
      %v1630 = vadd.f32 %v1529, %v1598
      %v1631 = vadd.f32 %v1530, %v1599
      %v1632 = vadd.f32 %v1531, %v1600
      %v1633 = vld [vmem:[%s1532 + $0x1] sm:$0xff]
      %v1634 = vld [vmem:[%s1532 + $0x9] sm:$0xff]
      %v1635 = vld [vmem:[%s1532 + $0x19] sm:$0xff]
      %v1636 = vld [vmem:[%s1532 + $0x21] sm:$0xff]
      %v1637 = vld [vmem:[%s1532 + $0x31] sm:$0xff]
      %v1638 = vld [vmem:[%s1532 + $0x39] sm:$0xff]
      %v1639 = vld [vmem:[%s1532 + $0x49] sm:$0xff]
      %v1640 = vld [vmem:[%s1532 + $0x51] sm:$0xff]
      %v1641 = vld [vmem:[%s1532 + $0x61] sm:$0xff]
      %v1642 = vld [vmem:[%s1532 + $0x69] sm:$0xff]
      %v1643 = vld [vmem:[%s1532 + $0x79] sm:$0xff]
      %v1644 = vld [vmem:[%s1532 + $0x81] sm:$0xff]
      %v1645 = vld [vmem:[%s1532 + $0x91] sm:$0xff]
      %v1646 = vld [vmem:[%s1532 + $0x99] sm:$0xff]
      %v1647 = vld [vmem:[%s1532 + $0xa9] sm:$0xff]
      %v1648 = vld [vmem:[%s1532 + $0xb1] sm:$0xff]
      %v1649 = vld [vmem:[%s1532 + $0xc1] sm:$0xff]
      %v1650 = vld [vmem:[%s1532 + $0xc9] sm:$0xff]
      %v1651 = vld [vmem:[%s1532 + $0xd9] sm:$0xff]
      %v1652 = vld [vmem:[%s1532 + $0xe1] sm:$0xff]
      %v1653 = vld [vmem:[%s1532 + $0xf1] sm:$0xff]
      %v1654 = vld [vmem:[%s1532 + $0xf9] sm:$0xff]
      %v1655 = vld [vmem:[%s1532 + $0x109] sm:$0xff]
      %v1656 = vld [vmem:[%s1532 + $0x111] sm:$0xff]
      %v1657 = vld [vmem:[%s1532 + $0x121] sm:$0xff]
      %v1658 = vld [vmem:[%s1532 + $0x129] sm:$0xff]
      %v1659 = vld [vmem:[%s1532 + $0x139] sm:$0xff]
      %v1660 = vld [vmem:[%s1532 + $0x141] sm:$0xff]
      %v1661 = vld [vmem:[%s1532 + $0x151] sm:$0xff]
      %v1662 = vld [vmem:[%s1532 + $0x159] sm:$0xff]
      %v1663 = vld [vmem:[%s1532 + $0x169] sm:$0xff]
      %v1664 = vld [vmem:[%s1532 + $0x171] sm:$0xff]
      %v1665 = vlaneseq
      %v1666 = vshrl.u32 %v1665, 7
      %v1667 = vsub.s32 7, %v1666
      %v1668 = vrot.slane %v962, %v1667
      %v1669 = vmul.f32 %v1633, %v1668
      %v1670 = vmul.f32 %v1634, %v1668
      %v1671 = vmul.f32 %v1635, %v1668
      %v1672 = vmul.f32 %v1636, %v1668
      %v1673 = vmul.f32 %v1637, %v1668
      %v1674 = vmul.f32 %v1638, %v1668
      %v1675 = vmul.f32 %v1639, %v1668
      %v1676 = vmul.f32 %v1640, %v1668
      %v1677 = vmul.f32 %v1641, %v1668
      %v1678 = vmul.f32 %v1642, %v1668
      %v1679 = vmul.f32 %v1643, %v1668
      %v1680 = vmul.f32 %v1644, %v1668
      %v1681 = vmul.f32 %v1645, %v1668
      %v1682 = vmul.f32 %v1646, %v1668
      %v1683 = vmul.f32 %v1647, %v1668
      %v1684 = vmul.f32 %v1648, %v1668
      %v1685 = vmul.f32 %v1649, %v1668
      %v1686 = vmul.f32 %v1650, %v1668
      %v1687 = vmul.f32 %v1651, %v1668
      %v1688 = vmul.f32 %v1652, %v1668
      %v1689 = vmul.f32 %v1653, %v1668
      %v1690 = vmul.f32 %v1654, %v1668
      %v1691 = vmul.f32 %v1655, %v1668
      %v1692 = vmul.f32 %v1656, %v1668
      %v1693 = vmul.f32 %v1657, %v1668
      %v1694 = vmul.f32 %v1658, %v1668
      %v1695 = vmul.f32 %v1659, %v1668
      %v1696 = vmul.f32 %v1660, %v1668
      %v1697 = vmul.f32 %v1661, %v1668
      %v1698 = vmul.f32 %v1662, %v1668
      %v1699 = vmul.f32 %v1663, %v1668
      %v1700 = vmul.f32 %v1664, %v1668
      %v1701 = vadd.f32 %v1601, %v1669
      %v1702 = vadd.f32 %v1602, %v1670
      %v1703 = vadd.f32 %v1603, %v1671
      %v1704 = vadd.f32 %v1604, %v1672
      %v1705 = vadd.f32 %v1605, %v1673
      %v1706 = vadd.f32 %v1606, %v1674
      %v1707 = vadd.f32 %v1607, %v1675
      %v1708 = vadd.f32 %v1608, %v1676
      %v1709 = vadd.f32 %v1609, %v1677
      %v1710 = vadd.f32 %v1610, %v1678
      %v1711 = vadd.f32 %v1611, %v1679
      %v1712 = vadd.f32 %v1612, %v1680
      %v1713 = vadd.f32 %v1613, %v1681
      %v1714 = vadd.f32 %v1614, %v1682
      %v1715 = vadd.f32 %v1615, %v1683
      %v1716 = vadd.f32 %v1616, %v1684
      %v1717 = vadd.f32 %v1617, %v1685
      %v1718 = vadd.f32 %v1618, %v1686
      %v1719 = vadd.f32 %v1619, %v1687
      %v1720 = vadd.f32 %v1620, %v1688
      %v1721 = vadd.f32 %v1621, %v1689
      %v1722 = vadd.f32 %v1622, %v1690
      %v1723 = vadd.f32 %v1623, %v1691
      %v1724 = vadd.f32 %v1624, %v1692
      %v1725 = vadd.f32 %v1625, %v1693
      %v1726 = vadd.f32 %v1626, %v1694
      %v1727 = vadd.f32 %v1627, %v1695
      %v1728 = vadd.f32 %v1628, %v1696
      %v1729 = vadd.f32 %v1629, %v1697
      %v1730 = vadd.f32 %v1630, %v1698
      %v1731 = vadd.f32 %v1631, %v1699
      %v1732 = vadd.f32 %v1632, %v1700
      %v1733 = vld [vmem:[%s1532 + $0x2] sm:$0xff]
      %v1734 = vld [vmem:[%s1532 + $0xa] sm:$0xff]
      %v1735 = vld [vmem:[%s1532 + $0x1a] sm:$0xff]
      %v1736 = vld [vmem:[%s1532 + $0x22] sm:$0xff]
      %v1737 = vld [vmem:[%s1532 + $0x32] sm:$0xff]
      %v1738 = vld [vmem:[%s1532 + $0x3a] sm:$0xff]
      %v1739 = vld [vmem:[%s1532 + $0x4a] sm:$0xff]
      %v1740 = vld [vmem:[%s1532 + $0x52] sm:$0xff]
      %v1741 = vld [vmem:[%s1532 + $0x62] sm:$0xff]
      %v1742 = vld [vmem:[%s1532 + $0x6a] sm:$0xff]
      %v1743 = vld [vmem:[%s1532 + $0x7a] sm:$0xff]
      %v1744 = vld [vmem:[%s1532 + $0x82] sm:$0xff]
      %v1745 = vld [vmem:[%s1532 + $0x92] sm:$0xff]
      %v1746 = vld [vmem:[%s1532 + $0x9a] sm:$0xff]
      %v1747 = vld [vmem:[%s1532 + $0xaa] sm:$0xff]
      %v1748 = vld [vmem:[%s1532 + $0xb2] sm:$0xff]
      %v1749 = vld [vmem:[%s1532 + $0xc2] sm:$0xff]
      %v1750 = vld [vmem:[%s1532 + $0xca] sm:$0xff]
      %v1751 = vld [vmem:[%s1532 + $0xda] sm:$0xff]
      %v1752 = vld [vmem:[%s1532 + $0xe2] sm:$0xff]
      %v1753 = vld [vmem:[%s1532 + $0xf2] sm:$0xff]
      %v1754 = vld [vmem:[%s1532 + $0xfa] sm:$0xff]
      %v1755 = vld [vmem:[%s1532 + $0x10a] sm:$0xff]
      %v1756 = vld [vmem:[%s1532 + $0x112] sm:$0xff]
      %v1757 = vld [vmem:[%s1532 + $0x122] sm:$0xff]
      %v1758 = vld [vmem:[%s1532 + $0x12a] sm:$0xff]
      %v1759 = vld [vmem:[%s1532 + $0x13a] sm:$0xff]
      %v1760 = vld [vmem:[%s1532 + $0x142] sm:$0xff]
      %v1761 = vld [vmem:[%s1532 + $0x152] sm:$0xff]
      %v1762 = vld [vmem:[%s1532 + $0x15a] sm:$0xff]
      %v1763 = vld [vmem:[%s1532 + $0x16a] sm:$0xff]
      %v1764 = vld [vmem:[%s1532 + $0x172] sm:$0xff]
      %v1765 = vlaneseq
      %v1766 = vshrl.u32 %v1765, 7
      %v1767 = vsub.s32 0, %v1766
      %v1768 = vrot.slane %v963, %v1767
      %v1769 = vmul.f32 %v1733, %v1768
      %v1770 = vmul.f32 %v1734, %v1768
      %v1771 = vmul.f32 %v1735, %v1768
      %v1772 = vmul.f32 %v1736, %v1768
      %v1773 = vmul.f32 %v1737, %v1768
      %v1774 = vmul.f32 %v1738, %v1768
      %v1775 = vmul.f32 %v1739, %v1768
      %v1776 = vmul.f32 %v1740, %v1768
      %v1777 = vmul.f32 %v1741, %v1768
      %v1778 = vmul.f32 %v1742, %v1768
      %v1779 = vmul.f32 %v1743, %v1768
      %v1780 = vmul.f32 %v1744, %v1768
      %v1781 = vmul.f32 %v1745, %v1768
      %v1782 = vmul.f32 %v1746, %v1768
      %v1783 = vmul.f32 %v1747, %v1768
      %v1784 = vmul.f32 %v1748, %v1768
      %v1785 = vmul.f32 %v1749, %v1768
      %v1786 = vmul.f32 %v1750, %v1768
      %v1787 = vmul.f32 %v1751, %v1768
      %v1788 = vmul.f32 %v1752, %v1768
      %v1789 = vmul.f32 %v1753, %v1768
      %v1790 = vmul.f32 %v1754, %v1768
      %v1791 = vmul.f32 %v1755, %v1768
      %v1792 = vmul.f32 %v1756, %v1768
      %v1793 = vmul.f32 %v1757, %v1768
      %v1794 = vmul.f32 %v1758, %v1768
      %v1795 = vmul.f32 %v1759, %v1768
      %v1796 = vmul.f32 %v1760, %v1768
      %v1797 = vmul.f32 %v1761, %v1768
      %v1798 = vmul.f32 %v1762, %v1768
      %v1799 = vmul.f32 %v1763, %v1768
      %v1800 = vmul.f32 %v1764, %v1768
      %v1801 = vadd.f32 %v1701, %v1769
      %v1802 = vadd.f32 %v1702, %v1770
      %v1803 = vadd.f32 %v1703, %v1771
      %v1804 = vadd.f32 %v1704, %v1772
      %v1805 = vadd.f32 %v1705, %v1773
      %v1806 = vadd.f32 %v1706, %v1774
      %v1807 = vadd.f32 %v1707, %v1775
      %v1808 = vadd.f32 %v1708, %v1776
      %v1809 = vadd.f32 %v1709, %v1777
      %v1810 = vadd.f32 %v1710, %v1778
      %v1811 = vadd.f32 %v1711, %v1779
      %v1812 = vadd.f32 %v1712, %v1780
      %v1813 = vadd.f32 %v1713, %v1781
      %v1814 = vadd.f32 %v1714, %v1782
      %v1815 = vadd.f32 %v1715, %v1783
      %v1816 = vadd.f32 %v1716, %v1784
      %v1817 = vadd.f32 %v1717, %v1785
      %v1818 = vadd.f32 %v1718, %v1786
      %v1819 = vadd.f32 %v1719, %v1787
      %v1820 = vadd.f32 %v1720, %v1788
      %v1821 = vadd.f32 %v1721, %v1789
      %v1822 = vadd.f32 %v1722, %v1790
      %v1823 = vadd.f32 %v1723, %v1791
      %v1824 = vadd.f32 %v1724, %v1792
      %v1825 = vadd.f32 %v1725, %v1793
      %v1826 = vadd.f32 %v1726, %v1794
      %v1827 = vadd.f32 %v1727, %v1795
      %v1828 = vadd.f32 %v1728, %v1796
      %v1829 = vadd.f32 %v1729, %v1797
      %v1830 = vadd.f32 %v1730, %v1798
      %v1831 = vadd.f32 %v1731, %v1799
      %v1832 = vadd.f32 %v1732, %v1800
      %v1833 = vld [vmem:[%s4] sm:$0x1]
      %v1835 = vlaneseq
      %v1836 = vshrl.u32 %v1835, 7
      %v1837 = vsub.s32 0, %v1836
      %v1838 = vrot.slane %v1833, %v1837
      %v1840 = vadd.f32 %v1801, %v1838
      %v1841 = vadd.f32 %v1802, %v1838
      %v1842 = vadd.f32 %v1803, %v1838
      %v1843 = vadd.f32 %v1804, %v1838
      %v1844 = vadd.f32 %v1805, %v1838
      %v1845 = vadd.f32 %v1806, %v1838
      %v1846 = vadd.f32 %v1807, %v1838
      %v1847 = vadd.f32 %v1808, %v1838
      %v1848 = vadd.f32 %v1809, %v1838
      %v1849 = vadd.f32 %v1810, %v1838
      %v1850 = vadd.f32 %v1811, %v1838
      %v1851 = vadd.f32 %v1812, %v1838
      %v1852 = vadd.f32 %v1813, %v1838
      %v1853 = vadd.f32 %v1814, %v1838
      %v1854 = vadd.f32 %v1815, %v1838
      %v1855 = vadd.f32 %v1816, %v1838
      %v1856 = vadd.f32 %v1817, %v1838
      %v1857 = vadd.f32 %v1818, %v1838
      %v1858 = vadd.f32 %v1819, %v1838
      %v1859 = vadd.f32 %v1820, %v1838
      %v1860 = vadd.f32 %v1821, %v1838
      %v1861 = vadd.f32 %v1822, %v1838
      %v1862 = vadd.f32 %v1823, %v1838
      %v1863 = vadd.f32 %v1824, %v1838
      %v1864 = vadd.f32 %v1825, %v1838
      %v1865 = vadd.f32 %v1826, %v1838
      %v1866 = vadd.f32 %v1827, %v1838
      %v1867 = vadd.f32 %v1828, %v1838
      %v1868 = vadd.f32 %v1829, %v1838
      %v1869 = vadd.f32 %v1830, %v1838
      %v1870 = vadd.f32 %v1831, %v1838
      %v1871 = vadd.f32 %v1832, %v1838
      %v1872 = vsel %vm390, %v1840, 0.0
      %v1873 = vsel %vm390, %v1841, 0.0
      %v1874 = vadd.f32 %v1872, %v1873
      %v1875 = vsel %vm390, %v1842, 0.0
      %v1876 = vadd.f32 %v1874, %v1875
      %v1877 = vsel %vm390, %v1843, 0.0
      %v1878 = vadd.f32 %v1876, %v1877
      %v1879 = vsel %vm390, %v1844, 0.0
      %v1880 = vadd.f32 %v1878, %v1879
      %v1881 = vsel %vm390, %v1845, 0.0
      %v1882 = vadd.f32 %v1880, %v1881
      %v1883 = vsel %vm390, %v1846, 0.0
      %v1884 = vadd.f32 %v1882, %v1883
      %v1885 = vsel %vm390, %v1847, 0.0
      %v1886 = vadd.f32 %v1884, %v1885
      %v1887 = vsel %vm390, %v1848, 0.0
      %v1888 = vadd.f32 %v1886, %v1887
      %v1889 = vsel %vm390, %v1849, 0.0
      %v1890 = vadd.f32 %v1888, %v1889
      %v1891 = vsel %vm390, %v1850, 0.0
      %v1892 = vadd.f32 %v1890, %v1891
      %v1893 = vsel %vm390, %v1851, 0.0
      %v1894 = vadd.f32 %v1892, %v1893
      %v1895 = vsel %vm390, %v1852, 0.0
      %v1896 = vadd.f32 %v1894, %v1895
      %v1897 = vsel %vm390, %v1853, 0.0
      %v1898 = vadd.f32 %v1896, %v1897
      %v1899 = vsel %vm390, %v1854, 0.0
      %v1900 = vadd.f32 %v1898, %v1899
      %v1901 = vsel %vm390, %v1855, 0.0
      %v1902 = vadd.f32 %v1900, %v1901
      %v1903 = vsel %vm390, %v1856, 0.0
      %v1904 = vadd.f32 %v1902, %v1903
      %v1905 = vsel %vm390, %v1857, 0.0
      %v1906 = vadd.f32 %v1904, %v1905
      %v1907 = vsel %vm390, %v1858, 0.0
      %v1908 = vadd.f32 %v1906, %v1907
      %v1909 = vsel %vm390, %v1859, 0.0
      %v1910 = vadd.f32 %v1908, %v1909
      %v1911 = vsel %vm390, %v1860, 0.0
      %v1912 = vadd.f32 %v1910, %v1911
      %v1913 = vsel %vm390, %v1861, 0.0
      %v1914 = vadd.f32 %v1912, %v1913
      %v1915 = vsel %vm390, %v1862, 0.0
      %v1916 = vadd.f32 %v1914, %v1915
      %v1917 = vsel %vm390, %v1863, 0.0
      %v1918 = vadd.f32 %v1916, %v1917
      %v1919 = vsel %vm390, %v1864, 0.0
      %v1920 = vadd.f32 %v1918, %v1919
      %v1921 = vsel %vm390, %v1865, 0.0
      %v1922 = vadd.f32 %v1920, %v1921
      %v1923 = vsel %vm390, %v1866, 0.0
      %v1924 = vadd.f32 %v1922, %v1923
      %v1925 = vsel %vm390, %v1867, 0.0
      %v1926 = vadd.f32 %v1924, %v1925
      %v1927 = vsel %vm390, %v1868, 0.0
      %v1928 = vadd.f32 %v1926, %v1927
      %v1929 = vsel %vm390, %v1869, 0.0
      %v1930 = vadd.f32 %v1928, %v1929
      %v1931 = vsel %vm390, %v1870, 0.0
      %v1932 = vadd.f32 %v1930, %v1931
      %v1933 = vsel %vm390, %v1871, 0.0
      %v1934 = vadd.f32 %v1932, %v1933
      %v1935 = vrot.slane %v1934, 4
      %v1936 = vadd.f32 %v1934, %v1935
      %v1937 = vrot.slane %v1936, 2
      %v1938 = vadd.f32 %v1936, %v1937
      %v1939 = vrot.slane %v1938, 1
      %v1940 = vadd.f32 %v1938, %v1939
      %v1941 = vmul.f32 %v1940, 0.00390625
      %v1942 = vld [vmem:[%s5] sm:$0xff]
      %v1943 = vld [vmem:[%s5 + $0x8] sm:$0xff]
      %v1944 = vld [vmem:[%s5 + $0x10] sm:$0xff]
      %v1945 = vld [vmem:[%s5 + $0x18] sm:$0xff]
      %v1947 = vsel %vm390, %v1941, 0
      %1949 = vmatprep.subr.mxu0 0.0
      %1950 = vmatpush1.msra.mxu0 %v1942
      %1951 = vmatprep.subr.mxu0 0.0
      %1952 = vmatpush1.msra.mxu0 %v1943
      %1953 = vmatprep.subr.mxu0 0.0
      %1954 = vmatpush1.msra.mxu0 %v1944
      %1955 = vmatprep.subr.mxu0 0.0
      %1956 = vmatpush1.msra.mxu0 %v1945
      %1957 = vmatprep.subr.mxu0 0.0
      %1958 = vmatpush1.msra.mxu0 0.0
      %1959 = vmatprep.subr.mxu0 0.0
      %1960 = vmatpush1.msra.mxu0 0.0
      %1961 = vmatprep.subr.mxu0 0.0
      %1962 = vmatpush1.msra.mxu0 0.0
      %1963 = vmatprep.subr.mxu0 0.0
      %1964 = vmatpush1.msra.mxu0 0.0
      %1965 = vmatprep.subr.mxu0 0.0
      %1966 = vmatpush1.msra.mxu0 0.0
      %1967 = vmatprep.subr.mxu0 0.0
      %1968 = vmatpush1.msra.mxu0 0.0
      %1969 = vmatprep.subr.mxu0 0.0
      %1970 = vmatpush1.msra.mxu0 0.0
      %1971 = vmatprep.subr.mxu0 0.0
      %1972 = vmatpush1.msra.mxu0 0.0
      %1973 = vmatprep.subr.mxu0 0.0
      %1974 = vmatpush1.msra.mxu0 0.0
      %1975 = vmatprep.subr.mxu0 0.0
      %1976 = vmatpush1.msra.mxu0 0.0
      %1977 = vmatprep.subr.mxu0 0.0
      %1978 = vmatpush1.msra.mxu0 0.0
      %1979 = vmatprep.subr.mxu0 0.0
      %1980 = vmatpush1.msra.mxu0 0.0
      %1981 = vmatprep.subr.mxu0 0.0
      %1982 = vmatpush1.msra.mxu0 0.0
      %1983 = vmatprep.subr.mxu0 0.0
      %1984 = vmatpush1.msra.mxu0 0.0
      %1985 = vmatprep.subr.mxu0 0.0
      %1986 = vmatpush1.msra.mxu0 0.0
      %1987 = vmatprep.subr.mxu0 0.0
      %1988 = vmatpush1.msra.mxu0 0.0
      %1989 = vmatprep.subr.mxu0 0.0
      %1990 = vmatpush1.msra.mxu0 0.0
      %1991 = vmatprep.subr.mxu0 0.0
      %1992 = vmatpush1.msra.mxu0 0.0
      %1993 = vmatprep.subr.mxu0 0.0
      %1994 = vmatpush1.msra.mxu0 0.0
      %1995 = vmatprep.subr.mxu0 0.0
      %1996 = vmatpush1.msra.mxu0 0.0
      %1997 = vmatprep.subr.mxu0 0.0
      %1998 = vmatpush1.msra.mxu0 0.0
      %1999 = vmatprep.subr.mxu0 0.0
      %2000 = vmatpush1.msra.mxu0 0.0
      %2001 = vmatprep.subr.mxu0 0.0
      %2002 = vmatpush1.msra.mxu0 0.0
      %2003 = vmatprep.subr.mxu0 0.0
      %2004 = vmatpush1.msra.mxu0 0.0
      %2005 = vmatprep.subr.mxu0 0.0
      %2006 = vmatpush1.msra.mxu0 0.0
      %2007 = vmatprep.subr.mxu0 0.0
      %2008 = vmatpush1.msra.mxu0 0.0
      %2009 = vmatprep.subr.mxu0 0.0
      %2010 = vmatpush1.msra.mxu0 0.0
      %2011 = vmatprep.subr.mxu0 0.0
      %2012 = vmatpush1.msra.mxu0 0.0
      %2013 = vmatprep.mubr.f32.mxu0 0.0
      %2014 = vmatmul.mubr.f32.gmra.mrb[0].mxu0 %v1947
      %v2015 = vpop.f32.mrb[0].mxu0
      %v2016 = vadd.f32 0.0, %v2015
      %v2017 = vpop.f32.mrb[0].mxu0
      %2018 = vdwg.mxu0
      %v2019 = vmax.f32 %v2016, 0.0
      %v2020 = vld [vmem:[%s6] sm:$0xff]
      %vm2021 = vcmask 64512
      %v2023 = vsel %vm2021, %v2019, 0
      %2025 = vmatprep.subr.mxu0 0.0
      %2026 = vmatpush1.msra.mxu0 %v2020
      %2027 = vmatprep.subr.mxu0 0.0
      %2028 = vmatpush1.msra.mxu0 0.0
      %2029 = vmatprep.subr.mxu0 0.0
      %2030 = vmatpush1.msra.mxu0 0.0
      %2031 = vmatprep.subr.mxu0 0.0
      %2032 = vmatpush1.msra.mxu0 0.0
      %2033 = vmatprep.subr.mxu0 0.0
      %2034 = vmatpush1.msra.mxu0 0.0
      %2035 = vmatprep.subr.mxu0 0.0
      %2036 = vmatpush1.msra.mxu0 0.0
      %2037 = vmatprep.subr.mxu0 0.0
      %2038 = vmatpush1.msra.mxu0 0.0
      %2039 = vmatprep.subr.mxu0 0.0
      %2040 = vmatpush1.msra.mxu0 0.0
      %2041 = vmatprep.subr.mxu0 0.0
      %2042 = vmatpush1.msra.mxu0 0.0
      %2043 = vmatprep.subr.mxu0 0.0
      %2044 = vmatpush1.msra.mxu0 0.0
      %2045 = vmatprep.subr.mxu0 0.0
      %2046 = vmatpush1.msra.mxu0 0.0
      %2047 = vmatprep.subr.mxu0 0.0
      %2048 = vmatpush1.msra.mxu0 0.0
      %2049 = vmatprep.subr.mxu0 0.0
      %2050 = vmatpush1.msra.mxu0 0.0
      %2051 = vmatprep.subr.mxu0 0.0
      %2052 = vmatpush1.msra.mxu0 0.0
      %2053 = vmatprep.subr.mxu0 0.0
      %2054 = vmatpush1.msra.mxu0 0.0
      %2055 = vmatprep.subr.mxu0 0.0
      %2056 = vmatpush1.msra.mxu0 0.0
      %2057 = vmatprep.subr.mxu0 0.0
      %2058 = vmatpush1.msra.mxu0 0.0
      %2059 = vmatprep.subr.mxu0 0.0
      %2060 = vmatpush1.msra.mxu0 0.0
      %2061 = vmatprep.subr.mxu0 0.0
      %2062 = vmatpush1.msra.mxu0 0.0
      %2063 = vmatprep.subr.mxu0 0.0
      %2064 = vmatpush1.msra.mxu0 0.0
      %2065 = vmatprep.subr.mxu0 0.0
      %2066 = vmatpush1.msra.mxu0 0.0
      %2067 = vmatprep.subr.mxu0 0.0
      %2068 = vmatpush1.msra.mxu0 0.0
      %2069 = vmatprep.subr.mxu0 0.0
      %2070 = vmatpush1.msra.mxu0 0.0
      %2071 = vmatprep.subr.mxu0 0.0
      %2072 = vmatpush1.msra.mxu0 0.0
      %2073 = vmatprep.subr.mxu0 0.0
      %2074 = vmatpush1.msra.mxu0 0.0
      %2075 = vmatprep.subr.mxu0 0.0
      %2076 = vmatpush1.msra.mxu0 0.0
      %2077 = vmatprep.subr.mxu0 0.0
      %2078 = vmatpush1.msra.mxu0 0.0
      %2079 = vmatprep.subr.mxu0 0.0
      %2080 = vmatpush1.msra.mxu0 0.0
      %2081 = vmatprep.subr.mxu0 0.0
      %2082 = vmatpush1.msra.mxu0 0.0
      %2083 = vmatprep.subr.mxu0 0.0
      %2084 = vmatpush1.msra.mxu0 0.0
      %2085 = vmatprep.subr.mxu0 0.0
      %2086 = vmatpush1.msra.mxu0 0.0
      %2087 = vmatprep.subr.mxu0 0.0
      %2088 = vmatpush1.msra.mxu0 0.0
      %2089 = vmatprep.mubr.f32.mxu0 0.0
      %2090 = vmatmul.mubr.f32.gmra.mrb[0].mxu0 %v2023
      %v2091 = vpop.f32.mrb[0].mxu0
      %v2092 = vadd.f32 0.0, %v2091
      %v2093 = vpop.f32.mrb[0].mxu0
      %2094 = vdwg.mxu0
      %v2095 = vmul.f32 %v2092, 0.16666667
      %v2096 = vadd.f32 %v2095, 0.5
      %v2097 = vmax.f32 %v2096, 0.0
      %v2098 = vmin.f32 %v2097, 1.0
      %v2099 = vld [vmem:[%s7] sm:$0xff]
      %v2100 = vld [vmem:[%s7 + $0x8] sm:$0xff]
      %v2101 = vld [vmem:[%s7 + $0x10] sm:$0xff]
      %v2102 = vld [vmem:[%s7 + $0x18] sm:$0xff]
      %v2103 = vld [vmem:[#allocation3] sm:$0x1]
      %v2105 = vlaneseq
      %v2106 = vshrl.u32 %v2105, 7
      %v2107 = vsub.s32 0, %v2106
      %v2108 = vrot.slane %v2103, %v2107
      %v2111 = vsel %vm390, %v1840, 0
      %v2114 = vsel %vm390, %v1841, 0
      %v2117 = vsel %vm390, %v1842, 0
      %v2120 = vsel %vm390, %v1843, 0
      %v2123 = vsel %vm390, %v1844, 0
      %v2126 = vsel %vm390, %v1845, 0
      %v2129 = vsel %vm390, %v1846, 0
      %v2132 = vsel %vm390, %v1847, 0
      %v2135 = vsel %vm390, %v1848, 0
      %v2138 = vsel %vm390, %v1849, 0
      %v2141 = vsel %vm390, %v1850, 0
      %v2144 = vsel %vm390, %v1851, 0
      %v2147 = vsel %vm390, %v1852, 0
      %v2150 = vsel %vm390, %v1853, 0
      %v2153 = vsel %vm390, %v1854, 0
      %v2156 = vsel %vm390, %v1855, 0
      %v2159 = vsel %vm390, %v1856, 0
      %v2162 = vsel %vm390, %v1857, 0
      %v2165 = vsel %vm390, %v1858, 0
      %v2168 = vsel %vm390, %v1859, 0
      %v2171 = vsel %vm390, %v1860, 0
      %v2174 = vsel %vm390, %v1861, 0
      %v2177 = vsel %vm390, %v1862, 0
      %v2180 = vsel %vm390, %v1863, 0
      %v2183 = vsel %vm390, %v1864, 0
      %v2186 = vsel %vm390, %v1865, 0
      %v2189 = vsel %vm390, %v1866, 0
      %v2192 = vsel %vm390, %v1867, 0
      %v2195 = vsel %vm390, %v1868, 0
      %v2198 = vsel %vm390, %v1869, 0
      %v2201 = vsel %vm390, %v1870, 0
      %v2204 = vsel %vm390, %v1871, 0
      %2206 = vmatprep.subr.mxu0 0.0
      %2207 = vmatpush1.msra.mxu0 %v2099
      %2208 = vmatprep.subr.mxu0 0.0
      %2209 = vmatpush1.msra.mxu0 %v2100
      %2210 = vmatprep.subr.mxu0 0.0
      %2211 = vmatpush1.msra.mxu0 %v2101
      %2212 = vmatprep.subr.mxu0 0.0
      %2213 = vmatpush1.msra.mxu0 %v2102
      %2214 = vmatprep.subr.mxu0 0.0
      %2215 = vmatpush1.msra.mxu0 0.0
      %2216 = vmatprep.subr.mxu0 0.0
      %2217 = vmatpush1.msra.mxu0 0.0
      %2218 = vmatprep.subr.mxu0 0.0
      %2219 = vmatpush1.msra.mxu0 0.0
      %2220 = vmatprep.subr.mxu0 0.0
      %2221 = vmatpush1.msra.mxu0 0.0
      %2222 = vmatprep.subr.mxu0 0.0
      %2223 = vmatpush1.msra.mxu0 0.0
      %2224 = vmatprep.subr.mxu0 0.0
      %2225 = vmatpush1.msra.mxu0 0.0
      %2226 = vmatprep.subr.mxu0 0.0
      %2227 = vmatpush1.msra.mxu0 0.0
      %2228 = vmatprep.subr.mxu0 0.0
      %2229 = vmatpush1.msra.mxu0 0.0
      %2230 = vmatprep.subr.mxu0 0.0
      %2231 = vmatpush1.msra.mxu0 0.0
      %2232 = vmatprep.subr.mxu0 0.0
      %2233 = vmatpush1.msra.mxu0 0.0
      %2234 = vmatprep.subr.mxu0 0.0
      %2235 = vmatpush1.msra.mxu0 0.0
      %2236 = vmatprep.subr.mxu0 0.0
      %2237 = vmatpush1.msra.mxu0 0.0
      %2238 = vmatprep.subr.mxu0 0.0
      %2239 = vmatpush1.msra.mxu0 0.0
      %2240 = vmatprep.subr.mxu0 0.0
      %2241 = vmatpush1.msra.mxu0 0.0
      %2242 = vmatprep.subr.mxu0 0.0
      %2243 = vmatpush1.msra.mxu0 0.0
      %2244 = vmatprep.subr.mxu0 0.0
      %2245 = vmatpush1.msra.mxu0 0.0
      %2246 = vmatprep.subr.mxu0 0.0
      %2247 = vmatpush1.msra.mxu0 0.0
      %2248 = vmatprep.subr.mxu0 0.0
      %2249 = vmatpush1.msra.mxu0 0.0
      %2250 = vmatprep.subr.mxu0 0.0
      %2251 = vmatpush1.msra.mxu0 0.0
      %2252 = vmatprep.subr.mxu0 0.0
      %2253 = vmatpush1.msra.mxu0 0.0
      %2254 = vmatprep.subr.mxu0 0.0
      %2255 = vmatpush1.msra.mxu0 0.0
      %2256 = vmatprep.subr.mxu0 0.0
      %2257 = vmatpush1.msra.mxu0 0.0
      %2258 = vmatprep.subr.mxu0 0.0
      %2259 = vmatpush1.msra.mxu0 0.0
      %2260 = vmatprep.subr.mxu0 0.0
      %2261 = vmatpush1.msra.mxu0 0.0
      %2262 = vmatprep.subr.mxu0 0.0
      %2263 = vmatpush1.msra.mxu0 0.0
      %2264 = vmatprep.subr.mxu0 0.0
      %2265 = vmatpush1.msra.mxu0 0.0
      %2266 = vmatprep.subr.mxu0 0.0
      %2267 = vmatpush1.msra.mxu0 0.0
      %2268 = vmatprep.subr.mxu0 0.0
      %2269 = vmatpush1.msra.mxu0 0.0
      %2270 = vmatprep.mubr.f32.mxu0 0.0
      %2271 = vmatmul.mubr.f32.gmra.mrb[0].mxu0 %v2111
      %v2272 = vpop.f32.mrb[0].mxu0
      %v2273 = vadd.f32 %v2108, %v2272
      %v2274 = vpop.f32.mrb[0].mxu0
      %2275 = vmatprep.mubr.f32.mxu0 0.0
      %2276 = vmatmul.mubr.f32.gmra.mrb[0].mxu0 %v2114
      %v2277 = vpop.f32.mrb[0].mxu0
      %v2278 = vadd.f32 %v2108, %v2277
      %v2279 = vpop.f32.mrb[0].mxu0
      %2280 = vmatprep.mubr.f32.mxu0 0.0
      %2281 = vmatmul.mubr.f32.gmra.mrb[0].mxu0 %v2117
      %v2282 = vpop.f32.mrb[0].mxu0
      %v2283 = vadd.f32 %v2108, %v2282
      %v2284 = vpop.f32.mrb[0].mxu0
      %2285 = vmatprep.mubr.f32.mxu0 0.0
      %2286 = vmatmul.mubr.f32.gmra.mrb[0].mxu0 %v2120
      %v2287 = vpop.f32.mrb[0].mxu0
      %v2288 = vadd.f32 %v2108, %v2287
      %v2289 = vpop.f32.mrb[0].mxu0
      %2290 = vmatprep.mubr.f32.mxu0 0.0
      %2291 = vmatmul.mubr.f32.gmra.mrb[0].mxu0 %v2123
      %v2292 = vpop.f32.mrb[0].mxu0
      %v2293 = vadd.f32 %v2108, %v2292
      %v2294 = vpop.f32.mrb[0].mxu0
      %2295 = vmatprep.mubr.f32.mxu0 0.0
      %2296 = vmatmul.mubr.f32.gmra.mrb[0].mxu0 %v2126
      %v2297 = vpop.f32.mrb[0].mxu0
      %v2298 = vadd.f32 %v2108, %v2297
      %v2299 = vpop.f32.mrb[0].mxu0
      %2300 = vmatprep.mubr.f32.mxu0 0.0
      %2301 = vmatmul.mubr.f32.gmra.mrb[0].mxu0 %v2129
      %v2302 = vpop.f32.mrb[0].mxu0
      %v2303 = vadd.f32 %v2108, %v2302
      %v2304 = vpop.f32.mrb[0].mxu0
      %2305 = vmatprep.mubr.f32.mxu0 0.0
      %2306 = vmatmul.mubr.f32.gmra.mrb[0].mxu0 %v2132
      %v2307 = vpop.f32.mrb[0].mxu0
      %v2308 = vadd.f32 %v2108, %v2307
      %v2309 = vpop.f32.mrb[0].mxu0
      %2310 = vmatprep.mubr.f32.mxu0 0.0
      %2311 = vmatmul.mubr.f32.gmra.mrb[0].mxu0 %v2135
      %v2312 = vpop.f32.mrb[0].mxu0
      %v2313 = vadd.f32 %v2108, %v2312
      %v2314 = vpop.f32.mrb[0].mxu0
      %2315 = vmatprep.mubr.f32.mxu0 0.0
      %2316 = vmatmul.mubr.f32.gmra.mrb[0].mxu0 %v2138
      %v2317 = vpop.f32.mrb[0].mxu0
      %v2318 = vadd.f32 %v2108, %v2317
      %v2319 = vpop.f32.mrb[0].mxu0
      %2320 = vmatprep.mubr.f32.mxu0 0.0
      %2321 = vmatmul.mubr.f32.gmra.mrb[0].mxu0 %v2141
      %v2322 = vpop.f32.mrb[0].mxu0
      %v2323 = vadd.f32 %v2108, %v2322
      %v2324 = vpop.f32.mrb[0].mxu0
      %2325 = vmatprep.mubr.f32.mxu0 0.0
      %2326 = vmatmul.mubr.f32.gmra.mrb[0].mxu0 %v2144
      %v2327 = vpop.f32.mrb[0].mxu0
      %v2328 = vadd.f32 %v2108, %v2327
      %v2329 = vpop.f32.mrb[0].mxu0
      %2330 = vmatprep.mubr.f32.mxu0 0.0
      %2331 = vmatmul.mubr.f32.gmra.mrb[0].mxu0 %v2147
      %v2332 = vpop.f32.mrb[0].mxu0
      %v2333 = vadd.f32 %v2108, %v2332
      %v2334 = vpop.f32.mrb[0].mxu0
      %2335 = vmatprep.mubr.f32.mxu0 0.0
      %2336 = vmatmul.mubr.f32.gmra.mrb[0].mxu0 %v2150
      %v2337 = vpop.f32.mrb[0].mxu0
      %v2338 = vadd.f32 %v2108, %v2337
      %v2339 = vpop.f32.mrb[0].mxu0
      %2340 = vmatprep.mubr.f32.mxu0 0.0
      %2341 = vmatmul.mubr.f32.gmra.mrb[0].mxu0 %v2153
      %v2342 = vpop.f32.mrb[0].mxu0
      %v2343 = vadd.f32 %v2108, %v2342
      %v2344 = vpop.f32.mrb[0].mxu0
      %2345 = vmatprep.mubr.f32.mxu0 0.0
      %2346 = vmatmul.mubr.f32.gmra.mrb[0].mxu0 %v2156
      %v2347 = vpop.f32.mrb[0].mxu0
      %v2348 = vadd.f32 %v2108, %v2347
      %v2349 = vpop.f32.mrb[0].mxu0
      %2350 = vmatprep.mubr.f32.mxu0 0.0
      %2351 = vmatmul.mubr.f32.gmra.mrb[0].mxu0 %v2159
      %v2352 = vpop.f32.mrb[0].mxu0
      %v2353 = vadd.f32 %v2108, %v2352
      %v2354 = vpop.f32.mrb[0].mxu0
      %2355 = vmatprep.mubr.f32.mxu0 0.0
      %2356 = vmatmul.mubr.f32.gmra.mrb[0].mxu0 %v2162
      %v2357 = vpop.f32.mrb[0].mxu0
      %v2358 = vadd.f32 %v2108, %v2357
      %v2359 = vpop.f32.mrb[0].mxu0
      %2360 = vmatprep.mubr.f32.mxu0 0.0
      %2361 = vmatmul.mubr.f32.gmra.mrb[0].mxu0 %v2165
      %v2362 = vpop.f32.mrb[0].mxu0
      %v2363 = vadd.f32 %v2108, %v2362
      %v2364 = vpop.f32.mrb[0].mxu0
      %2365 = vmatprep.mubr.f32.mxu0 0.0
      %2366 = vmatmul.mubr.f32.gmra.mrb[0].mxu0 %v2168
      %v2367 = vpop.f32.mrb[0].mxu0
      %v2368 = vadd.f32 %v2108, %v2367
      %v2369 = vpop.f32.mrb[0].mxu0
      %2370 = vmatprep.mubr.f32.mxu0 0.0
      %2371 = vmatmul.mubr.f32.gmra.mrb[0].mxu0 %v2171
      %v2372 = vpop.f32.mrb[0].mxu0
      %v2373 = vadd.f32 %v2108, %v2372
      %v2374 = vpop.f32.mrb[0].mxu0
      %2375 = vmatprep.mubr.f32.mxu0 0.0
      %2376 = vmatmul.mubr.f32.gmra.mrb[0].mxu0 %v2174
      %v2377 = vpop.f32.mrb[0].mxu0
      %v2378 = vadd.f32 %v2108, %v2377
      %v2379 = vpop.f32.mrb[0].mxu0
      %2380 = vmatprep.mubr.f32.mxu0 0.0
      %2381 = vmatmul.mubr.f32.gmra.mrb[0].mxu0 %v2177
      %v2382 = vpop.f32.mrb[0].mxu0
      %v2383 = vadd.f32 %v2108, %v2382
      %v2384 = vpop.f32.mrb[0].mxu0
      %2385 = vmatprep.mubr.f32.mxu0 0.0
      %2386 = vmatmul.mubr.f32.gmra.mrb[0].mxu0 %v2180
      %v2387 = vpop.f32.mrb[0].mxu0
      %v2388 = vadd.f32 %v2108, %v2387
      %v2389 = vpop.f32.mrb[0].mxu0
      %2390 = vmatprep.mubr.f32.mxu0 0.0
      %2391 = vmatmul.mubr.f32.gmra.mrb[0].mxu0 %v2183
      %v2392 = vpop.f32.mrb[0].mxu0
      %v2393 = vadd.f32 %v2108, %v2392
      %v2394 = vpop.f32.mrb[0].mxu0
      %2395 = vmatprep.mubr.f32.mxu0 0.0
      %2396 = vmatmul.mubr.f32.gmra.mrb[0].mxu0 %v2186
      %v2397 = vpop.f32.mrb[0].mxu0
      %v2398 = vadd.f32 %v2108, %v2397
      %v2399 = vpop.f32.mrb[0].mxu0
      %2400 = vmatprep.mubr.f32.mxu0 0.0
      %2401 = vmatmul.mubr.f32.gmra.mrb[0].mxu0 %v2189
      %v2402 = vpop.f32.mrb[0].mxu0
      %v2403 = vadd.f32 %v2108, %v2402
      %v2404 = vpop.f32.mrb[0].mxu0
      %2405 = vmatprep.mubr.f32.mxu0 0.0
      %2406 = vmatmul.mubr.f32.gmra.mrb[0].mxu0 %v2192
      %v2407 = vpop.f32.mrb[0].mxu0
      %v2408 = vadd.f32 %v2108, %v2407
      %v2409 = vpop.f32.mrb[0].mxu0
      %2410 = vmatprep.mubr.f32.mxu0 0.0
      %2411 = vmatmul.mubr.f32.gmra.mrb[0].mxu0 %v2195
      %v2412 = vpop.f32.mrb[0].mxu0
      %v2413 = vadd.f32 %v2108, %v2412
      %v2414 = vpop.f32.mrb[0].mxu0
      %2415 = vmatprep.mubr.f32.mxu0 0.0
      %2416 = vmatmul.mubr.f32.gmra.mrb[0].mxu0 %v2198
      %v2417 = vpop.f32.mrb[0].mxu0
      %v2418 = vadd.f32 %v2108, %v2417
      %v2419 = vpop.f32.mrb[0].mxu0
      %2420 = vmatprep.mubr.f32.mxu0 0.0
      %2421 = vmatmul.mubr.f32.gmra.mrb[0].mxu0 %v2201
      %v2422 = vpop.f32.mrb[0].mxu0
      %v2423 = vadd.f32 %v2108, %v2422
      %v2424 = vpop.f32.mrb[0].mxu0
      %2425 = vmatprep.mubr.f32.mxu0 0.0
      %2426 = vmatmul.mubr.f32.gmra.mrb[0].mxu0 %v2204
      %v2427 = vpop.f32.mrb[0].mxu0
      %v2428 = vadd.f32 %v2108, %v2427
      %v2429 = vpop.f32.mrb[0].mxu0
      %2430 = vdwg.mxu0
      %v2431 = vxor.u32 %v2273, 2147483648
      %v2432 = vxor.u32 %v2278, 2147483648
      %v2433 = vxor.u32 %v2283, 2147483648
      %v2434 = vxor.u32 %v2288, 2147483648
      %v2435 = vxor.u32 %v2293, 2147483648
      %v2436 = vxor.u32 %v2298, 2147483648
      %v2437 = vxor.u32 %v2303, 2147483648
      %v2438 = vxor.u32 %v2308, 2147483648
      %v2439 = vxor.u32 %v2313, 2147483648
      %v2440 = vxor.u32 %v2318, 2147483648
      %v2441 = vxor.u32 %v2323, 2147483648
      %v2442 = vxor.u32 %v2328, 2147483648
      %v2443 = vxor.u32 %v2333, 2147483648
      %v2444 = vxor.u32 %v2338, 2147483648
      %v2445 = vxor.u32 %v2343, 2147483648
      %v2446 = vxor.u32 %v2348, 2147483648
      %v2447 = vxor.u32 %v2353, 2147483648
      %v2448 = vxor.u32 %v2358, 2147483648
      %v2449 = vxor.u32 %v2363, 2147483648
      %v2450 = vxor.u32 %v2368, 2147483648
      %v2451 = vxor.u32 %v2373, 2147483648
      %v2452 = vxor.u32 %v2378, 2147483648
      %v2453 = vxor.u32 %v2383, 2147483648
      %v2454 = vxor.u32 %v2388, 2147483648
      %v2455 = vxor.u32 %v2393, 2147483648
      %v2456 = vxor.u32 %v2398, 2147483648
      %v2457 = vxor.u32 %v2403, 2147483648
      %v2458 = vxor.u32 %v2408, 2147483648
      %v2459 = vxor.u32 %v2413, 2147483648
      %v2460 = vxor.u32 %v2418, 2147483648
      %v2461 = vxor.u32 %v2423, 2147483648
      %v2462 = vxor.u32 %v2428, 2147483648
      %v2463 = vmul.f32 %v2431, 1.442695
      %v2464 = vpow.pop %v2463
      %v2465 = vmul.f32 %v2432, 1.442695
      %v2466 = vpow.pop %v2465
      %v2467 = vmul.f32 %v2433, 1.442695
      %v2468 = vpow.pop %v2467
      %v2469 = vmul.f32 %v2434, 1.442695
      %v2470 = vpow.pop %v2469
      %v2471 = vmul.f32 %v2435, 1.442695
      %v2472 = vpow.pop %v2471
      %v2473 = vmul.f32 %v2436, 1.442695
      %v2474 = vpow.pop %v2473
      %v2475 = vmul.f32 %v2437, 1.442695
      %v2476 = vpow.pop %v2475
      %v2477 = vmul.f32 %v2438, 1.442695
      %v2478 = vpow.pop %v2477
      %v2479 = vmul.f32 %v2439, 1.442695
      %v2480 = vpow.pop %v2479
      %v2481 = vmul.f32 %v2440, 1.442695
      %v2482 = vpow.pop %v2481
      %v2483 = vmul.f32 %v2441, 1.442695
      %v2484 = vpow.pop %v2483
      %v2485 = vmul.f32 %v2442, 1.442695
      %v2486 = vpow.pop %v2485
      %v2487 = vmul.f32 %v2443, 1.442695
      %v2488 = vpow.pop %v2487
      %v2489 = vmul.f32 %v2444, 1.442695
      %v2490 = vpow.pop %v2489
      %v2491 = vmul.f32 %v2445, 1.442695
      %v2492 = vpow.pop %v2491
      %v2493 = vmul.f32 %v2446, 1.442695
      %v2494 = vpow.pop %v2493
      %v2495 = vmul.f32 %v2447, 1.442695
      %v2496 = vpow.pop %v2495
      %v2497 = vmul.f32 %v2448, 1.442695
      %v2498 = vpow.pop %v2497
      %v2499 = vmul.f32 %v2449, 1.442695
      %v2500 = vpow.pop %v2499
      %v2501 = vmul.f32 %v2450, 1.442695
      %v2502 = vpow.pop %v2501
      %v2503 = vmul.f32 %v2451, 1.442695
      %v2504 = vpow.pop %v2503
      %v2505 = vmul.f32 %v2452, 1.442695
      %v2506 = vpow.pop %v2505
      %v2507 = vmul.f32 %v2453, 1.442695
      %v2508 = vpow.pop %v2507
      %v2509 = vmul.f32 %v2454, 1.442695
      %v2510 = vpow.pop %v2509
      %v2511 = vmul.f32 %v2455, 1.442695
      %v2512 = vpow.pop %v2511
      %v2513 = vmul.f32 %v2456, 1.442695
      %v2514 = vpow.pop %v2513
      %v2515 = vmul.f32 %v2457, 1.442695
      %v2516 = vpow.pop %v2515
      %v2517 = vmul.f32 %v2458, 1.442695
      %v2518 = vpow.pop %v2517
      %v2519 = vmul.f32 %v2459, 1.442695
      %v2520 = vpow.pop %v2519
      %v2521 = vmul.f32 %v2460, 1.442695
      %v2522 = vpow.pop %v2521
      %v2523 = vmul.f32 %v2461, 1.442695
      %v2524 = vpow.pop %v2523
      %v2525 = vmul.f32 %v2462, 1.442695
      %v2526 = vpow.pop %v2525
      %v2527 = vadd.f32 %v2464, 1.0
      %v2528 = vadd.f32 %v2466, 1.0
      %v2529 = vadd.f32 %v2468, 1.0
      %v2530 = vadd.f32 %v2470, 1.0
      %v2531 = vadd.f32 %v2472, 1.0
      %v2532 = vadd.f32 %v2474, 1.0
      %v2533 = vadd.f32 %v2476, 1.0
      %v2534 = vadd.f32 %v2478, 1.0
      %v2535 = vadd.f32 %v2480, 1.0
      %v2536 = vadd.f32 %v2482, 1.0
      %v2537 = vadd.f32 %v2484, 1.0
      %v2538 = vadd.f32 %v2486, 1.0
      %v2539 = vadd.f32 %v2488, 1.0
      %v2540 = vadd.f32 %v2490, 1.0
      %v2541 = vadd.f32 %v2492, 1.0
      %v2542 = vadd.f32 %v2494, 1.0
      %v2543 = vadd.f32 %v2496, 1.0
      %v2544 = vadd.f32 %v2498, 1.0
      %v2545 = vadd.f32 %v2500, 1.0
      %v2546 = vadd.f32 %v2502, 1.0
      %v2547 = vadd.f32 %v2504, 1.0
      %v2548 = vadd.f32 %v2506, 1.0
      %v2549 = vadd.f32 %v2508, 1.0
      %v2550 = vadd.f32 %v2510, 1.0
      %v2551 = vadd.f32 %v2512, 1.0
      %v2552 = vadd.f32 %v2514, 1.0
      %v2553 = vadd.f32 %v2516, 1.0
      %v2554 = vadd.f32 %v2518, 1.0
      %v2555 = vadd.f32 %v2520, 1.0
      %v2556 = vadd.f32 %v2522, 1.0
      %v2557 = vadd.f32 %v2524, 1.0
      %v2558 = vadd.f32 %v2526, 1.0
      %v2559 = vrcp.pop %v2527
      %v2560 = vmul.f32 1.0, %v2559
      %v2561 = vrcp.pop %v2528
      %v2562 = vmul.f32 1.0, %v2561
      %v2563 = vrcp.pop %v2529
      %v2564 = vmul.f32 1.0, %v2563
      %v2565 = vrcp.pop %v2530
      %v2566 = vmul.f32 1.0, %v2565
      %v2567 = vrcp.pop %v2531
      %v2568 = vmul.f32 1.0, %v2567
      %v2569 = vrcp.pop %v2532
      %v2570 = vmul.f32 1.0, %v2569
      %v2571 = vrcp.pop %v2533
      %v2572 = vmul.f32 1.0, %v2571
      %v2573 = vrcp.pop %v2534
      %v2574 = vmul.f32 1.0, %v2573
      %v2575 = vrcp.pop %v2535
      %v2576 = vmul.f32 1.0, %v2575
      %v2577 = vrcp.pop %v2536
      %v2578 = vmul.f32 1.0, %v2577
      %v2579 = vrcp.pop %v2537
      %v2580 = vmul.f32 1.0, %v2579
      %v2581 = vrcp.pop %v2538
      %v2582 = vmul.f32 1.0, %v2581
      %v2583 = vrcp.pop %v2539
      %v2584 = vmul.f32 1.0, %v2583
      %v2585 = vrcp.pop %v2540
      %v2586 = vmul.f32 1.0, %v2585
      %v2587 = vrcp.pop %v2541
      %v2588 = vmul.f32 1.0, %v2587
      %v2589 = vrcp.pop %v2542
      %v2590 = vmul.f32 1.0, %v2589
      %v2591 = vrcp.pop %v2543
      %v2592 = vmul.f32 1.0, %v2591
      %v2593 = vrcp.pop %v2544
      %v2594 = vmul.f32 1.0, %v2593
      %v2595 = vrcp.pop %v2545
      %v2596 = vmul.f32 1.0, %v2595
      %v2597 = vrcp.pop %v2546
      %v2598 = vmul.f32 1.0, %v2597
      %v2599 = vrcp.pop %v2547
      %v2600 = vmul.f32 1.0, %v2599
      %v2601 = vrcp.pop %v2548
      %v2602 = vmul.f32 1.0, %v2601
      %v2603 = vrcp.pop %v2549
      %v2604 = vmul.f32 1.0, %v2603
      %v2605 = vrcp.pop %v2550
      %v2606 = vmul.f32 1.0, %v2605
      %v2607 = vrcp.pop %v2551
      %v2608 = vmul.f32 1.0, %v2607
      %v2609 = vrcp.pop %v2552
      %v2610 = vmul.f32 1.0, %v2609
      %v2611 = vrcp.pop %v2553
      %v2612 = vmul.f32 1.0, %v2611
      %v2613 = vrcp.pop %v2554
      %v2614 = vmul.f32 1.0, %v2613
      %v2615 = vrcp.pop %v2555
      %v2616 = vmul.f32 1.0, %v2615
      %v2617 = vrcp.pop %v2556
      %v2618 = vmul.f32 1.0, %v2617
      %v2619 = vrcp.pop %v2557
      %v2620 = vmul.f32 1.0, %v2619
      %v2621 = vrcp.pop %v2558
      %v2622 = vmul.f32 1.0, %v2621
      %v2623 = vlaneseq
      %v2624 = vshrl.u32 %v2623, 7
      %v2625 = vsub.s32 0, %v2624
      %v2626 = vrot.slane %v2098, %v2625
      %v2627 = vmul.f32 %v1840, %v2626
      %v2628 = vmul.f32 %v1841, %v2626
      %v2629 = vmul.f32 %v1842, %v2626
      %v2630 = vmul.f32 %v1843, %v2626
      %v2631 = vmul.f32 %v1844, %v2626
      %v2632 = vmul.f32 %v1845, %v2626
      %v2633 = vmul.f32 %v1846, %v2626
      %v2634 = vmul.f32 %v1847, %v2626
      %v2635 = vmul.f32 %v1848, %v2626
      %v2636 = vmul.f32 %v1849, %v2626
      %v2637 = vmul.f32 %v1850, %v2626
      %v2638 = vmul.f32 %v1851, %v2626
      %v2639 = vmul.f32 %v1852, %v2626
      %v2640 = vmul.f32 %v1853, %v2626
      %v2641 = vmul.f32 %v1854, %v2626
      %v2642 = vmul.f32 %v1855, %v2626
      %v2643 = vmul.f32 %v1856, %v2626
      %v2644 = vmul.f32 %v1857, %v2626
      %v2645 = vmul.f32 %v1858, %v2626
      %v2646 = vmul.f32 %v1859, %v2626
      %v2647 = vmul.f32 %v1860, %v2626
      %v2648 = vmul.f32 %v1861, %v2626
      %v2649 = vmul.f32 %v1862, %v2626
      %v2650 = vmul.f32 %v1863, %v2626
      %v2651 = vmul.f32 %v1864, %v2626
      %v2652 = vmul.f32 %v1865, %v2626
      %v2653 = vmul.f32 %v1866, %v2626
      %v2654 = vmul.f32 %v1867, %v2626
      %v2655 = vmul.f32 %v1868, %v2626
      %v2656 = vmul.f32 %v1869, %v2626
      %v2657 = vmul.f32 %v1870, %v2626
      %v2658 = vmul.f32 %v1871, %v2626
      %2660 = vset.pattern.permute.xlu0 0
      %2661 = vperm.xlu0 %2660, %v2560
      %v2662 = vpop.permute.xlu0 %2661
      %2665 = vset.pattern.permute.xlu0 0
      %2666 = vperm.xlu0 %2665, %v2562
      %v2667 = vpop.permute.xlu0 %2666
      %2670 = vset.pattern.permute.xlu0 0
      %2671 = vperm.xlu0 %2670, %v2564
      %v2672 = vpop.permute.xlu0 %2671
      %2675 = vset.pattern.permute.xlu0 0
      %2676 = vperm.xlu0 %2675, %v2566
      %v2677 = vpop.permute.xlu0 %2676
      %2680 = vset.pattern.permute.xlu0 0
      %2681 = vperm.xlu0 %2680, %v2568
      %v2682 = vpop.permute.xlu0 %2681
      %2685 = vset.pattern.permute.xlu0 0
      %2686 = vperm.xlu0 %2685, %v2570
      %v2687 = vpop.permute.xlu0 %2686
      %2690 = vset.pattern.permute.xlu0 0
      %2691 = vperm.xlu0 %2690, %v2572
      %v2692 = vpop.permute.xlu0 %2691
      %2695 = vset.pattern.permute.xlu0 0
      %2696 = vperm.xlu0 %2695, %v2574
      %v2697 = vpop.permute.xlu0 %2696
      %2700 = vset.pattern.permute.xlu0 0
      %2701 = vperm.xlu0 %2700, %v2576
      %v2702 = vpop.permute.xlu0 %2701
      %2705 = vset.pattern.permute.xlu0 0
      %2706 = vperm.xlu0 %2705, %v2578
      %v2707 = vpop.permute.xlu0 %2706
      %2710 = vset.pattern.permute.xlu0 0
      %2711 = vperm.xlu0 %2710, %v2580
      %v2712 = vpop.permute.xlu0 %2711
      %2715 = vset.pattern.permute.xlu0 0
      %2716 = vperm.xlu0 %2715, %v2582
      %v2717 = vpop.permute.xlu0 %2716
      %2720 = vset.pattern.permute.xlu0 0
      %2721 = vperm.xlu0 %2720, %v2584
      %v2722 = vpop.permute.xlu0 %2721
      %2725 = vset.pattern.permute.xlu0 0
      %2726 = vperm.xlu0 %2725, %v2586
      %v2727 = vpop.permute.xlu0 %2726
      %2730 = vset.pattern.permute.xlu0 0
      %2731 = vperm.xlu0 %2730, %v2588
      %v2732 = vpop.permute.xlu0 %2731
      %2735 = vset.pattern.permute.xlu0 0
      %2736 = vperm.xlu0 %2735, %v2590
      %v2737 = vpop.permute.xlu0 %2736
      %2740 = vset.pattern.permute.xlu0 0
      %2741 = vperm.xlu0 %2740, %v2592
      %v2742 = vpop.permute.xlu0 %2741
      %2745 = vset.pattern.permute.xlu0 0
      %2746 = vperm.xlu0 %2745, %v2594
      %v2747 = vpop.permute.xlu0 %2746
      %2750 = vset.pattern.permute.xlu0 0
      %2751 = vperm.xlu0 %2750, %v2596
      %v2752 = vpop.permute.xlu0 %2751
      %2755 = vset.pattern.permute.xlu0 0
      %2756 = vperm.xlu0 %2755, %v2598
      %v2757 = vpop.permute.xlu0 %2756
      %2760 = vset.pattern.permute.xlu0 0
      %2761 = vperm.xlu0 %2760, %v2600
      %v2762 = vpop.permute.xlu0 %2761
      %2765 = vset.pattern.permute.xlu0 0
      %2766 = vperm.xlu0 %2765, %v2602
      %v2767 = vpop.permute.xlu0 %2766
      %2770 = vset.pattern.permute.xlu0 0
      %2771 = vperm.xlu0 %2770, %v2604
      %v2772 = vpop.permute.xlu0 %2771
      %2775 = vset.pattern.permute.xlu0 0
      %2776 = vperm.xlu0 %2775, %v2606
      %v2777 = vpop.permute.xlu0 %2776
      %2780 = vset.pattern.permute.xlu0 0
      %2781 = vperm.xlu0 %2780, %v2608
      %v2782 = vpop.permute.xlu0 %2781
      %2785 = vset.pattern.permute.xlu0 0
      %2786 = vperm.xlu0 %2785, %v2610
      %v2787 = vpop.permute.xlu0 %2786
      %2790 = vset.pattern.permute.xlu0 0
      %2791 = vperm.xlu0 %2790, %v2612
      %v2792 = vpop.permute.xlu0 %2791
      %2795 = vset.pattern.permute.xlu0 0
      %2796 = vperm.xlu0 %2795, %v2614
      %v2797 = vpop.permute.xlu0 %2796
      %2800 = vset.pattern.permute.xlu0 0
      %2801 = vperm.xlu0 %2800, %v2616
      %v2802 = vpop.permute.xlu0 %2801
      %2805 = vset.pattern.permute.xlu0 0
      %2806 = vperm.xlu0 %2805, %v2618
      %v2807 = vpop.permute.xlu0 %2806
      %2810 = vset.pattern.permute.xlu0 0
      %2811 = vperm.xlu0 %2810, %v2620
      %v2812 = vpop.permute.xlu0 %2811
      %2815 = vset.pattern.permute.xlu0 0
      %2816 = vperm.xlu0 %2815, %v2622
      %v2817 = vpop.permute.xlu0 %2816
      %v2819 = vmul.f32 %v1840, %v2662
      %v2820 = vmul.f32 %v1841, %v2667
      %v2821 = vmul.f32 %v1842, %v2672
      %v2822 = vmul.f32 %v1843, %v2677
      %v2823 = vmul.f32 %v1844, %v2682
      %v2824 = vmul.f32 %v1845, %v2687
      %v2825 = vmul.f32 %v1846, %v2692
      %v2826 = vmul.f32 %v1847, %v2697
      %v2827 = vmul.f32 %v1848, %v2702
      %v2828 = vmul.f32 %v1849, %v2707
      %v2829 = vmul.f32 %v1850, %v2712
      %v2830 = vmul.f32 %v1851, %v2717
      %v2831 = vmul.f32 %v1852, %v2722
      %v2832 = vmul.f32 %v1853, %v2727
      %v2833 = vmul.f32 %v1854, %v2732
      %v2834 = vmul.f32 %v1855, %v2737
      %v2835 = vmul.f32 %v1856, %v2742
      %v2836 = vmul.f32 %v1857, %v2747
      %v2837 = vmul.f32 %v1858, %v2752
      %v2838 = vmul.f32 %v1859, %v2757
      %v2839 = vmul.f32 %v1860, %v2762
      %v2840 = vmul.f32 %v1861, %v2767
      %v2841 = vmul.f32 %v1862, %v2772
      %v2842 = vmul.f32 %v1863, %v2777
      %v2843 = vmul.f32 %v1864, %v2782
      %v2844 = vmul.f32 %v1865, %v2787
      %v2845 = vmul.f32 %v1866, %v2792
      %v2846 = vmul.f32 %v1867, %v2797
      %v2847 = vmul.f32 %v1868, %v2802
      %v2848 = vmul.f32 %v1869, %v2807
      %v2849 = vmul.f32 %v1870, %v2812
      %v2850 = vmul.f32 %v1871, %v2817
      %v2851 = vadd.f32 %v2627, %v2819
      %v2852 = vadd.f32 %v2628, %v2820
      %v2853 = vadd.f32 %v2629, %v2821
      %v2854 = vadd.f32 %v2630, %v2822
      %v2855 = vadd.f32 %v2631, %v2823
      %v2856 = vadd.f32 %v2632, %v2824
      %v2857 = vadd.f32 %v2633, %v2825
      %v2858 = vadd.f32 %v2634, %v2826
      %v2859 = vadd.f32 %v2635, %v2827
      %v2860 = vadd.f32 %v2636, %v2828
      %v2861 = vadd.f32 %v2637, %v2829
      %v2862 = vadd.f32 %v2638, %v2830
      %v2863 = vadd.f32 %v2639, %v2831
      %v2864 = vadd.f32 %v2640, %v2832
      %v2865 = vadd.f32 %v2641, %v2833
      %v2866 = vadd.f32 %v2642, %v2834
      %v2867 = vadd.f32 %v2643, %v2835
      %v2868 = vadd.f32 %v2644, %v2836
      %v2869 = vadd.f32 %v2645, %v2837
      %v2870 = vadd.f32 %v2646, %v2838
      %v2871 = vadd.f32 %v2647, %v2839
      %v2872 = vadd.f32 %v2648, %v2840
      %v2873 = vadd.f32 %v2649, %v2841
      %v2874 = vadd.f32 %v2650, %v2842
      %v2875 = vadd.f32 %v2651, %v2843
      %v2876 = vadd.f32 %v2652, %v2844
      %v2877 = vadd.f32 %v2653, %v2845
      %v2878 = vadd.f32 %v2654, %v2846
      %v2879 = vadd.f32 %v2655, %v2847
      %v2880 = vadd.f32 %v2656, %v2848
      %v2881 = vadd.f32 %v2657, %v2849
      %v2882 = vadd.f32 %v2658, %v2850
      %v2883 = vxor.u32 %v2851, 2147483648
      %v2884 = vxor.u32 %v2852, 2147483648
      %v2885 = vxor.u32 %v2853, 2147483648
      %v2886 = vxor.u32 %v2854, 2147483648
      %v2887 = vxor.u32 %v2855, 2147483648
      %v2888 = vxor.u32 %v2856, 2147483648
      %v2889 = vxor.u32 %v2857, 2147483648
      %v2890 = vxor.u32 %v2858, 2147483648
      %v2891 = vxor.u32 %v2859, 2147483648
      %v2892 = vxor.u32 %v2860, 2147483648
      %v2893 = vxor.u32 %v2861, 2147483648
      %v2894 = vxor.u32 %v2862, 2147483648
      %v2895 = vxor.u32 %v2863, 2147483648
      %v2896 = vxor.u32 %v2864, 2147483648
      %v2897 = vxor.u32 %v2865, 2147483648
      %v2898 = vxor.u32 %v2866, 2147483648
      %v2899 = vxor.u32 %v2867, 2147483648
      %v2900 = vxor.u32 %v2868, 2147483648
      %v2901 = vxor.u32 %v2869, 2147483648
      %v2902 = vxor.u32 %v2870, 2147483648
      %v2903 = vxor.u32 %v2871, 2147483648
      %v2904 = vxor.u32 %v2872, 2147483648
      %v2905 = vxor.u32 %v2873, 2147483648
      %v2906 = vxor.u32 %v2874, 2147483648
      %v2907 = vxor.u32 %v2875, 2147483648
      %v2908 = vxor.u32 %v2876, 2147483648
      %v2909 = vxor.u32 %v2877, 2147483648
      %v2910 = vxor.u32 %v2878, 2147483648
      %v2911 = vxor.u32 %v2879, 2147483648
      %v2912 = vxor.u32 %v2880, 2147483648
      %v2913 = vxor.u32 %v2881, 2147483648
      %v2914 = vxor.u32 %v2882, 2147483648
      %v2915 = vmul.f32 %v2883, 1.442695
      %v2916 = vpow.pop %v2915
      %v2917 = vmul.f32 %v2884, 1.442695
      %v2918 = vpow.pop %v2917
      %v2919 = vmul.f32 %v2885, 1.442695
      %v2920 = vpow.pop %v2919
      %v2921 = vmul.f32 %v2886, 1.442695
      %v2922 = vpow.pop %v2921
      %v2923 = vmul.f32 %v2887, 1.442695
      %v2924 = vpow.pop %v2923
      %v2925 = vmul.f32 %v2888, 1.442695
      %v2926 = vpow.pop %v2925
      %v2927 = vmul.f32 %v2889, 1.442695
      %v2928 = vpow.pop %v2927
      %v2929 = vmul.f32 %v2890, 1.442695
      %v2930 = vpow.pop %v2929
      %v2931 = vmul.f32 %v2891, 1.442695
      %v2932 = vpow.pop %v2931
      %v2933 = vmul.f32 %v2892, 1.442695
      %v2934 = vpow.pop %v2933
      %v2935 = vmul.f32 %v2893, 1.442695
      %v2936 = vpow.pop %v2935
      %v2937 = vmul.f32 %v2894, 1.442695
      %v2938 = vpow.pop %v2937
      %v2939 = vmul.f32 %v2895, 1.442695
      %v2940 = vpow.pop %v2939
      %v2941 = vmul.f32 %v2896, 1.442695
      %v2942 = vpow.pop %v2941
      %v2943 = vmul.f32 %v2897, 1.442695
      %v2944 = vpow.pop %v2943
      %v2945 = vmul.f32 %v2898, 1.442695
      %v2946 = vpow.pop %v2945
      %v2947 = vmul.f32 %v2899, 1.442695
      %v2948 = vpow.pop %v2947
      %v2949 = vmul.f32 %v2900, 1.442695
      %v2950 = vpow.pop %v2949
      %v2951 = vmul.f32 %v2901, 1.442695
      %v2952 = vpow.pop %v2951
      %v2953 = vmul.f32 %v2902, 1.442695
      %v2954 = vpow.pop %v2953
      %v2955 = vmul.f32 %v2903, 1.442695
      %v2956 = vpow.pop %v2955
      %v2957 = vmul.f32 %v2904, 1.442695
      %v2958 = vpow.pop %v2957
      %v2959 = vmul.f32 %v2905, 1.442695
      %v2960 = vpow.pop %v2959
      %v2961 = vmul.f32 %v2906, 1.442695
      %v2962 = vpow.pop %v2961
      %v2963 = vmul.f32 %v2907, 1.442695
      %v2964 = vpow.pop %v2963
      %v2965 = vmul.f32 %v2908, 1.442695
      %v2966 = vpow.pop %v2965
      %v2967 = vmul.f32 %v2909, 1.442695
      %v2968 = vpow.pop %v2967
      %v2969 = vmul.f32 %v2910, 1.442695
      %v2970 = vpow.pop %v2969
      %v2971 = vmul.f32 %v2911, 1.442695
      %v2972 = vpow.pop %v2971
      %v2973 = vmul.f32 %v2912, 1.442695
      %v2974 = vpow.pop %v2973
      %v2975 = vmul.f32 %v2913, 1.442695
      %v2976 = vpow.pop %v2975
      %v2977 = vmul.f32 %v2914, 1.442695
      %v2978 = vpow.pop %v2977
      %v2979 = vadd.f32 %v2916, 1.0
      %v2980 = vadd.f32 %v2918, 1.0
      %v2981 = vadd.f32 %v2920, 1.0
      %v2982 = vadd.f32 %v2922, 1.0
      %v2983 = vadd.f32 %v2924, 1.0
      %v2984 = vadd.f32 %v2926, 1.0
      %v2985 = vadd.f32 %v2928, 1.0
      %v2986 = vadd.f32 %v2930, 1.0
      %v2987 = vadd.f32 %v2932, 1.0
      %v2988 = vadd.f32 %v2934, 1.0
      %v2989 = vadd.f32 %v2936, 1.0
      %v2990 = vadd.f32 %v2938, 1.0
      %v2991 = vadd.f32 %v2940, 1.0
      %v2992 = vadd.f32 %v2942, 1.0
      %v2993 = vadd.f32 %v2944, 1.0
      %v2994 = vadd.f32 %v2946, 1.0
      %v2995 = vadd.f32 %v2948, 1.0
      %v2996 = vadd.f32 %v2950, 1.0
      %v2997 = vadd.f32 %v2952, 1.0
      %v2998 = vadd.f32 %v2954, 1.0
      %v2999 = vadd.f32 %v2956, 1.0
      %v3000 = vadd.f32 %v2958, 1.0
      %v3001 = vadd.f32 %v2960, 1.0
      %v3002 = vadd.f32 %v2962, 1.0
      %v3003 = vadd.f32 %v2964, 1.0
      %v3004 = vadd.f32 %v2966, 1.0
      %v3005 = vadd.f32 %v2968, 1.0
      %v3006 = vadd.f32 %v2970, 1.0
      %v3007 = vadd.f32 %v2972, 1.0
      %v3008 = vadd.f32 %v2974, 1.0
      %v3009 = vadd.f32 %v2976, 1.0
      %v3010 = vadd.f32 %v2978, 1.0
      %v3011 = vrcp.pop %v2979
      %v3012 = vmul.f32 1.0, %v3011
      %v3013 = vrcp.pop %v2980
      %v3014 = vmul.f32 1.0, %v3013
      %v3015 = vrcp.pop %v2981
      %v3016 = vmul.f32 1.0, %v3015
      %v3017 = vrcp.pop %v2982
      %v3018 = vmul.f32 1.0, %v3017
      %v3019 = vrcp.pop %v2983
      %v3020 = vmul.f32 1.0, %v3019
      %v3021 = vrcp.pop %v2984
      %v3022 = vmul.f32 1.0, %v3021
      %v3023 = vrcp.pop %v2985
      %v3024 = vmul.f32 1.0, %v3023
      %v3025 = vrcp.pop %v2986
      %v3026 = vmul.f32 1.0, %v3025
      %v3027 = vrcp.pop %v2987
      %v3028 = vmul.f32 1.0, %v3027
      %v3029 = vrcp.pop %v2988
      %v3030 = vmul.f32 1.0, %v3029
      %v3031 = vrcp.pop %v2989
      %v3032 = vmul.f32 1.0, %v3031
      %v3033 = vrcp.pop %v2990
      %v3034 = vmul.f32 1.0, %v3033
      %v3035 = vrcp.pop %v2991
      %v3036 = vmul.f32 1.0, %v3035
      %v3037 = vrcp.pop %v2992
      %v3038 = vmul.f32 1.0, %v3037
      %v3039 = vrcp.pop %v2993
      %v3040 = vmul.f32 1.0, %v3039
      %v3041 = vrcp.pop %v2994
      %v3042 = vmul.f32 1.0, %v3041
      %v3043 = vrcp.pop %v2995
      %v3044 = vmul.f32 1.0, %v3043
      %v3045 = vrcp.pop %v2996
      %v3046 = vmul.f32 1.0, %v3045
      %v3047 = vrcp.pop %v2997
      %v3048 = vmul.f32 1.0, %v3047
      %v3049 = vrcp.pop %v2998
      %v3050 = vmul.f32 1.0, %v3049
      %v3051 = vrcp.pop %v2999
      %v3052 = vmul.f32 1.0, %v3051
      %v3053 = vrcp.pop %v3000
      %v3054 = vmul.f32 1.0, %v3053
      %v3055 = vrcp.pop %v3001
      %v3056 = vmul.f32 1.0, %v3055
      %v3057 = vrcp.pop %v3002
      %v3058 = vmul.f32 1.0, %v3057
      %v3059 = vrcp.pop %v3003
      %v3060 = vmul.f32 1.0, %v3059
      %v3061 = vrcp.pop %v3004
      %v3062 = vmul.f32 1.0, %v3061
      %v3063 = vrcp.pop %v3005
      %v3064 = vmul.f32 1.0, %v3063
      %v3065 = vrcp.pop %v3006
      %v3066 = vmul.f32 1.0, %v3065
      %v3067 = vrcp.pop %v3007
      %v3068 = vmul.f32 1.0, %v3067
      %v3069 = vrcp.pop %v3008
      %v3070 = vmul.f32 1.0, %v3069
      %v3071 = vrcp.pop %v3009
      %v3072 = vmul.f32 1.0, %v3071
      %v3073 = vrcp.pop %v3010
      %v3074 = vmul.f32 1.0, %v3073
      %v3075 = vmul.f32 %v2851, %v3012
      %v3076 = vmul.f32 %v2852, %v3014
      %v3077 = vmul.f32 %v2853, %v3016
      %v3078 = vmul.f32 %v2854, %v3018
      %v3079 = vmul.f32 %v2855, %v3020
      %v3080 = vmul.f32 %v2856, %v3022
      %v3081 = vmul.f32 %v2857, %v3024
      %v3082 = vmul.f32 %v2858, %v3026
      %v3083 = vmul.f32 %v2859, %v3028
      %v3084 = vmul.f32 %v2860, %v3030
      %v3085 = vmul.f32 %v2861, %v3032
      %v3086 = vmul.f32 %v2862, %v3034
      %v3087 = vmul.f32 %v2863, %v3036
      %v3088 = vmul.f32 %v2864, %v3038
      %v3089 = vmul.f32 %v2865, %v3040
      %v3090 = vmul.f32 %v2866, %v3042
      %v3091 = vmul.f32 %v2867, %v3044
      %v3092 = vmul.f32 %v2868, %v3046
      %v3093 = vmul.f32 %v2869, %v3048
      %v3094 = vmul.f32 %v2870, %v3050
      %v3095 = vmul.f32 %v2871, %v3052
      %v3096 = vmul.f32 %v2872, %v3054
      %v3097 = vmul.f32 %v2873, %v3056
      %v3098 = vmul.f32 %v2874, %v3058
      %v3099 = vmul.f32 %v2875, %v3060
      %v3100 = vmul.f32 %v2876, %v3062
      %v3101 = vmul.f32 %v2877, %v3064
      %v3102 = vmul.f32 %v2878, %v3066
      %v3103 = vmul.f32 %v2879, %v3068
      %v3104 = vmul.f32 %v2880, %v3070
      %v3105 = vmul.f32 %v2881, %v3072
      %v3106 = vmul.f32 %v2882, %v3074
      %v3107 = vpack.c.bf16 %v3076, %v3075
      %v3108 = vpack.c.bf16 %v3078, %v3077
      %v3109 = vpack.c.bf16 %v3080, %v3079
      %v3110 = vpack.c.bf16 %v3082, %v3081
      %v3111 = vpack.c.bf16 %v3084, %v3083
      %v3112 = vpack.c.bf16 %v3086, %v3085
      %v3113 = vpack.c.bf16 %v3088, %v3087
      %v3114 = vpack.c.bf16 %v3090, %v3089
      %v3115 = vpack.c.bf16 %v3092, %v3091
      %v3116 = vpack.c.bf16 %v3094, %v3093
      %v3117 = vpack.c.bf16 %v3096, %v3095
      %v3118 = vpack.c.bf16 %v3098, %v3097
      %v3119 = vpack.c.bf16 %v3100, %v3099
      %v3120 = vpack.c.bf16 %v3102, %v3101
      %v3121 = vpack.c.bf16 %v3104, %v3103
      %v3122 = vpack.c.bf16 %v3106, %v3105
      %v3123 = vld [vmem:[%s9] sm:$0xf]
      %v3124 = vld [vmem:[%s9 + $0x4] sm:$0xf]
      %v3125 = vld [vmem:[%s9 + $0x8] sm:$0xf]
      %v3126 = vld [vmem:[%s9 + $0xc] sm:$0xf]
      %v3127 = vld [vmem:[%s10] sm:$0x1]
      %v3129 = vlaneseq
      %v3130 = vshrl.u32 %v3129, 7
      %v3131 = vsub.s32 0, %v3130
      %v3132 = vrot.slane %v3127, %v3131
      %v3138 = vunpack.c.l.b16 %v3123
      %v3139 = vunpack.c.l.b16 %v3124
      %v3140 = vunpack.c.l.b16 %v3125
      %v3141 = vunpack.c.l.b16 %v3126
      %v3142 = vpack.c.b16 %v3139, %v3138
      %v3143 = vpack.c.b16 %v3141, %v3140
      %v3147 = vsel %vm390, %v3107, 0
      %v3150 = vsel %vm390, %v3108, 0
      %v3153 = vsel %vm390, %v3109, 0
      %v3156 = vsel %vm390, %v3110, 0
      %v3159 = vsel %vm390, %v3111, 0
      %v3162 = vsel %vm390, %v3112, 0
      %v3165 = vsel %vm390, %v3113, 0
      %v3168 = vsel %vm390, %v3114, 0
      %v3171 = vsel %vm390, %v3115, 0
      %v3174 = vsel %vm390, %v3116, 0
      %v3177 = vsel %vm390, %v3117, 0
      %v3180 = vsel %vm390, %v3118, 0
      %v3183 = vsel %vm390, %v3119, 0
      %v3186 = vsel %vm390, %v3120, 0
      %v3189 = vsel %vm390, %v3121, 0
      %v3192 = vsel %vm390, %v3122, 0
      %3194 = vmatprep.subr.bf16.mxu0 0
      %3195 = vmatpush1.bf16.msra.mxu0 %v3142
      %3196 = vmatprep.subr.bf16.mxu0 0
      %3197 = vmatpush1.bf16.msra.mxu0 %v3143
      %3198 = vmatprep.subr.bf16.mxu0 0
      %3199 = vmatpush1.bf16.msra.mxu0 0
      %3200 = vmatprep.subr.bf16.mxu0 0
      %3201 = vmatpush1.bf16.msra.mxu0 0
      %3202 = vmatprep.subr.bf16.mxu0 0
      %3203 = vmatpush1.bf16.msra.mxu0 0
      %3204 = vmatprep.subr.bf16.mxu0 0
      %3205 = vmatpush1.bf16.msra.mxu0 0
      %3206 = vmatprep.subr.bf16.mxu0 0
      %3207 = vmatpush1.bf16.msra.mxu0 0
      %3208 = vmatprep.subr.bf16.mxu0 0
      %3209 = vmatpush1.bf16.msra.mxu0 0
      %3210 = vmatprep.subr.bf16.mxu0 0
      %3211 = vmatpush1.bf16.msra.mxu0 0
      %3212 = vmatprep.subr.bf16.mxu0 0
      %3213 = vmatpush1.bf16.msra.mxu0 0
      %3214 = vmatprep.subr.bf16.mxu0 0
      %3215 = vmatpush1.bf16.msra.mxu0 0
      %3216 = vmatprep.subr.bf16.mxu0 0
      %3217 = vmatpush1.bf16.msra.mxu0 0
      %3218 = vmatprep.subr.bf16.mxu0 0
      %3219 = vmatpush1.bf16.msra.mxu0 0
      %3220 = vmatprep.subr.bf16.mxu0 0
      %3221 = vmatpush1.bf16.msra.mxu0 0
      %3222 = vmatprep.subr.bf16.mxu0 0
      %3223 = vmatpush1.bf16.msra.mxu0 0
      %3224 = vmatprep.subr.bf16.mxu0 0
      %3225 = vmatpush1.bf16.msra.mxu0 0
      %3226 = vmatprep.mubr.bf16.mxu0 0
      %3227 = vmatmul.mubr.bf16.gmra.mrb[0].mxu0 %v3147
      %v3228 = vpop.f32.mrb[0].mxu0
      %v3229 = vadd.f32 %v3132, %v3228
      %v3230 = vpop.f32.mrb[0].mxu0
      %v3231 = vpop.f32.mrb[0].mxu0
      %v3232 = vadd.f32 %v3132, %v3231
      %v3233 = vpop.f32.mrb[0].mxu0
      %3234 = vmatprep.mubr.bf16.mxu0 0
      %3235 = vmatmul.mubr.bf16.gmra.mrb[0].mxu0 %v3150
      %v3236 = vpop.f32.mrb[0].mxu0
      %v3237 = vadd.f32 %v3132, %v3236
      %v3238 = vpop.f32.mrb[0].mxu0
      %v3239 = vpop.f32.mrb[0].mxu0
      %v3240 = vadd.f32 %v3132, %v3239
      %v3241 = vpop.f32.mrb[0].mxu0
      %3242 = vmatprep.mubr.bf16.mxu0 0
      %3243 = vmatmul.mubr.bf16.gmra.mrb[0].mxu0 %v3153
      %v3244 = vpop.f32.mrb[0].mxu0
      %v3245 = vadd.f32 %v3132, %v3244
      %v3246 = vpop.f32.mrb[0].mxu0
      %v3247 = vpop.f32.mrb[0].mxu0
      %v3248 = vadd.f32 %v3132, %v3247
      %v3249 = vpop.f32.mrb[0].mxu0
      %3250 = vmatprep.mubr.bf16.mxu0 0
      %3251 = vmatmul.mubr.bf16.gmra.mrb[0].mxu0 %v3156
      %v3252 = vpop.f32.mrb[0].mxu0
      %v3253 = vadd.f32 %v3132, %v3252
      %v3254 = vpop.f32.mrb[0].mxu0
      %v3255 = vpop.f32.mrb[0].mxu0
      %v3256 = vadd.f32 %v3132, %v3255
      %v3257 = vpop.f32.mrb[0].mxu0
      %3258 = vmatprep.mubr.bf16.mxu0 0
      %3259 = vmatmul.mubr.bf16.gmra.mrb[0].mxu0 %v3159
      %v3260 = vpop.f32.mrb[0].mxu0
      %v3261 = vadd.f32 %v3132, %v3260
      %v3262 = vpop.f32.mrb[0].mxu0
      %v3263 = vpop.f32.mrb[0].mxu0
      %v3264 = vadd.f32 %v3132, %v3263
      %v3265 = vpop.f32.mrb[0].mxu0
      %3266 = vmatprep.mubr.bf16.mxu0 0
      %3267 = vmatmul.mubr.bf16.gmra.mrb[0].mxu0 %v3162
      %v3268 = vpop.f32.mrb[0].mxu0
      %v3269 = vadd.f32 %v3132, %v3268
      %v3270 = vpop.f32.mrb[0].mxu0
      %v3271 = vpop.f32.mrb[0].mxu0
      %v3272 = vadd.f32 %v3132, %v3271
      %v3273 = vpop.f32.mrb[0].mxu0
      %3274 = vmatprep.mubr.bf16.mxu0 0
      %3275 = vmatmul.mubr.bf16.gmra.mrb[0].mxu0 %v3165
      %v3276 = vpop.f32.mrb[0].mxu0
      %v3277 = vadd.f32 %v3132, %v3276
      %v3278 = vpop.f32.mrb[0].mxu0
      %v3279 = vpop.f32.mrb[0].mxu0
      %v3280 = vadd.f32 %v3132, %v3279
      %v3281 = vpop.f32.mrb[0].mxu0
      %3282 = vmatprep.mubr.bf16.mxu0 0
      %3283 = vmatmul.mubr.bf16.gmra.mrb[0].mxu0 %v3168
      %v3284 = vpop.f32.mrb[0].mxu0
      %v3285 = vadd.f32 %v3132, %v3284
      %v3286 = vpop.f32.mrb[0].mxu0
      %v3287 = vpop.f32.mrb[0].mxu0
      %v3288 = vadd.f32 %v3132, %v3287
      %v3289 = vpop.f32.mrb[0].mxu0
      %3290 = vmatprep.mubr.bf16.mxu0 0
      %3291 = vmatmul.mubr.bf16.gmra.mrb[0].mxu0 %v3171
      %v3292 = vpop.f32.mrb[0].mxu0
      %v3293 = vadd.f32 %v3132, %v3292
      %v3294 = vpop.f32.mrb[0].mxu0
      %v3295 = vpop.f32.mrb[0].mxu0
      %v3296 = vadd.f32 %v3132, %v3295
      %v3297 = vpop.f32.mrb[0].mxu0
      %3298 = vmatprep.mubr.bf16.mxu0 0
      %3299 = vmatmul.mubr.bf16.gmra.mrb[0].mxu0 %v3174
      %v3300 = vpop.f32.mrb[0].mxu0
      %v3301 = vadd.f32 %v3132, %v3300
      %v3302 = vpop.f32.mrb[0].mxu0
      %v3303 = vpop.f32.mrb[0].mxu0
      %v3304 = vadd.f32 %v3132, %v3303
      %v3305 = vpop.f32.mrb[0].mxu0
      %3306 = vmatprep.mubr.bf16.mxu0 0
      %3307 = vmatmul.mubr.bf16.gmra.mrb[0].mxu0 %v3177
      %v3308 = vpop.f32.mrb[0].mxu0
      %v3309 = vadd.f32 %v3132, %v3308
      %v3310 = vpop.f32.mrb[0].mxu0
      %v3311 = vpop.f32.mrb[0].mxu0
      %v3312 = vadd.f32 %v3132, %v3311
      %v3313 = vpop.f32.mrb[0].mxu0
      %3314 = vmatprep.mubr.bf16.mxu0 0
      %3315 = vmatmul.mubr.bf16.gmra.mrb[0].mxu0 %v3180
      %v3316 = vpop.f32.mrb[0].mxu0
      %v3317 = vadd.f32 %v3132, %v3316
      %v3318 = vpop.f32.mrb[0].mxu0
      %v3319 = vpop.f32.mrb[0].mxu0
      %v3320 = vadd.f32 %v3132, %v3319
      %v3321 = vpop.f32.mrb[0].mxu0
      %3322 = vmatprep.mubr.bf16.mxu0 0
      %3323 = vmatmul.mubr.bf16.gmra.mrb[0].mxu0 %v3183
      %v3324 = vpop.f32.mrb[0].mxu0
      %v3325 = vadd.f32 %v3132, %v3324
      %v3326 = vpop.f32.mrb[0].mxu0
      %v3327 = vpop.f32.mrb[0].mxu0
      %v3328 = vadd.f32 %v3132, %v3327
      %v3329 = vpop.f32.mrb[0].mxu0
      %3330 = vmatprep.mubr.bf16.mxu0 0
      %3331 = vmatmul.mubr.bf16.gmra.mrb[0].mxu0 %v3186
      %v3332 = vpop.f32.mrb[0].mxu0
      %v3333 = vadd.f32 %v3132, %v3332
      %v3334 = vpop.f32.mrb[0].mxu0
      %v3335 = vpop.f32.mrb[0].mxu0
      %v3336 = vadd.f32 %v3132, %v3335
      %v3337 = vpop.f32.mrb[0].mxu0
      %3338 = vmatprep.mubr.bf16.mxu0 0
      %3339 = vmatmul.mubr.bf16.gmra.mrb[0].mxu0 %v3189
      %v3340 = vpop.f32.mrb[0].mxu0
      %v3341 = vadd.f32 %v3132, %v3340
      %v3342 = vpop.f32.mrb[0].mxu0
      %v3343 = vpop.f32.mrb[0].mxu0
      %v3344 = vadd.f32 %v3132, %v3343
      %v3345 = vpop.f32.mrb[0].mxu0
      %3346 = vmatprep.mubr.bf16.mxu0 0
      %3347 = vmatmul.mubr.bf16.gmra.mrb[0].mxu0 %v3192
      %v3348 = vpop.f32.mrb[0].mxu0
      %v3349 = vadd.f32 %v3132, %v3348
      %v3350 = vpop.f32.mrb[0].mxu0
      %v3351 = vpop.f32.mrb[0].mxu0
      %v3352 = vadd.f32 %v3132, %v3351
      %v3353 = vpop.f32.mrb[0].mxu0
      %3354 = vdwg.mxu0
      %v3355 = vadd.f32 %v3229, %v433
      %v3356 = vadd.f32 %v3232, %v434
      %v3357 = vadd.f32 %v3237, %v435
      %v3358 = vadd.f32 %v3240, %v436
      %v3359 = vadd.f32 %v3245, %v437
      %v3360 = vadd.f32 %v3248, %v438
      %v3361 = vadd.f32 %v3253, %v439
      %v3362 = vadd.f32 %v3256, %v440
      %v3363 = vadd.f32 %v3261, %v441
      %v3364 = vadd.f32 %v3264, %v442
      %v3365 = vadd.f32 %v3269, %v443
      %v3366 = vadd.f32 %v3272, %v444
      %v3367 = vadd.f32 %v3277, %v445
      %v3368 = vadd.f32 %v3280, %v446
      %v3369 = vadd.f32 %v3285, %v447
      %v3370 = vadd.f32 %v3288, %v448
      %v3371 = vadd.f32 %v3293, %v449
      %v3372 = vadd.f32 %v3296, %v450
      %v3373 = vadd.f32 %v3301, %v451
      %v3374 = vadd.f32 %v3304, %v452
      %v3375 = vadd.f32 %v3309, %v453
      %v3376 = vadd.f32 %v3312, %v454
      %v3377 = vadd.f32 %v3317, %v455
      %v3378 = vadd.f32 %v3320, %v456
      %v3379 = vadd.f32 %v3325, %v457
      %v3380 = vadd.f32 %v3328, %v458
      %v3381 = vadd.f32 %v3333, %v459
      %v3382 = vadd.f32 %v3336, %v460
      %v3383 = vadd.f32 %v3341, %v461
      %v3384 = vadd.f32 %v3344, %v462
      %v3385 = vadd.f32 %v3349, %v463
      %v3386 = vadd.f32 %v3352, %v464
      %3387 = vst.msk [vmem:[%s388] sm:$0xff] %vm496, %v3355
      %3388 = vst.msk [vmem:[%s388 + $0x8] sm:$0xff] %vm496, %v3356
      %3389 = vst.msk [vmem:[%s388 + $0x10] sm:$0xff] %vm496, %v3357
      %3390 = vst.msk [vmem:[%s388 + $0x18] sm:$0xff] %vm496, %v3358
      %3391 = vst.msk [vmem:[%s388 + $0x20] sm:$0xff] %vm496, %v3359
      %3392 = vst.msk [vmem:[%s388 + $0x28] sm:$0xff] %vm496, %v3360
      %3393 = vst.msk [vmem:[%s388 + $0x30] sm:$0xff] %vm496, %v3361
      %3394 = vst.msk [vmem:[%s388 + $0x38] sm:$0xff] %vm496, %v3362
      %3395 = vst.msk [vmem:[%s388 + $0x40] sm:$0xff] %vm496, %v3363
      %3396 = vst.msk [vmem:[%s388 + $0x48] sm:$0xff] %vm496, %v3364
      %3397 = vst.msk [vmem:[%s388 + $0x50] sm:$0xff] %vm496, %v3365
      %3398 = vst.msk [vmem:[%s388 + $0x58] sm:$0xff] %vm496, %v3366
      %3399 = vst.msk [vmem:[%s388 + $0x60] sm:$0xff] %vm496, %v3367
      %3400 = vst.msk [vmem:[%s388 + $0x68] sm:$0xff] %vm496, %v3368
      %3401 = vst.msk [vmem:[%s388 + $0x70] sm:$0xff] %vm496, %v3369
      %3402 = vst.msk [vmem:[%s388 + $0x78] sm:$0xff] %vm496, %v3370
      %3403 = vst.msk [vmem:[%s388 + $0x80] sm:$0xff] %vm496, %v3371
      %3404 = vst.msk [vmem:[%s388 + $0x88] sm:$0xff] %vm496, %v3372
      %3405 = vst.msk [vmem:[%s388 + $0x90] sm:$0xff] %vm496, %v3373
      %3406 = vst.msk [vmem:[%s388 + $0x98] sm:$0xff] %vm496, %v3374
      %3407 = vst.msk [vmem:[%s388 + $0xa0] sm:$0xff] %vm496, %v3375
      %3408 = vst.msk [vmem:[%s388 + $0xa8] sm:$0xff] %vm496, %v3376
      %3409 = vst.msk [vmem:[%s388 + $0xb0] sm:$0xff] %vm496, %v3377
      %3410 = vst.msk [vmem:[%s388 + $0xb8] sm:$0xff] %vm496, %v3378
      %3411 = vst.msk [vmem:[%s388 + $0xc0] sm:$0xff] %vm496, %v3379
      %3412 = vst.msk [vmem:[%s388 + $0xc8] sm:$0xff] %vm496, %v3380
      %3413 = vst.msk [vmem:[%s388 + $0xd0] sm:$0xff] %vm496, %v3381
      %3414 = vst.msk [vmem:[%s388 + $0xd8] sm:$0xff] %vm496, %v3382
      %3415 = vst.msk [vmem:[%s388 + $0xe0] sm:$0xff] %vm496, %v3383
      %3416 = vst.msk [vmem:[%s388 + $0xe8] sm:$0xff] %vm496, %v3384
      %3417 = vst.msk [vmem:[%s388 + $0xf0] sm:$0xff] %vm496, %v3385
      %3418 = vst.msk [vmem:[%s388 + $0xf8] sm:$0xff] %vm496, %v3386
      %p3419 = scmp.lt.s32.totalorder %s24, 1
      %s3420 = scalar_select %p3419, %s24, 1
      %s3421 = smul.addr %s3420, 32
      %s3422 = smul.addr %s3421, 8
      %s3423 = scalar_lea.vmem %s11, %s3422
      // Predicated region
      $region65: #{inverted_residual.1} parent=63 // pred_check
        %p3424 = pneg %p278
      $region66: #{inverted_residual.1} parent=63 // pred_check_branch
        %3426 = sbr.rel (%p3424) target = $region68
      $region67: #{inverted_residual.1} parent=63 // pred_region
        _
      $region68: #{inverted_residual.1} parent=63 // pred_fallthru
        _
    $region64: #{inverted_residual.1} parent=5 // pred_fallthru
      _
    %p3427 = scmp.le.s32.totalorder 2, %s19
    // Predicated region
    $region69: #{inverted_residual.1} parent=5 // pred_check
      %p3428 = pneg %p3427
    $region70: #{inverted_residual.1} parent=5 // pred_check_branch
      %3430 = sbr.rel (%p3428) target = $region72
    $region71: #{inverted_residual.1} parent=5 // pred_region
      %s3431 = ssub.s32 %s19, 2
      // Predicated region
      $region73: #{inverted_residual.1} parent=71 // pred_check
        %p3432 = pneg %p284
      $region74: #{inverted_residual.1} parent=71 // pred_check_branch
        %3434 = sbr.rel (%p3432) target = $region76
      $region75: #{inverted_residual.1} parent=71 // pred_region
        %p3435 = scmp.lt.s32.totalorder %s25, 1
        %s3436 = scalar_select %p3435, %s25, 1
        %s3437 = smul.addr %s3436, 32
        %s3438 = smul.addr %s3437, 8
        %s3439 = scalar_lea.vmem %s11, %s3438
      $region76: #{inverted_residual.1} parent=71 // pred_fallthru
        _
    $region72: #{inverted_residual.1} parent=5 // pred_fallthru
      _
  $region6: #{inverted_residual.1} parent=0 // loop_footer
    %s23 = sadd.s32 1, %s19
  $region7: #{inverted_residual.1} parent=0 // loop_footer_branch
    %18 = sbr.rel target = $region3
  $region8: #{inverted_residual.1} parent=0 // loop_exit
    _

</llo_original>
